<compile_context>
chip_gen: v7x
topology: tpu7x:2x2x1
jax: 0.10.0
libtpu: 0.0.40
codegen_flags: <defaults>
</compile_context>

<pallas_src>
import math
import functools

import jax
import jax.numpy as jnp
from jax import lax
from jax.experimental import pallas as pl
from jax.experimental.pallas import tpu as pltpu

_MASK_VALUE = -1e30  # large finite negative (avoids exp(-inf - -inf) NaN paths)


def _store_heads_lane_dense(o_ref, o):
    """o: (H, blk_q, d_v) f32 -> o_ref[0]: (blk_q, H*d_v) lane-dense store."""
    H, _, d_v = o.shape
    for h in range(H):  # static unroll; once per q-tile
        o_ref[0, :, h * d_v:(h + 1) * d_v] = o[h].astype(o_ref.dtype)


def _attention_single_pass_kernel(q_ref, k_ref, v_ref, o_ref, *, blk_q, mask_flag):
    """grid=(B, nq): all heads + the full key axis in one program (S small).

    Blocks: q (1,H,blk_q,E), k (1,H,S,E), v (1,H,S,D), o (1,blk_q,H*D).
    Single-pass softmax: no online-softmax scratch / rescale / init-finalize.
    """
    qi = pl.program_id(1)
    q = q_ref[0]                                        # (H, blk_q, E)
    k = k_ref[0]                                        # (H, S, E)
    v = v_ref[0]                                        # (H, S, D)

    # Scores: batched over heads, f32 accumulation on the MXU (scale pre-folded
    # into q; no explicit k transpose).
    s = jnp.einsum("hqe,hke->hqk", q, k,
                   preferred_element_type=jnp.float32)  # (H, blk_q, S)

    if mask_flag:
        S = k.shape[1]
        row = qi * blk_q + lax.broadcasted_iota(jnp.int32, (blk_q, S), 0)
        col = lax.broadcasted_iota(jnp.int32, (blk_q, S), 1)
        s = jnp.where((col > row)[None], _MASK_VALUE, s)

    m = jnp.max(s, axis=-1, keepdims=True)              # (H, blk_q, 1)
    p = jnp.exp(s - m)
    l = jnp.sum(p, axis=-1, keepdims=True)
    inv = pl.reciprocal(l, approx=True)                 # EUP slot (cheap)
    inv = inv * (2.0 - l * inv)                         # one Newton step -> ~f32 precision

    o = jnp.einsum("hqk,hkd->hqd", p.astype(v.dtype), v,
                   preferred_element_type=jnp.float32) * inv   # (H, blk_q, D) f32
    _store_heads_lane_dense(o_ref, o)


def _flash_attention_kernel(q_ref, k_ref, v_ref, o_ref, m_ref, l_ref, acc_ref,
                            *, blk_q, blk_k, mask_flag):
    """grid=(B, nq, nk): flash/online-softmax path for long key axes.

    Blocks: q (1,H,blk_q,E), k (1,H,blk_k,E), v (1,H,blk_k,D), o (1,blk_q,H*D).
    Scratch (persists across the kv axis): m/l (H,blk_q,1) f32, acc (H,blk_q,D) f32.
    """
    qi = pl.program_id(1)
    ki = pl.program_id(2)
    nk = pl.num_programs(2)

    @pl.when(ki == 0)
    def _init():
        m_ref[...] = jnp.full(m_ref.shape, _MASK_VALUE, jnp.float32)
        l_ref[...] = jnp.zeros(l_ref.shape, jnp.float32)
        acc_ref[...] = jnp.zeros(acc_ref.shape, jnp.float32)

    def _compute(apply_mask):
        q = q_ref[0]                                    # (H, blk_q, E)
        k = k_ref[0]                                    # (H, blk_k, E)
        v = v_ref[0]                                    # (H, blk_k, D)
        s = jnp.einsum("hqe,hke->hqk", q, k,
                       preferred_element_type=jnp.float32)     # (H, blk_q, blk_k)
        if apply_mask:
            row = qi * blk_q + lax.broadcasted_iota(jnp.int32, (blk_q, blk_k), 0)
            col = ki * blk_k + lax.broadcasted_iota(jnp.int32, (blk_q, blk_k), 1)
            s = jnp.where((col > row)[None], _MASK_VALUE, s)

        m_prev = m_ref[...]
        m_new = jnp.maximum(m_prev, jnp.max(s, axis=-1, keepdims=True))
        alpha = jnp.exp(m_prev - m_new)
        p = jnp.exp(s - m_new)                          # f32
        l_ref[...] = alpha * l_ref[...] + jnp.sum(p, axis=-1, keepdims=True)
        acc_ref[...] = alpha * acc_ref[...] + jnp.einsum(
            "hqk,hkd->hqd", p.astype(v.dtype), v,
            preferred_element_type=jnp.float32)
        m_ref[...] = m_new

    if mask_flag:
        q0 = qi * blk_q
        k0 = ki * blk_k
        not_fully_masked = k0 < q0 + blk_q              # some col <= some row
        crosses_diag = (k0 + blk_k - 1) > q0            # tile touches the masked region
        # Only diagonal-crossing tiles pay the iota/compare/select; interior
        # tiles run the unmasked variant; fully-masked tiles are skipped.
        pl.when(not_fully_masked & crosses_diag)(lambda: _compute(True))
        pl.when(not_fully_masked & jnp.logical_not(crosses_diag))(lambda: _compute(False))
    else:
        _compute(False)

    @pl.when(ki == nk - 1)
    def _finalize():
        l = l_ref[...]
        inv = pl.reciprocal(l, approx=True)
        inv = inv * (2.0 - l * inv)
        _store_heads_lane_dense(o_ref, acc_ref[...] * inv)


def _pick_block(n, target):
    """Largest multiple-of-8 tile <= target that divides n (fallback: whole axis)."""
    if n <= target:
        return n
    cand = (target // 8) * 8
    while cand >= 8:
        if n % cand == 0:
            return cand
        cand -= 8
    return n


def flash_attention(q, k, v, *, mask_flag=True, block_q=256, block_k=256,
                    single_pass_max_s=512, out_dtype=None,
                    vmem_limit_bytes=32 * 1024 * 1024):
    """q: (B,H,L,E), k: (B,H,S,E), v: (B,H,S,D) -> lane-dense (B, L, H*D)."""
    B, H, L, E = q.shape
    _, _, S, D = v.shape
    if out_dtype is None:
        out_dtype = q.dtype
    blk_q = _pick_block(L, block_q)
    nq = L // blk_q
    out_shape = jax.ShapeDtypeStruct((B, L, H * D), out_dtype)

    def _params(sem):
        return pltpu.CompilerParams(dimension_semantics=sem,
                                    vmem_limit_bytes=vmem_limit_bytes)

    if S <= single_pass_max_s:
        # kv grid axis collapsed: one softmax pass per (batch, q-tile) program.
        kernel = functools.partial(_attention_single_pass_kernel,
                                   blk_q=blk_q, mask_flag=mask_flag)
        return pl.pallas_call(
            kernel,
            out_shape=out_shape,
            grid_spec=pltpu.PrefetchScalarGridSpec(
                num_scalar_prefetch=0,
                grid=(B, nq),
                in_specs=[
                    pl.BlockSpec((1, H, blk_q, E), lambda b, qi: (b, 0, qi, 0)),
                    pl.BlockSpec((1, H, S, E), lambda b, qi: (b, 0, 0, 0)),
                    pl.BlockSpec((1, H, S, D), lambda b, qi: (b, 0, 0, 0)),
                ],
                out_specs=pl.BlockSpec((1, blk_q, H * D), lambda b, qi: (b, qi, 0)),
            ),
            compiler_params=_params(("parallel", "parallel")),
        )(q, k, v)

    # Flash (online-softmax) path for long key axes.
    blk_k = _pick_block(S, block_k)
    nk = S // blk_k

    if mask_flag:
        # Clamp K/V block index to the last tile that can contribute to this
        # q-tile: fully-masked tiles reuse the previous block index, so Pallas
        # elides their DMAs (works for any blk_q/blk_k combination).
        def kv_map(b, qi, ki):
            last_needed = ((qi + 1) * blk_q - 1) // blk_k
            return (b, 0, jnp.minimum(ki, last_needed), 0)
    else:
        kv_map = lambda b, qi, ki: (b, 0, ki, 0)

    # TODO(synk): fully-masked causal kv tiles still pay the ~0.35us grid-step
    # overhead (compute + DMA are elided); an in-kernel kv loop with a
    # qi-dependent trip count (emit_pipeline) would remove it for very long S.
    kernel = functools.partial(_flash_attention_kernel,
                               blk_q=blk_q, blk_k=blk_k, mask_flag=mask_flag)
    return pl.pallas_call(
        kernel,
        out_shape=out_shape,
        grid_spec=pltpu.PrefetchScalarGridSpec(
            num_scalar_prefetch=0,
            grid=(B, nq, nk),
            in_specs=[
                pl.BlockSpec((1, H, blk_q, E), lambda b, qi, ki: (b, 0, qi, 0)),
                pl.BlockSpec((1, H, blk_k, E), kv_map),
                pl.BlockSpec((1, H, blk_k, D), kv_map),
            ],
            out_specs=pl.BlockSpec((1, blk_q, H * D), lambda b, qi, ki: (b, qi, 0)),
            scratch_shapes=[
                pltpu.VMEM((H, blk_q, 1), jnp.float32),   # running max m
                pltpu.VMEM((H, blk_q, 1), jnp.float32),   # running denom l
                pltpu.VMEM((H, blk_q, D), jnp.float32),   # output accumulator
            ],
        ),
        compiler_params=_params(("parallel", "parallel", "arbitrary")),
    )(q, k, v)


def attention_layer(params, queries, keys, values, attn_mask=None, tau=None,
                    delta=None, *, n_heads, mask_flag=True, scale=None,
                    compute_dtype=jnp.bfloat16, block_q=256, block_k=256,
                    single_pass_max_s=512):
    """JAX/Pallas port of AttentionLayer(FullAttention(mask_flag), d_model, n_heads).

    queries (B, L, d_model), keys (B, S, d_model), values (B, S, d_model).
    Returns (out, None) with out (B, L, d_model).  Dropout = identity (eval mode).
    attn_mask=None -> TriangularCausalMask when mask_flag.  tau/delta ignored
    (FullAttention ignores them).
    """
    # TODO(synk): explicit attn_mask tensors and attention dropout (p>0) are not
    # implemented — only the attn_mask=None causal / non-causal eval paths.
    B, L, d_model = queries.shape
    _, S, _ = keys.shape
    H = n_heads
    d_k = params["w_q"].shape[1] // H
    d_v = params["w_v"].shape[1] // H
    scale = scale if scale is not None else 1.0 / math.sqrt(d_k)
    cdt = compute_dtype if compute_dtype is not None else queries.dtype

    # Projections emitted directly in head-major (B, H, T, d) layout; the
    # softmax scale is folded into Q (free).  Matmul operands are cast to the
    # compute dtype (bf16 by default -> bf16 MXU path, half the K/V DMA bytes);
    # accumulation inside the kernel stays f32.
    wq = params["w_q"].reshape(d_model, H, d_k)
    wk = params["w_k"].reshape(d_model, H, d_k)
    wv = params["w_v"].reshape(d_model, H, d_v)
    q = ((jnp.einsum("bld,dhe->bhle", queries, wq)
          + params["b_q"].reshape(H, d_k)[None, :, None, :]) * scale).astype(cdt)
    k = (jnp.einsum("bsd,dhe->bhse", keys, wk)
         + params["b_k"].reshape(H, d_k)[None, :, None, :]).astype(cdt)
    v = (jnp.einsum("bsd,dhe->bhse", values, wv)
         + params["b_v"].reshape(H, d_v)[None, :, None, :]).astype(cdt)

    out_flat = flash_attention(q, k, v, mask_flag=mask_flag, block_q=block_q,
                               block_k=block_k,
                               single_pass_max_s=single_pass_max_s)   # (B, L, H*d_v)

    # out_flat is already the PyTorch `.view(B, L, -1)` layout: consume directly.
    out = jnp.dot(out_flat.astype(params["w_o"].dtype), params["w_o"]) + params["b_o"]
    return out, None


def _reference_attention_layer(params, queries, keys, values, *, n_heads,
                               mask_flag=True):
    """Pure-JAX (f32) mirror of the PyTorch AttentionLayer + FullAttention forward."""
    B, L, _ = queries.shape
    _, S, _ = keys.shape
    H = n_heads
    q = (queries @ params["w_q"] + params["b_q"]).reshape(B, L, H, -1)
    k = (keys @ params["w_k"] + params["b_k"]).reshape(B, S, H, -1)
    v = (values @ params["w_v"] + params["b_v"]).reshape(B, S, H, -1)
    E = q.shape[-1]
    scale = 1.0 / math.sqrt(E)
    scores = jnp.einsum("blhe,bshe->bhls", q.astype(jnp.float32),
                        k.astype(jnp.float32))
    if mask_flag:
        causal = jnp.triu(jnp.ones((L, S), dtype=bool), k=1)
        scores = jnp.where(causal[None, None], -jnp.inf, scores)
    A = jax.nn.softmax(scale * scores, axis=-1)
    out = jnp.einsum("bhls,bshd->blhd", A, v.astype(jnp.float32))
    out = out.reshape(B, L, -1).astype(queries.dtype)
    return out @ params["w_o"] + params["b_o"]


if __name__ == "__main__":
    B, L, S = 2, 256, 256
    d_model, n_heads = 128, 4

    key = jax.random.PRNGKey(0)
    kq, kk, kv_, *pk = jax.random.split(key, 11)
    queries = jax.random.normal(kq, (B, L, d_model), dtype=jnp.float32)
    keys_in = jax.random.normal(kk, (B, S, d_model), dtype=jnp.float32)
    values_in = jax.random.normal(kv_, (B, S, d_model), dtype=jnp.float32)

    w_init = 1.0 / math.sqrt(d_model)
    params = {
        "w_q": jax.random.normal(pk[0], (d_model, d_model), jnp.float32) * w_init,
        "b_q": jax.random.normal(pk[1], (d_model,), jnp.float32) * w_init,
        "w_k": jax.random.normal(pk[2], (d_model, d_model), jnp.float32) * w_init,
        "b_k": jax.random.normal(pk[3], (d_model,), jnp.float32) * w_init,
        "w_v": jax.random.normal(pk[4], (d_model, d_model), jnp.float32) * w_init,
        "b_v": jax.random.normal(pk[5], (d_model,), jnp.float32) * w_init,
        "w_o": jax.random.normal(pk[6], (d_model, d_model), jnp.float32) * w_init,
        "b_o": jax.random.normal(pk[7], (d_model,), jnp.float32) * w_init,
    }

    ref_causal = _reference_attention_layer(params, queries, keys_in, values_in,
                                            n_heads=n_heads, mask_flag=True)
    ref_cross = _reference_attention_layer(params, queries[:, :128], keys_in,
                                           values_in, n_heads=n_heads,
                                           mask_flag=False)

    # 1) Causal, f32 compute, single-pass kernel (S <= single_pass_max_s).
    out1, attn = attention_layer(params, queries, keys_in, values_in,
                                 attn_mask=None, n_heads=n_heads, mask_flag=True,
                                 compute_dtype=jnp.float32)
    out1 = jax.block_until_ready(out1)
    assert out1.shape == (B, L, d_model)
    assert attn is None
    assert jnp.allclose(out1, ref_causal, atol=2e-3, rtol=2e-3), \
        float(jnp.max(jnp.abs(out1 - ref_causal)))

    # 2) Causal, default bf16 compute (MXU fast path) -> looser tolerance vs f32 ref.
    out2, _ = attention_layer(params, queries, keys_in, values_in,
                              attn_mask=None, n_heads=n_heads, mask_flag=True)
    out2 = jax.block_until_ready(out2)
    assert jnp.allclose(out2, ref_causal, atol=5e-2, rtol=5e-2), \
        float(jnp.max(jnp.abs(out2 - ref_causal)))

    # 3) Non-causal cross-attention (L != S), bf16 compute, single-pass.
    out3, _ = attention_layer(params, queries[:, :128], keys_in, values_in,
                              attn_mask=None, n_heads=n_heads, mask_flag=False)
    out3 = jax.block_until_ready(out3)
    assert jnp.allclose(out3, ref_cross, atol=5e-2, rtol=5e-2), \
        float(jnp.max(jnp.abs(out3 - ref_cross)))

    # 4) Causal, f32 compute, forced multi-kv flash path (online softmax,
    #    causal-skip + diagonal-only masking + clamped K/V DMA).
    out4, _ = attention_layer(params, queries, keys_in, values_in,
                              attn_mask=None, n_heads=n_heads, mask_flag=True,
                              compute_dtype=jnp.float32, block_q=128, block_k=128,
                              single_pass_max_s=0)
    out4 = jax.block_until_ready(out4)
    assert jnp.allclose(out4, ref_causal, atol=2e-3, rtol=2e-3), \
        float(jnp.max(jnp.abs(out4 - ref_causal)))

    # 5) Non-causal, f32 compute, forced flash path.
    out5, _ = attention_layer(params, queries[:, :128], keys_in, values_in,
                              attn_mask=None, n_heads=n_heads, mask_flag=False,
                              compute_dtype=jnp.float32, block_q=128, block_k=128,
                              single_pass_max_s=0)
    out5 = jax.block_until_ready(out5)
    assert jnp.allclose(out5, ref_cross, atol=2e-3, rtol=2e-3), \
        float(jnp.max(jnp.abs(out5 - ref_cross)))

    print("KERNEL_OK")
</pallas_src>

<mosaic_0001>
module attributes {stable_mosaic.version = 11 : i64} {
  func.func @_attention_single_pass_kernel(%arg0: i32, %arg1: i32, %arg2: memref<1x4x256x32xf32, #tpu.memory_space<vmem>>, %arg3: memref<1x4x256x32xf32, #tpu.memory_space<vmem>>, %arg4: memref<1x4x256x32xf32, #tpu.memory_space<vmem>>, %arg5: memref<1x256x128xf32, #tpu.memory_space<vmem>>) attributes {dimension_semantics = [#tpu.dimension_semantics<parallel>, #tpu.dimension_semantics<parallel>], iteration_bounds = array<i64: 2, 1>, scalar_prefetch = 0 : i64, scratch_operands = 0 : i64, tpu.core_type = #tpu.core_type<tc>, window_params = [{transform_indices = @transform_0, window_bounds = array<i64: 1, 4, 256, 32>}, {transform_indices = @transform_1, window_bounds = array<i64: 1, 4, 256, 32>}, {transform_indices = @transform_2, window_bounds = array<i64: 1, 4, 256, 32>}, {transform_indices = @transform_3, window_bounds = array<i64: 1, 256, 128>}]} {
    %c0 = arith.constant 0 : index
    %c0_0 = arith.constant 0 : index
    %c0_1 = arith.constant 0 : index
    %c0_2 = arith.constant 0 : index
    %0 = vector.load %arg2[%c0, %c0_0, %c0_1, %c0_2] : memref<1x4x256x32xf32, #tpu.memory_space<vmem>>, vector<1x4x256x32xf32>
    %1 = vector.shape_cast %0 : vector<1x4x256x32xf32> to vector<4x256x32xf32>
    %c0_3 = arith.constant 0 : index
    %c0_4 = arith.constant 0 : index
    %c0_5 = arith.constant 0 : index
    %c0_6 = arith.constant 0 : index
    %2 = vector.load %arg3[%c0_3, %c0_4, %c0_5, %c0_6] : memref<1x4x256x32xf32, #tpu.memory_space<vmem>>, vector<1x4x256x32xf32>
    %3 = vector.shape_cast %2 : vector<1x4x256x32xf32> to vector<4x256x32xf32>
    %c0_7 = arith.constant 0 : index
    %c0_8 = arith.constant 0 : index
    %c0_9 = arith.constant 0 : index
    %c0_10 = arith.constant 0 : index
    %4 = vector.load %arg4[%c0_7, %c0_8, %c0_9, %c0_10] : memref<1x4x256x32xf32, #tpu.memory_space<vmem>>, vector<1x4x256x32xf32>
    %5 = vector.shape_cast %4 : vector<1x4x256x32xf32> to vector<4x256x32xf32>
    "tpu.trace_start"() <{level = 10 : i32, message = "hqe,hke->hqk"}> : () -> ()
    %cst = arith.constant dense<0.000000e+00> : vector<4x256x256xf32>
    %6 = tpu.matmul %1, %3, %cst {dimension_numbers = #tpu.dot_dimension_numbers<[2], [2], [1], [1], [0, 0, 0, 1, 1, 1], [0], [0]>} : vector<4x256x32xf32>, vector<4x256x32xf32>, vector<4x256x256xf32> -> vector<4x256x256xf32>
    "tpu.trace_stop"() : () -> ()
    %c256_i32 = arith.constant 256 : i32
    %7 = arith.muli %arg1, %c256_i32 : i32
    %8 = tpu.iota {dimensions = array<i32: 0>} : vector<256x256xi32>
    %9 = vector.broadcast %7 : i32 to vector<256x256xi32>
    %10 = arith.addi %9, %8 : vector<256x256xi32>
    %11 = tpu.iota {dimensions = array<i32: 1>} : vector<256x256xi32>
    %12 = arith.cmpi sgt, %11, %10 : vector<256x256xi32>
    %13 = vector.shape_cast %12 : vector<256x256xi1> to vector<1x256x256xi1>
    %cst_11 = arith.constant -1.000000e+30 : f32
    %14 = vector.shape_cast %13 : vector<1x256x256xi1> to vector<1x256x256xi1>
    %15 = vector.broadcast %14 : vector<1x256x256xi1> to vector<4x256x256xi1>
    %16 = vector.broadcast %cst_11 : f32 to vector<4x256x256xf32>
    %17 = arith.select %15, %16, %6 : vector<4x256x256xi1>, vector<4x256x256xf32>
    %cst_12 = arith.constant dense<0xFF800000> : vector<4x256xf32>
    %18 = vector.multi_reduction <maximumf>, %17, %cst_12 [2] : vector<4x256x256xf32> to vector<4x256xf32>
    %19 = vector.shape_cast %18 : vector<4x256xf32> to vector<4x256x1xf32>
    %20 = vector.broadcast %19 : vector<4x256x1xf32> to vector<4x256x256xf32>
    %21 = arith.subf %17, %20 : vector<4x256x256xf32>
    %22 = math.exp %21 : vector<4x256x256xf32>
    %cst_13 = arith.constant dense<0.000000e+00> : vector<4x256xf32>
    %23 = vector.multi_reduction <add>, %22, %cst_13 [2] : vector<4x256x256xf32> to vector<4x256xf32>
    %24 = vector.shape_cast %23 : vector<4x256xf32> to vector<4x256x1xf32>
    %25 = tpu.reciprocal %24 {approx = true} : vector<4x256x1xf32> -> vector<4x256x1xf32>
    %26 = arith.mulf %24, %25 : vector<4x256x1xf32>
    %cst_14 = arith.constant 2.000000e+00 : f32
    %27 = vector.broadcast %cst_14 : f32 to vector<4x256x1xf32>
    %28 = arith.subf %27, %26 : vector<4x256x1xf32>
    %29 = arith.mulf %25, %28 : vector<4x256x1xf32>
    "tpu.trace_start"() <{level = 10 : i32, message = "hqk,hkd->hqd"}> : () -> ()
    %cst_15 = arith.constant dense<0.000000e+00> : vector<4x256x32xf32>
    %30 = tpu.matmul %22, %5, %cst_15 {dimension_numbers = #tpu.dot_dimension_numbers<[2], [1], [1], [2], [0, 0, 0, 1, 1, 2], [0], [0]>} : vector<4x256x256xf32>, vector<4x256x32xf32>, vector<4x256x32xf32> -> vector<4x256x32xf32>
    "tpu.trace_stop"() : () -> ()
    %31 = vector.broadcast %29 : vector<4x256x1xf32> to vector<4x256x32xf32>
    %32 = arith.mulf %30, %31 : vector<4x256x32xf32>
    %33 = vector.extract_strided_slice %32 {offsets = [0, 0, 0], sizes = [1, 256, 32], strides = [1, 1, 1]} : vector<4x256x32xf32> to vector<1x256x32xf32>
    %34 = vector.shape_cast %33 : vector<1x256x32xf32> to vector<256x32xf32>
    %c0_16 = arith.constant 0 : index
    %c0_17 = arith.constant 0 : index
    %c0_18 = arith.constant 0 : index
    %35 = vector.load %arg5[%c0_16, %c0_17, %c0_18] : memref<1x256x128xf32, #tpu.memory_space<vmem>>, vector<1x256x32xf32>
    %36 = vector.shape_cast %35 : vector<1x256x32xf32> to vector<256x32xf32>
    %37 = vector.shape_cast %34 : vector<256x32xf32> to vector<1x256x32xf32>
    tpu.vector_store %arg5[%c0_16, %c0_17, %c0_18], %37 {strides = array<i32>} : memref<1x256x128xf32, #tpu.memory_space<vmem>>, vector<1x256x32xf32>,
    %38 = vector.extract_strided_slice %32 {offsets = [1, 0, 0], sizes = [1, 256, 32], strides = [1, 1, 1]} : vector<4x256x32xf32> to vector<1x256x32xf32>
    %39 = vector.shape_cast %38 : vector<1x256x32xf32> to vector<256x32xf32>
    %c0_19 = arith.constant 0 : index
    %c0_20 = arith.constant 0 : index
    %c32 = arith.constant 32 : index
    %40 = vector.load %arg5[%c0_19, %c0_20, %c32] : memref<1x256x128xf32, #tpu.memory_space<vmem>>, vector<1x256x32xf32>
    %41 = vector.shape_cast %40 : vector<1x256x32xf32> to vector<256x32xf32>
    %42 = vector.shape_cast %39 : vector<256x32xf32> to vector<1x256x32xf32>
    tpu.vector_store %arg5[%c0_19, %c0_20, %c32], %42 {strides = array<i32>} : memref<1x256x128xf32, #tpu.memory_space<vmem>>, vector<1x256x32xf32>,
    %43 = vector.extract_strided_slice %32 {offsets = [2, 0, 0], sizes = [1, 256, 32], strides = [1, 1, 1]} : vector<4x256x32xf32> to vector<1x256x32xf32>
    %44 = vector.shape_cast %43 : vector<1x256x32xf32> to vector<256x32xf32>
    %c0_21 = arith.constant 0 : index
    %c0_22 = arith.constant 0 : index
    %c64 = arith.constant 64 : index
    %45 = vector.load %arg5[%c0_21, %c0_22, %c64] : memref<1x256x128xf32, #tpu.memory_space<vmem>>, vector<1x256x32xf32>
    %46 = vector.shape_cast %45 : vector<1x256x32xf32> to vector<256x32xf32>
    %47 = vector.shape_cast %44 : vector<256x32xf32> to vector<1x256x32xf32>
    tpu.vector_store %arg5[%c0_21, %c0_22, %c64], %47 {strides = array<i32>} : memref<1x256x128xf32, #tpu.memory_space<vmem>>, vector<1x256x32xf32>,
    %48 = vector.extract_strided_slice %32 {offsets = [3, 0, 0], sizes = [1, 256, 32], strides = [1, 1, 1]} : vector<4x256x32xf32> to vector<1x256x32xf32>
    %49 = vector.shape_cast %48 : vector<1x256x32xf32> to vector<256x32xf32>
    %c0_23 = arith.constant 0 : index
    %c0_24 = arith.constant 0 : index
    %c96 = arith.constant 96 : index
    %50 = vector.load %arg5[%c0_23, %c0_24, %c96] : memref<1x256x128xf32, #tpu.memory_space<vmem>>, vector<1x256x32xf32>
    %51 = vector.shape_cast %50 : vector<1x256x32xf32> to vector<256x32xf32>
    %52 = vector.shape_cast %49 : vector<256x32xf32> to vector<1x256x32xf32>
    tpu.vector_store %arg5[%c0_23, %c0_24, %c96], %52 {strides = array<i32>} : memref<1x256x128xf32, #tpu.memory_space<vmem>>, vector<1x256x32xf32>,
    return
  }
  func.func @transform_0(%arg0: i32, %arg1: i32) -> (i32, i32, i32, i32) {
    %c0_i32 = arith.constant 0 : i32
    %c0_i32_0 = arith.constant 0 : i32
    %c0_i32_1 = arith.constant 0 : i32
    return %arg0, %c0_i32, %arg1, %c0_i32_0 : i32, i32, i32, i32
  }
  func.func @transform_1(%arg0: i32, %arg1: i32) -> (i32, i32, i32, i32) {
    %c0_i32 = arith.constant 0 : i32
    %c0_i32_0 = arith.constant 0 : i32
    %c0_i32_1 = arith.constant 0 : i32
    %c0_i32_2 = arith.constant 0 : i32
    return %arg0, %c0_i32, %c0_i32_0, %c0_i32_1 : i32, i32, i32, i32
  }
  func.func @transform_2(%arg0: i32, %arg1: i32) -> (i32, i32, i32, i32) {
    %c0_i32 = arith.constant 0 : i32
    %c0_i32_0 = arith.constant 0 : i32
    %c0_i32_1 = arith.constant 0 : i32
    %c0_i32_2 = arith.constant 0 : i32
    return %arg0, %c0_i32, %c0_i32_0, %c0_i32_1 : i32, i32, i32, i32
  }
  func.func @transform_3(%arg0: i32, %arg1: i32) -> (i32, i32, i32) {
    %c0_i32 = arith.constant 0 : i32
    %c0_i32_0 = arith.constant 0 : i32
    return %arg0, %arg1, %c0_i32 : i32, i32, i32
  }
}

</mosaic_0001>

<llo_original>
// kernel: tpu_custom_call.1
$region0: #{tpu_custom_call.1}
  #allocation0 [shape = 'u32[]', space=smem, size = 0x4, offset = 0x4, fixed_abs, tag = 'smem constant byte address 0x4 - core index']
  #allocation1 [shape = 'u32[144,128]{1,0:T(1,128)}', space=vmem, size = 0x12000, scoped, tag = 'internal scratch']
  %s0 = inlined_call_operand.vmem [shape: f32[2,4,256,32], index: 0, kind: input, shape index: {}]
  %s1 = inlined_call_operand.vmem [shape: f32[2,4,256,32], index: 1, kind: input, shape index: {}]
  %s2 = inlined_call_operand.vmem [shape: f32[2,4,256,32], index: 2, kind: input, shape index: {}]
  %s3 = inlined_call_operand.hbm [shape: f32[2,256,128], index: 3, kind: output, shape index: {}]
  %s4 = sld [smem:[#allocation0]]
  $region45: #{tpu_custom_call.1} parent=0
    _
  %s6 = ssub.s32 1, %s4
  %s7 = scalar_select 0, %s6, %s4
  $region1: #{tpu_custom_call.1} parent=0
    #allocation2 [shape = 'u8[262144]{0}', space=vmem, size = 0x40000, scoped, tag = 'output window, operand 0']
    #allocation3 [shape = 's32[2]{0}', space=sflag, size = 0x8, scoped, tag = 'scoped memory for tpu_custom_call.1']
    %8 = vsyncpa [#allocation3], 0
    %s9 = scalar_lea.sflag [#allocation3], 1
    %10 = vsyncpa %s9, 0
    loop: start=0, step=1, limit=4
    $region2: #{tpu_custom_call.1} parent=1 // loop_pre_header
      _
    $region3: #{tpu_custom_call.1} parent=1 // loop_header
      %s12 = sphi 0, %s16
      %p13 = scmp.ge.s32.totalorder %s12, 4
      %s19 = sphi 0, %s31
      %s20 = sphi 0, %s27
      %s21 = sphi 0, %s19
      %s22 = sphi 0, %s20
      %s23 = sphi 0, %s21
      %s24 = sphi 0, %s22
      %s36 = sphi 0, %s38
      %s39 = sphi 0, %s36
      %s40 = sphi 0, %s39
      %s56 = sphi 0, %s40
      %s62 = sphi 0, %s64
      %s65 = sphi 0, %s62
      %s66 = sphi 0, %s65
      %s82 = sphi 0, %s66
      %s88 = sphi 0, %s90
      %s91 = sphi 0, %s88
      %s92 = sphi 0, %s91
      %s108 = sphi 0, %s92
      %s116 = sphi 0, %s118
      %s119 = sphi 0, %s116
      %s120 = sphi 0, %s119
      %s136 = sphi 0, %s120
    $region4: #{tpu_custom_call.1} parent=1 // loop_header_branch
      %15 = sbr.rel (%p13) target = $region8
    $region5: #{tpu_custom_call.1} parent=1 // loop_body
      %s17 = ssub.s32 %s12, 1
      %s18 = ssub.s32 %s12, 2
      %s25 = sadd.s32 1, %s20
      %p26 = scmp.ge.s32.totalorder %s25, 1
      %s27 = scalar_select %p26, 0, %s25
      %s28 = sadd.s32 1, %s19
      %s29 = scalar_select %p26, %s28, %s19
      %p30 = scmp.ge.s32.totalorder %s29, 2
      %s31 = scalar_select %p30, 0, %s29
      %s32 = ssub.s32 %s19, %s31
      %s33 = ssub.s32 %s20, %s27
      %s34 = sor.u32 %s32, %s33
      %p35 = scmp.eq.s32.totalorder %s34, 0
      %s37 = sadd.s32 %s36, 1
      %s38 = scalar_select %p35, %s36, %s37
      %p41 = pneg %p35
      %p42 = scmp.eq.s32.totalorder %s12, 1
      %p43 = por %p41, %p42
      %p44 = scmp.ne.s32.totalorder %s36, %s39
      %p45 = scmp.eq.s32.totalorder %s12, 0
      %p46 = por %p44, %p45
      %p47 = scmp.ne.s32.totalorder %s36, %s39
      %p48 = scmp.eq.s32.totalorder %s17, 1
      %p49 = por %p47, %p48
      %p50 = scmp.ne.s32.totalorder %s39, %s40
      %p51 = scmp.eq.s32.totalorder %s17, 0
      %p52 = por %p50, %p51
      %p53 = scmp.ne.s32.totalorder %s39, %s40
      %p54 = scmp.eq.s32.totalorder %s18, 1
      %p55 = por %p53, %p54
      %p57 = scmp.ne.s32.totalorder %s40, %s56
      %p58 = scmp.eq.s32.totalorder %s18, 0
      %p59 = por %p57, %p58
      %s60 = ssub.s32 %s19, %s31
      %p61 = scmp.eq.s32.totalorder %s60, 0
      %s63 = sadd.s32 %s62, 1
      %s64 = scalar_select %p61, %s62, %s63
      %p67 = pneg %p61
      %p68 = scmp.eq.s32.totalorder %s12, 1
      %p69 = por %p67, %p68
      %p70 = scmp.ne.s32.totalorder %s62, %s65
      %p71 = scmp.eq.s32.totalorder %s12, 0
      %p72 = por %p70, %p71
      %p73 = scmp.ne.s32.totalorder %s62, %s65
      %p74 = scmp.eq.s32.totalorder %s17, 1
      %p75 = por %p73, %p74
      %p76 = scmp.ne.s32.totalorder %s65, %s66
      %p77 = scmp.eq.s32.totalorder %s17, 0
      %p78 = por %p76, %p77
      %p79 = scmp.ne.s32.totalorder %s65, %s66
      %p80 = scmp.eq.s32.totalorder %s18, 1
      %p81 = por %p79, %p80
      %p83 = scmp.ne.s32.totalorder %s66, %s82
      %p84 = scmp.eq.s32.totalorder %s18, 0
      %p85 = por %p83, %p84
      %s86 = ssub.s32 %s19, %s31
      %p87 = scmp.eq.s32.totalorder %s86, 0
      %s89 = sadd.s32 %s88, 1
      %s90 = scalar_select %p87, %s88, %s89
      %p93 = pneg %p87
      %p94 = scmp.eq.s32.totalorder %s12, 1
      %p95 = por %p93, %p94
      %p96 = scmp.ne.s32.totalorder %s88, %s91
      %p97 = scmp.eq.s32.totalorder %s12, 0
      %p98 = por %p96, %p97
      %p99 = scmp.ne.s32.totalorder %s88, %s91
      %p100 = scmp.eq.s32.totalorder %s17, 1
      %p101 = por %p99, %p100
      %p102 = scmp.ne.s32.totalorder %s91, %s92
      %p103 = scmp.eq.s32.totalorder %s17, 0
      %p104 = por %p102, %p103
      %p105 = scmp.ne.s32.totalorder %s91, %s92
      %p106 = scmp.eq.s32.totalorder %s18, 1
      %p107 = por %p105, %p106
      %p109 = scmp.ne.s32.totalorder %s92, %s108
      %p110 = scmp.eq.s32.totalorder %s18, 0
      %p111 = por %p109, %p110
      %s112 = ssub.s32 %s19, %s31
      %s113 = ssub.s32 %s20, %s27
      %s114 = sor.u32 %s112, %s113
      %p115 = scmp.eq.s32.totalorder %s114, 0
      %s117 = sadd.s32 %s116, 1
      %s118 = scalar_select %p115, %s116, %s117
      %p121 = pneg %p115
      %p122 = scmp.eq.s32.totalorder %s12, 1
      %p123 = por %p121, %p122
      %p124 = scmp.ne.s32.totalorder %s116, %s119
      %p125 = scmp.eq.s32.totalorder %s12, 0
      %p126 = por %p124, %p125
      %p127 = scmp.ne.s32.totalorder %s116, %s119
      %p128 = scmp.eq.s32.totalorder %s17, 1
      %p129 = por %p127, %p128
      %p130 = scmp.ne.s32.totalorder %s119, %s120
      %p131 = scmp.eq.s32.totalorder %s17, 0
      %p132 = por %p130, %p131
      %p133 = scmp.ne.s32.totalorder %s119, %s120
      %p134 = scmp.eq.s32.totalorder %s18, 1
      %p135 = por %p133, %p134
      %p137 = scmp.ne.s32.totalorder %s120, %s136
      %p138 = scmp.eq.s32.totalorder %s18, 0
      %p139 = por %p137, %p138
      %p140 = scmp.le.s32.totalorder 1, %s12
      %p141 = scmp.lt.s32.totalorder %s12, 3
      %p142 = pnand %p140, %p141
      %p143 = pneg %p142
      // Predicated region
      $region9: #{tpu_custom_call.1} parent=5 // pred_check
        _
      $region10: #{tpu_custom_call.1} parent=5 // pred_check_branch
        %145 = sbr.rel (%p142) target = $region12
      $region11: #{tpu_custom_call.1} parent=5 // pred_region
        %s146 = ssub.s32 %s12, 1
      $region12: #{tpu_custom_call.1} parent=5 // pred_fallthru
        _
      %p147 = scmp.lt.s32.totalorder %s12, 2
      // Predicated region
      $region13: #{tpu_custom_call.1} parent=5 // pred_check
        %p148 = pneg %p147
      $region14: #{tpu_custom_call.1} parent=5 // pred_check_branch
        %150 = sbr.rel (%p148) target = $region16
      $region15: #{tpu_custom_call.1} parent=5 // pred_region
        // Predicated region
        $region17: #{tpu_custom_call.1} parent=15 // pred_check
          %p151 = pneg %p46
        $region18: #{tpu_custom_call.1} parent=15 // pred_check_branch
          %153 = sbr.rel (%p151) target = $region20
        $region19: #{tpu_custom_call.1} parent=15 // pred_region
          %s154 = smul.u32 32, %s20
          %p155 = scmp.lt.s32.totalorder %s19, 1
          %s156 = scalar_select %p155, %s19, 1
          %p157 = scmp.lt.s32.totalorder %s154, 31
          %s158 = scalar_select %p157, %s154, 31
          %s159 = smul.addr %s156, 128
          %s160 = sadd.s32 %s158, %s159
          %s161 = smul.addr %s160, 8
          %s162 = scalar_lea.vmem %s0, %s161
          %s163 = smul.u32 32, %s20
        $region20: #{tpu_custom_call.1} parent=15 // pred_fallthru
          _
        // Predicated region
        $region21: #{tpu_custom_call.1} parent=15 // pred_check
          %p164 = pneg %p72
        $region22: #{tpu_custom_call.1} parent=15 // pred_check_branch
          %166 = sbr.rel (%p164) target = $region24
        $region23: #{tpu_custom_call.1} parent=15 // pred_region
          %p167 = scmp.lt.s32.totalorder %s19, 1
          %s168 = scalar_select %p167, %s19, 1
          %s169 = smul.addr %s168, 128
          %s170 = smul.addr %s169, 8
          %s171 = scalar_lea.vmem %s1, %s170
        $region24: #{tpu_custom_call.1} parent=15 // pred_fallthru
          _
        // Predicated region
        $region25: #{tpu_custom_call.1} parent=15 // pred_check
          %p172 = pneg %p98
        $region26: #{tpu_custom_call.1} parent=15 // pred_check_branch
          %174 = sbr.rel (%p172) target = $region28
        $region27: #{tpu_custom_call.1} parent=15 // pred_region
          %p175 = scmp.lt.s32.totalorder %s19, 1
          %s176 = scalar_select %p175, %s19, 1
          %s177 = smul.addr %s176, 128
          %s178 = smul.addr %s177, 8
          %s179 = scalar_lea.vmem %s2, %s178
        $region28: #{tpu_custom_call.1} parent=15 // pred_fallthru
          _
      $region16: #{tpu_custom_call.1} parent=5 // pred_fallthru
        _
      %p180 = scmp.le.s32.totalorder 1, %s12
      %p181 = scmp.lt.s32.totalorder %s12, 3
      %p182 = pnand %p180, %p181
      %p183 = pneg %p182
      // Predicated region
      $region29: #{tpu_custom_call.1} parent=5 // pred_check
        _
      $region30: #{tpu_custom_call.1} parent=5 // pred_check_branch
        %185 = sbr.rel (%p182) target = $region32
      $region31: #{tpu_custom_call.1} parent=5 // pred_region
        %s186 = ssub.s32 %s12, 1
        %s187 = smul.u32 32, %s22
        %p188 = scmp.lt.s32.totalorder %s21, 1
        %s189 = scalar_select %p188, %s21, 1
        %p190 = scmp.lt.s32.totalorder %s187, 31
        %s191 = scalar_select %p190, %s187, 31
        %s192 = smul.addr %s189, 128
        %s193 = sadd.s32 %s191, %s192
        %s194 = smul.addr %s193, 8
        %s195 = scalar_lea.vmem %s0, %s194
        %p196 = pneg %p52
        %p197 = pneg %p49
        %p198 = scmp.lt.s32.totalorder %s21, 1
        %s199 = scalar_select %p198, %s21, 1
        %s200 = smul.addr %s199, 128
        %s201 = smul.addr %s200, 8
        %s202 = scalar_lea.vmem %s1, %s201
        %p203 = pneg %p78
        %p204 = pneg %p75
        %p205 = scmp.lt.s32.totalorder %s21, 1
        %s206 = scalar_select %p205, %s21, 1
        %s207 = smul.addr %s206, 128
        %s208 = smul.addr %s207, 8
        %s209 = scalar_lea.vmem %s2, %s208
        %p210 = pneg %p104
        %p211 = pneg %p101
        %p212 = pneg %p132
        %p213 = pneg %p129
        %s214 = sand.u32 %s119, 1
        %s215 = scalar_lea.sflag [#allocation3], %s214
        %s216 = sand.u32 %s119, 1
        %s217 = smul.addr %s216, 256
        %s218 = scalar_lea.vmem [#allocation2], %s217
        %s219 = smul.u32 32, %s22
        %p220 = scmp.lt.s32.totalorder %s21, 1
        %s221 = scalar_select %p220, %s21, 1
        %p222 = scmp.lt.s32.totalorder %s219, 31
        %s223 = scalar_select %p222, %s219, 31
        %s224 = smul.addr %s221, 128
        %s225 = sadd.s32 %s223, %s224
        %s226 = smul.addr %s225, 8
        %s227 = scalar_lea.vmem %s0, %s226
        %s228 = smul.u32 32, %s22
        %p229 = scmp.lt.s32.totalorder %s21, 1
        %s230 = scalar_select %p229, %s21, 1
        %s231 = smul.addr %s230, 128
        %s232 = smul.addr %s231, 8
        %s233 = scalar_lea.vmem %s1, %s232
        %p234 = scmp.lt.s32.totalorder %s21, 1
        %s235 = scalar_select %p234, %s21, 1
        %s236 = smul.addr %s235, 128
        %s237 = smul.addr %s236, 8
        %s238 = scalar_lea.vmem %s2, %s237
        %s239 = smul.u32 32, %s22
        %v240 = vld [vmem:[%s227] sm:$0xff]
        %v241 = vld [vmem:[%s227 + $0x8] sm:$0xff]
        %v242 = vld [vmem:[%s227 + $0x10] sm:$0xff]
        %v243 = vld [vmem:[%s227 + $0x18] sm:$0xff]
        %v244 = vld [vmem:[%s227 + $0x20] sm:$0xff]
        %v245 = vld [vmem:[%s227 + $0x28] sm:$0xff]
        %v246 = vld [vmem:[%s227 + $0x30] sm:$0xff]
        %v247 = vld [vmem:[%s227 + $0x38] sm:$0xff]
        %v248 = vld [vmem:[%s227 + $0x40] sm:$0xff]
        %v249 = vld [vmem:[%s227 + $0x48] sm:$0xff]
        %v250 = vld [vmem:[%s227 + $0x50] sm:$0xff]
        %v251 = vld [vmem:[%s227 + $0x58] sm:$0xff]
        %v252 = vld [vmem:[%s227 + $0x60] sm:$0xff]
        %v253 = vld [vmem:[%s227 + $0x68] sm:$0xff]
        %v254 = vld [vmem:[%s227 + $0x70] sm:$0xff]
        %v255 = vld [vmem:[%s227 + $0x78] sm:$0xff]
        %v256 = vld [vmem:[%s227 + $0x80] sm:$0xff]
        %v257 = vld [vmem:[%s227 + $0x88] sm:$0xff]
        %v258 = vld [vmem:[%s227 + $0x90] sm:$0xff]
        %v259 = vld [vmem:[%s227 + $0x98] sm:$0xff]
        %v260 = vld [vmem:[%s227 + $0xa0] sm:$0xff]
        %v261 = vld [vmem:[%s227 + $0xa8] sm:$0xff]
        %v262 = vld [vmem:[%s227 + $0xb0] sm:$0xff]
        %v263 = vld [vmem:[%s227 + $0xb8] sm:$0xff]
        %v264 = vld [vmem:[%s227 + $0xc0] sm:$0xff]
        %v265 = vld [vmem:[%s227 + $0xc8] sm:$0xff]
        %v266 = vld [vmem:[%s227 + $0xd0] sm:$0xff]
        %v267 = vld [vmem:[%s227 + $0xd8] sm:$0xff]
        %v268 = vld [vmem:[%s227 + $0xe0] sm:$0xff]
        %v269 = vld [vmem:[%s227 + $0xe8] sm:$0xff]
        %v270 = vld [vmem:[%s227 + $0xf0] sm:$0xff]
        %v271 = vld [vmem:[%s227 + $0xf8] sm:$0xff]
        %v272 = vld [vmem:[%s227 + $0x100] sm:$0xff]
        %v273 = vld [vmem:[%s227 + $0x108] sm:$0xff]
        %v274 = vld [vmem:[%s227 + $0x110] sm:$0xff]
        %v275 = vld [vmem:[%s227 + $0x118] sm:$0xff]
        %v276 = vld [vmem:[%s227 + $0x120] sm:$0xff]
        %v277 = vld [vmem:[%s227 + $0x128] sm:$0xff]
        %v278 = vld [vmem:[%s227 + $0x130] sm:$0xff]
        %v279 = vld [vmem:[%s227 + $0x138] sm:$0xff]
        %v280 = vld [vmem:[%s227 + $0x140] sm:$0xff]
        %v281 = vld [vmem:[%s227 + $0x148] sm:$0xff]
        %v282 = vld [vmem:[%s227 + $0x150] sm:$0xff]
        %v283 = vld [vmem:[%s227 + $0x158] sm:$0xff]
        %v284 = vld [vmem:[%s227 + $0x160] sm:$0xff]
        %v285 = vld [vmem:[%s227 + $0x168] sm:$0xff]
        %v286 = vld [vmem:[%s227 + $0x170] sm:$0xff]
        %v287 = vld [vmem:[%s227 + $0x178] sm:$0xff]
        %v288 = vld [vmem:[%s227 + $0x180] sm:$0xff]
        %v289 = vld [vmem:[%s227 + $0x188] sm:$0xff]
        %v290 = vld [vmem:[%s227 + $0x190] sm:$0xff]
        %v291 = vld [vmem:[%s227 + $0x198] sm:$0xff]
        %v292 = vld [vmem:[%s227 + $0x1a0] sm:$0xff]
        %v293 = vld [vmem:[%s227 + $0x1a8] sm:$0xff]
        %v294 = vld [vmem:[%s227 + $0x1b0] sm:$0xff]
        %v295 = vld [vmem:[%s227 + $0x1b8] sm:$0xff]
        %v296 = vld [vmem:[%s227 + $0x1c0] sm:$0xff]
        %v297 = vld [vmem:[%s227 + $0x1c8] sm:$0xff]
        %v298 = vld [vmem:[%s227 + $0x1d0] sm:$0xff]
        %v299 = vld [vmem:[%s227 + $0x1d8] sm:$0xff]
        %v300 = vld [vmem:[%s227 + $0x1e0] sm:$0xff]
        %v301 = vld [vmem:[%s227 + $0x1e8] sm:$0xff]
        %v302 = vld [vmem:[%s227 + $0x1f0] sm:$0xff]
        %v303 = vld [vmem:[%s227 + $0x1f8] sm:$0xff]
        %v304 = vld [vmem:[%s227 + $0x200] sm:$0xff]
        %v305 = vld [vmem:[%s227 + $0x208] sm:$0xff]
        %v306 = vld [vmem:[%s227 + $0x210] sm:$0xff]
        %v307 = vld [vmem:[%s227 + $0x218] sm:$0xff]
        %v308 = vld [vmem:[%s227 + $0x220] sm:$0xff]
        %v309 = vld [vmem:[%s227 + $0x228] sm:$0xff]
        %v310 = vld [vmem:[%s227 + $0x230] sm:$0xff]
        %v311 = vld [vmem:[%s227 + $0x238] sm:$0xff]
        %v312 = vld [vmem:[%s227 + $0x240] sm:$0xff]
        %v313 = vld [vmem:[%s227 + $0x248] sm:$0xff]
        %v314 = vld [vmem:[%s227 + $0x250] sm:$0xff]
        %v315 = vld [vmem:[%s227 + $0x258] sm:$0xff]
        %v316 = vld [vmem:[%s227 + $0x260] sm:$0xff]
        %v317 = vld [vmem:[%s227 + $0x268] sm:$0xff]
        %v318 = vld [vmem:[%s227 + $0x270] sm:$0xff]
        %v319 = vld [vmem:[%s227 + $0x278] sm:$0xff]
        %v320 = vld [vmem:[%s227 + $0x280] sm:$0xff]
        %v321 = vld [vmem:[%s227 + $0x288] sm:$0xff]
        %v322 = vld [vmem:[%s227 + $0x290] sm:$0xff]
        %v323 = vld [vmem:[%s227 + $0x298] sm:$0xff]
        %v324 = vld [vmem:[%s227 + $0x2a0] sm:$0xff]
        %v325 = vld [vmem:[%s227 + $0x2a8] sm:$0xff]
        %v326 = vld [vmem:[%s227 + $0x2b0] sm:$0xff]
        %v327 = vld [vmem:[%s227 + $0x2b8] sm:$0xff]
        %v328 = vld [vmem:[%s227 + $0x2c0] sm:$0xff]
        %v329 = vld [vmem:[%s227 + $0x2c8] sm:$0xff]
        %v330 = vld [vmem:[%s227 + $0x2d0] sm:$0xff]
        %v331 = vld [vmem:[%s227 + $0x2d8] sm:$0xff]
        %v332 = vld [vmem:[%s227 + $0x2e0] sm:$0xff]
        %v333 = vld [vmem:[%s227 + $0x2e8] sm:$0xff]
        %v334 = vld [vmem:[%s227 + $0x2f0] sm:$0xff]
        %v335 = vld [vmem:[%s227 + $0x2f8] sm:$0xff]
        %v336 = vld [vmem:[%s227 + $0x300] sm:$0xff]
        %v337 = vld [vmem:[%s227 + $0x308] sm:$0xff]
        %v338 = vld [vmem:[%s227 + $0x310] sm:$0xff]
        %v339 = vld [vmem:[%s227 + $0x318] sm:$0xff]
        %v340 = vld [vmem:[%s227 + $0x320] sm:$0xff]
        %v341 = vld [vmem:[%s227 + $0x328] sm:$0xff]
        %v342 = vld [vmem:[%s227 + $0x330] sm:$0xff]
        %v343 = vld [vmem:[%s227 + $0x338] sm:$0xff]
        %v344 = vld [vmem:[%s227 + $0x340] sm:$0xff]
        %v345 = vld [vmem:[%s227 + $0x348] sm:$0xff]
        %v346 = vld [vmem:[%s227 + $0x350] sm:$0xff]
        %v347 = vld [vmem:[%s227 + $0x358] sm:$0xff]
        %v348 = vld [vmem:[%s227 + $0x360] sm:$0xff]
        %v349 = vld [vmem:[%s227 + $0x368] sm:$0xff]
        %v350 = vld [vmem:[%s227 + $0x370] sm:$0xff]
        %v351 = vld [vmem:[%s227 + $0x378] sm:$0xff]
        %v352 = vld [vmem:[%s227 + $0x380] sm:$0xff]
        %v353 = vld [vmem:[%s227 + $0x388] sm:$0xff]
        %v354 = vld [vmem:[%s227 + $0x390] sm:$0xff]
        %v355 = vld [vmem:[%s227 + $0x398] sm:$0xff]
        %v356 = vld [vmem:[%s227 + $0x3a0] sm:$0xff]
        %v357 = vld [vmem:[%s227 + $0x3a8] sm:$0xff]
        %v358 = vld [vmem:[%s227 + $0x3b0] sm:$0xff]
        %v359 = vld [vmem:[%s227 + $0x3b8] sm:$0xff]
        %v360 = vld [vmem:[%s227 + $0x3c0] sm:$0xff]
        %v361 = vld [vmem:[%s227 + $0x3c8] sm:$0xff]
        %v362 = vld [vmem:[%s227 + $0x3d0] sm:$0xff]
        %v363 = vld [vmem:[%s227 + $0x3d8] sm:$0xff]
        %v364 = vld [vmem:[%s227 + $0x3e0] sm:$0xff]
        %v365 = vld [vmem:[%s227 + $0x3e8] sm:$0xff]
        %v366 = vld [vmem:[%s227 + $0x3f0] sm:$0xff]
        %v367 = vld [vmem:[%s227 + $0x3f8] sm:$0xff]
        %v368 = vld [vmem:[%s233] sm:$0xff]
        %v369 = vld [vmem:[%s233 + $0x8] sm:$0xff]
        %v370 = vld [vmem:[%s233 + $0x10] sm:$0xff]
        %v371 = vld [vmem:[%s233 + $0x18] sm:$0xff]
        %v372 = vld [vmem:[%s233 + $0x20] sm:$0xff]
        %v373 = vld [vmem:[%s233 + $0x28] sm:$0xff]
        %v374 = vld [vmem:[%s233 + $0x30] sm:$0xff]
        %v375 = vld [vmem:[%s233 + $0x38] sm:$0xff]
        %v376 = vld [vmem:[%s233 + $0x40] sm:$0xff]
        %v377 = vld [vmem:[%s233 + $0x48] sm:$0xff]
        %v378 = vld [vmem:[%s233 + $0x50] sm:$0xff]
        %v379 = vld [vmem:[%s233 + $0x58] sm:$0xff]
        %v380 = vld [vmem:[%s233 + $0x60] sm:$0xff]
        %v381 = vld [vmem:[%s233 + $0x68] sm:$0xff]
        %v382 = vld [vmem:[%s233 + $0x70] sm:$0xff]
        %v383 = vld [vmem:[%s233 + $0x78] sm:$0xff]
        %v384 = vld [vmem:[%s233 + $0x80] sm:$0xff]
        %v385 = vld [vmem:[%s233 + $0x88] sm:$0xff]
        %v386 = vld [vmem:[%s233 + $0x90] sm:$0xff]
        %v387 = vld [vmem:[%s233 + $0x98] sm:$0xff]
        %v388 = vld [vmem:[%s233 + $0xa0] sm:$0xff]
        %v389 = vld [vmem:[%s233 + $0xa8] sm:$0xff]
        %v390 = vld [vmem:[%s233 + $0xb0] sm:$0xff]
        %v391 = vld [vmem:[%s233 + $0xb8] sm:$0xff]
        %v392 = vld [vmem:[%s233 + $0xc0] sm:$0xff]
        %v393 = vld [vmem:[%s233 + $0xc8] sm:$0xff]
        %v394 = vld [vmem:[%s233 + $0xd0] sm:$0xff]
        %v395 = vld [vmem:[%s233 + $0xd8] sm:$0xff]
        %v396 = vld [vmem:[%s233 + $0xe0] sm:$0xff]
        %v397 = vld [vmem:[%s233 + $0xe8] sm:$0xff]
        %v398 = vld [vmem:[%s233 + $0xf0] sm:$0xff]
        %v399 = vld [vmem:[%s233 + $0xf8] sm:$0xff]
        %v400 = vld [vmem:[%s233 + $0x100] sm:$0xff]
        %v401 = vld [vmem:[%s233 + $0x108] sm:$0xff]
        %v402 = vld [vmem:[%s233 + $0x110] sm:$0xff]
        %v403 = vld [vmem:[%s233 + $0x118] sm:$0xff]
        %v404 = vld [vmem:[%s233 + $0x120] sm:$0xff]
        %v405 = vld [vmem:[%s233 + $0x128] sm:$0xff]
        %v406 = vld [vmem:[%s233 + $0x130] sm:$0xff]
        %v407 = vld [vmem:[%s233 + $0x138] sm:$0xff]
        %v408 = vld [vmem:[%s233 + $0x140] sm:$0xff]
        %v409 = vld [vmem:[%s233 + $0x148] sm:$0xff]
        %v410 = vld [vmem:[%s233 + $0x150] sm:$0xff]
        %v411 = vld [vmem:[%s233 + $0x158] sm:$0xff]
        %v412 = vld [vmem:[%s233 + $0x160] sm:$0xff]
        %v413 = vld [vmem:[%s233 + $0x168] sm:$0xff]
        %v414 = vld [vmem:[%s233 + $0x170] sm:$0xff]
        %v415 = vld [vmem:[%s233 + $0x178] sm:$0xff]
        %v416 = vld [vmem:[%s233 + $0x180] sm:$0xff]
        %v417 = vld [vmem:[%s233 + $0x188] sm:$0xff]
        %v418 = vld [vmem:[%s233 + $0x190] sm:$0xff]
        %v419 = vld [vmem:[%s233 + $0x198] sm:$0xff]
        %v420 = vld [vmem:[%s233 + $0x1a0] sm:$0xff]
        %v421 = vld [vmem:[%s233 + $0x1a8] sm:$0xff]
        %v422 = vld [vmem:[%s233 + $0x1b0] sm:$0xff]
        %v423 = vld [vmem:[%s233 + $0x1b8] sm:$0xff]
        %v424 = vld [vmem:[%s233 + $0x1c0] sm:$0xff]
        %v425 = vld [vmem:[%s233 + $0x1c8] sm:$0xff]
        %v426 = vld [vmem:[%s233 + $0x1d0] sm:$0xff]
        %v427 = vld [vmem:[%s233 + $0x1d8] sm:$0xff]
        %v428 = vld [vmem:[%s233 + $0x1e0] sm:$0xff]
        %v429 = vld [vmem:[%s233 + $0x1e8] sm:$0xff]
        %v430 = vld [vmem:[%s233 + $0x1f0] sm:$0xff]
        %v431 = vld [vmem:[%s233 + $0x1f8] sm:$0xff]
        %v432 = vld [vmem:[%s233 + $0x200] sm:$0xff]
        %v433 = vld [vmem:[%s233 + $0x208] sm:$0xff]
        %v434 = vld [vmem:[%s233 + $0x210] sm:$0xff]
        %v435 = vld [vmem:[%s233 + $0x218] sm:$0xff]
        %v436 = vld [vmem:[%s233 + $0x220] sm:$0xff]
        %v437 = vld [vmem:[%s233 + $0x228] sm:$0xff]
        %v438 = vld [vmem:[%s233 + $0x230] sm:$0xff]
        %v439 = vld [vmem:[%s233 + $0x238] sm:$0xff]
        %v440 = vld [vmem:[%s233 + $0x240] sm:$0xff]
        %v441 = vld [vmem:[%s233 + $0x248] sm:$0xff]
        %v442 = vld [vmem:[%s233 + $0x250] sm:$0xff]
        %v443 = vld [vmem:[%s233 + $0x258] sm:$0xff]
        %v444 = vld [vmem:[%s233 + $0x260] sm:$0xff]
        %v445 = vld [vmem:[%s233 + $0x268] sm:$0xff]
        %v446 = vld [vmem:[%s233 + $0x270] sm:$0xff]
        %v447 = vld [vmem:[%s233 + $0x278] sm:$0xff]
        %v448 = vld [vmem:[%s233 + $0x280] sm:$0xff]
        %v449 = vld [vmem:[%s233 + $0x288] sm:$0xff]
        %v450 = vld [vmem:[%s233 + $0x290] sm:$0xff]
        %v451 = vld [vmem:[%s233 + $0x298] sm:$0xff]
        %v452 = vld [vmem:[%s233 + $0x2a0] sm:$0xff]
        %v453 = vld [vmem:[%s233 + $0x2a8] sm:$0xff]
        %v454 = vld [vmem:[%s233 + $0x2b0] sm:$0xff]
        %v455 = vld [vmem:[%s233 + $0x2b8] sm:$0xff]
        %v456 = vld [vmem:[%s233 + $0x2c0] sm:$0xff]
        %v457 = vld [vmem:[%s233 + $0x2c8] sm:$0xff]
        %v458 = vld [vmem:[%s233 + $0x2d0] sm:$0xff]
        %v459 = vld [vmem:[%s233 + $0x2d8] sm:$0xff]
        %v460 = vld [vmem:[%s233 + $0x2e0] sm:$0xff]
        %v461 = vld [vmem:[%s233 + $0x2e8] sm:$0xff]
        %v462 = vld [vmem:[%s233 + $0x2f0] sm:$0xff]
        %v463 = vld [vmem:[%s233 + $0x2f8] sm:$0xff]
        %v464 = vld [vmem:[%s233 + $0x300] sm:$0xff]
        %v465 = vld [vmem:[%s233 + $0x308] sm:$0xff]
        %v466 = vld [vmem:[%s233 + $0x310] sm:$0xff]
        %v467 = vld [vmem:[%s233 + $0x318] sm:$0xff]
        %v468 = vld [vmem:[%s233 + $0x320] sm:$0xff]
        %v469 = vld [vmem:[%s233 + $0x328] sm:$0xff]
        %v470 = vld [vmem:[%s233 + $0x330] sm:$0xff]
        %v471 = vld [vmem:[%s233 + $0x338] sm:$0xff]
        %v472 = vld [vmem:[%s233 + $0x340] sm:$0xff]
        %v473 = vld [vmem:[%s233 + $0x348] sm:$0xff]
        %v474 = vld [vmem:[%s233 + $0x350] sm:$0xff]
        %v475 = vld [vmem:[%s233 + $0x358] sm:$0xff]
        %v476 = vld [vmem:[%s233 + $0x360] sm:$0xff]
        %v477 = vld [vmem:[%s233 + $0x368] sm:$0xff]
        %v478 = vld [vmem:[%s233 + $0x370] sm:$0xff]
        %v479 = vld [vmem:[%s233 + $0x378] sm:$0xff]
        %v480 = vld [vmem:[%s233 + $0x380] sm:$0xff]
        %v481 = vld [vmem:[%s233 + $0x388] sm:$0xff]
        %v482 = vld [vmem:[%s233 + $0x390] sm:$0xff]
        %v483 = vld [vmem:[%s233 + $0x398] sm:$0xff]
        %v484 = vld [vmem:[%s233 + $0x3a0] sm:$0xff]
        %v485 = vld [vmem:[%s233 + $0x3a8] sm:$0xff]
        %v486 = vld [vmem:[%s233 + $0x3b0] sm:$0xff]
        %v487 = vld [vmem:[%s233 + $0x3b8] sm:$0xff]
        %v488 = vld [vmem:[%s233 + $0x3c0] sm:$0xff]
        %v489 = vld [vmem:[%s233 + $0x3c8] sm:$0xff]
        %v490 = vld [vmem:[%s233 + $0x3d0] sm:$0xff]
        %v491 = vld [vmem:[%s233 + $0x3d8] sm:$0xff]
        %v492 = vld [vmem:[%s233 + $0x3e0] sm:$0xff]
        %v493 = vld [vmem:[%s233 + $0x3e8] sm:$0xff]
        %v494 = vld [vmem:[%s233 + $0x3f0] sm:$0xff]
        %v495 = vld [vmem:[%s233 + $0x3f8] sm:$0xff]
        %v496 = vld [vmem:[%s238] sm:$0xff]
        %v497 = vld [vmem:[%s238 + $0x8] sm:$0xff]
        %v498 = vld [vmem:[%s238 + $0x10] sm:$0xff]
        %v499 = vld [vmem:[%s238 + $0x18] sm:$0xff]
        %v500 = vld [vmem:[%s238 + $0x20] sm:$0xff]
        %v501 = vld [vmem:[%s238 + $0x28] sm:$0xff]
        %v502 = vld [vmem:[%s238 + $0x30] sm:$0xff]
        %v503 = vld [vmem:[%s238 + $0x38] sm:$0xff]
        %v504 = vld [vmem:[%s238 + $0x40] sm:$0xff]
        %v505 = vld [vmem:[%s238 + $0x48] sm:$0xff]
        %v506 = vld [vmem:[%s238 + $0x50] sm:$0xff]
        %v507 = vld [vmem:[%s238 + $0x58] sm:$0xff]
        %v508 = vld [vmem:[%s238 + $0x60] sm:$0xff]
        %v509 = vld [vmem:[%s238 + $0x68] sm:$0xff]
        %v510 = vld [vmem:[%s238 + $0x70] sm:$0xff]
        %v511 = vld [vmem:[%s238 + $0x78] sm:$0xff]
        %v512 = vld [vmem:[%s238 + $0x80] sm:$0xff]
        %v513 = vld [vmem:[%s238 + $0x88] sm:$0xff]
        %v514 = vld [vmem:[%s238 + $0x90] sm:$0xff]
        %v515 = vld [vmem:[%s238 + $0x98] sm:$0xff]
        %v516 = vld [vmem:[%s238 + $0xa0] sm:$0xff]
        %v517 = vld [vmem:[%s238 + $0xa8] sm:$0xff]
        %v518 = vld [vmem:[%s238 + $0xb0] sm:$0xff]
        %v519 = vld [vmem:[%s238 + $0xb8] sm:$0xff]
        %v520 = vld [vmem:[%s238 + $0xc0] sm:$0xff]
        %v521 = vld [vmem:[%s238 + $0xc8] sm:$0xff]
        %v522 = vld [vmem:[%s238 + $0xd0] sm:$0xff]
        %v523 = vld [vmem:[%s238 + $0xd8] sm:$0xff]
        %v524 = vld [vmem:[%s238 + $0xe0] sm:$0xff]
        %v525 = vld [vmem:[%s238 + $0xe8] sm:$0xff]
        %v526 = vld [vmem:[%s238 + $0xf0] sm:$0xff]
        %v527 = vld [vmem:[%s238 + $0xf8] sm:$0xff]
        %v528 = vld [vmem:[%s238 + $0x100] sm:$0xff]
        %v529 = vld [vmem:[%s238 + $0x108] sm:$0xff]
        %v530 = vld [vmem:[%s238 + $0x110] sm:$0xff]
        %v531 = vld [vmem:[%s238 + $0x118] sm:$0xff]
        %v532 = vld [vmem:[%s238 + $0x120] sm:$0xff]
        %v533 = vld [vmem:[%s238 + $0x128] sm:$0xff]
        %v534 = vld [vmem:[%s238 + $0x130] sm:$0xff]
        %v535 = vld [vmem:[%s238 + $0x138] sm:$0xff]
        %v536 = vld [vmem:[%s238 + $0x140] sm:$0xff]
        %v537 = vld [vmem:[%s238 + $0x148] sm:$0xff]
        %v538 = vld [vmem:[%s238 + $0x150] sm:$0xff]
        %v539 = vld [vmem:[%s238 + $0x158] sm:$0xff]
        %v540 = vld [vmem:[%s238 + $0x160] sm:$0xff]
        %v541 = vld [vmem:[%s238 + $0x168] sm:$0xff]
        %v542 = vld [vmem:[%s238 + $0x170] sm:$0xff]
        %v543 = vld [vmem:[%s238 + $0x178] sm:$0xff]
        %v544 = vld [vmem:[%s238 + $0x180] sm:$0xff]
        %v545 = vld [vmem:[%s238 + $0x188] sm:$0xff]
        %v546 = vld [vmem:[%s238 + $0x190] sm:$0xff]
        %v547 = vld [vmem:[%s238 + $0x198] sm:$0xff]
        %v548 = vld [vmem:[%s238 + $0x1a0] sm:$0xff]
        %v549 = vld [vmem:[%s238 + $0x1a8] sm:$0xff]
        %v550 = vld [vmem:[%s238 + $0x1b0] sm:$0xff]
        %v551 = vld [vmem:[%s238 + $0x1b8] sm:$0xff]
        %v552 = vld [vmem:[%s238 + $0x1c0] sm:$0xff]
        %v553 = vld [vmem:[%s238 + $0x1c8] sm:$0xff]
        %v554 = vld [vmem:[%s238 + $0x1d0] sm:$0xff]
        %v555 = vld [vmem:[%s238 + $0x1d8] sm:$0xff]
        %v556 = vld [vmem:[%s238 + $0x1e0] sm:$0xff]
        %v557 = vld [vmem:[%s238 + $0x1e8] sm:$0xff]
        %v558 = vld [vmem:[%s238 + $0x1f0] sm:$0xff]
        %v559 = vld [vmem:[%s238 + $0x1f8] sm:$0xff]
        %v560 = vld [vmem:[%s238 + $0x200] sm:$0xff]
        %v561 = vld [vmem:[%s238 + $0x208] sm:$0xff]
        %v562 = vld [vmem:[%s238 + $0x210] sm:$0xff]
        %v563 = vld [vmem:[%s238 + $0x218] sm:$0xff]
        %v564 = vld [vmem:[%s238 + $0x220] sm:$0xff]
        %v565 = vld [vmem:[%s238 + $0x228] sm:$0xff]
        %v566 = vld [vmem:[%s238 + $0x230] sm:$0xff]
        %v567 = vld [vmem:[%s238 + $0x238] sm:$0xff]
        %v568 = vld [vmem:[%s238 + $0x240] sm:$0xff]
        %v569 = vld [vmem:[%s238 + $0x248] sm:$0xff]
        %v570 = vld [vmem:[%s238 + $0x250] sm:$0xff]
        %v571 = vld [vmem:[%s238 + $0x258] sm:$0xff]
        %v572 = vld [vmem:[%s238 + $0x260] sm:$0xff]
        %v573 = vld [vmem:[%s238 + $0x268] sm:$0xff]
        %v574 = vld [vmem:[%s238 + $0x270] sm:$0xff]
        %v575 = vld [vmem:[%s238 + $0x278] sm:$0xff]
        %v576 = vld [vmem:[%s238 + $0x280] sm:$0xff]
        %v577 = vld [vmem:[%s238 + $0x288] sm:$0xff]
        %v578 = vld [vmem:[%s238 + $0x290] sm:$0xff]
        %v579 = vld [vmem:[%s238 + $0x298] sm:$0xff]
        %v580 = vld [vmem:[%s238 + $0x2a0] sm:$0xff]
        %v581 = vld [vmem:[%s238 + $0x2a8] sm:$0xff]
        %v582 = vld [vmem:[%s238 + $0x2b0] sm:$0xff]
        %v583 = vld [vmem:[%s238 + $0x2b8] sm:$0xff]
        %v584 = vld [vmem:[%s238 + $0x2c0] sm:$0xff]
        %v585 = vld [vmem:[%s238 + $0x2c8] sm:$0xff]
        %v586 = vld [vmem:[%s238 + $0x2d0] sm:$0xff]
        %v587 = vld [vmem:[%s238 + $0x2d8] sm:$0xff]
        %v588 = vld [vmem:[%s238 + $0x2e0] sm:$0xff]
        %v589 = vld [vmem:[%s238 + $0x2e8] sm:$0xff]
        %v590 = vld [vmem:[%s238 + $0x2f0] sm:$0xff]
        %v591 = vld [vmem:[%s238 + $0x2f8] sm:$0xff]
        %v592 = vld [vmem:[%s238 + $0x300] sm:$0xff]
        %v593 = vld [vmem:[%s238 + $0x308] sm:$0xff]
        %v594 = vld [vmem:[%s238 + $0x310] sm:$0xff]
        %v595 = vld [vmem:[%s238 + $0x318] sm:$0xff]
        %v596 = vld [vmem:[%s238 + $0x320] sm:$0xff]
        %v597 = vld [vmem:[%s238 + $0x328] sm:$0xff]
        %v598 = vld [vmem:[%s238 + $0x330] sm:$0xff]
        %v599 = vld [vmem:[%s238 + $0x338] sm:$0xff]
        %v600 = vld [vmem:[%s238 + $0x340] sm:$0xff]
        %v601 = vld [vmem:[%s238 + $0x348] sm:$0xff]
        %v602 = vld [vmem:[%s238 + $0x350] sm:$0xff]
        %v603 = vld [vmem:[%s238 + $0x358] sm:$0xff]
        %v604 = vld [vmem:[%s238 + $0x360] sm:$0xff]
        %v605 = vld [vmem:[%s238 + $0x368] sm:$0xff]
        %v606 = vld [vmem:[%s238 + $0x370] sm:$0xff]
        %v607 = vld [vmem:[%s238 + $0x378] sm:$0xff]
        %v608 = vld [vmem:[%s238 + $0x380] sm:$0xff]
        %v609 = vld [vmem:[%s238 + $0x388] sm:$0xff]
        %v610 = vld [vmem:[%s238 + $0x390] sm:$0xff]
        %v611 = vld [vmem:[%s238 + $0x398] sm:$0xff]
        %v612 = vld [vmem:[%s238 + $0x3a0] sm:$0xff]
        %v613 = vld [vmem:[%s238 + $0x3a8] sm:$0xff]
        %v614 = vld [vmem:[%s238 + $0x3b0] sm:$0xff]
        %v615 = vld [vmem:[%s238 + $0x3b8] sm:$0xff]
        %v616 = vld [vmem:[%s238 + $0x3c0] sm:$0xff]
        %v617 = vld [vmem:[%s238 + $0x3c8] sm:$0xff]
        %v618 = vld [vmem:[%s238 + $0x3d0] sm:$0xff]
        %v619 = vld [vmem:[%s238 + $0x3d8] sm:$0xff]
        %v620 = vld [vmem:[%s238 + $0x3e0] sm:$0xff]
        %v621 = vld [vmem:[%s238 + $0x3e8] sm:$0xff]
        %v622 = vld [vmem:[%s238 + $0x3f0] sm:$0xff]
        %v623 = vld [vmem:[%s238 + $0x3f8] sm:$0xff]
        %vm624 = vcmask 261120
        %v626 = vsel %vm624, %v240, 0
        %v629 = vsel %vm624, %v241, 0
        %v632 = vsel %vm624, %v242, 0
        %v635 = vsel %vm624, %v243, 0
        %v638 = vsel %vm624, %v244, 0
        %v641 = vsel %vm624, %v245, 0
        %v644 = vsel %vm624, %v246, 0
        %v647 = vsel %vm624, %v247, 0
        %v650 = vsel %vm624, %v248, 0
        %v653 = vsel %vm624, %v249, 0
        %v656 = vsel %vm624, %v250, 0
        %v659 = vsel %vm624, %v251, 0
        %v662 = vsel %vm624, %v252, 0
        %v665 = vsel %vm624, %v253, 0
        %v668 = vsel %vm624, %v254, 0
        %v671 = vsel %vm624, %v255, 0
        %v674 = vsel %vm624, %v256, 0
        %v677 = vsel %vm624, %v257, 0
        %v680 = vsel %vm624, %v258, 0
        %v683 = vsel %vm624, %v259, 0
        %v686 = vsel %vm624, %v260, 0
        %v689 = vsel %vm624, %v261, 0
        %v692 = vsel %vm624, %v262, 0
        %v695 = vsel %vm624, %v263, 0
        %v698 = vsel %vm624, %v264, 0
        %v701 = vsel %vm624, %v265, 0
        %v704 = vsel %vm624, %v266, 0
        %v707 = vsel %vm624, %v267, 0
        %v710 = vsel %vm624, %v268, 0
        %v713 = vsel %vm624, %v269, 0
        %v716 = vsel %vm624, %v270, 0
        %v719 = vsel %vm624, %v271, 0
        %v722 = vsel %vm624, %v368, 0
        %v725 = vsel %vm624, %v369, 0
        %v728 = vsel %vm624, %v370, 0
        %v731 = vsel %vm624, %v371, 0
        %v734 = vsel %vm624, %v372, 0
        %v737 = vsel %vm624, %v373, 0
        %v740 = vsel %vm624, %v374, 0
        %v743 = vsel %vm624, %v375, 0
        %v746 = vsel %vm624, %v376, 0
        %v749 = vsel %vm624, %v377, 0
        %v752 = vsel %vm624, %v378, 0
        %v755 = vsel %vm624, %v379, 0
        %v758 = vsel %vm624, %v380, 0
        %v761 = vsel %vm624, %v381, 0
        %v764 = vsel %vm624, %v382, 0
        %v767 = vsel %vm624, %v383, 0
        %v770 = vsel %vm624, %v384, 0
        %v773 = vsel %vm624, %v385, 0
        %v776 = vsel %vm624, %v386, 0
        %v779 = vsel %vm624, %v387, 0
        %v782 = vsel %vm624, %v388, 0
        %v785 = vsel %vm624, %v389, 0
        %v788 = vsel %vm624, %v390, 0
        %v791 = vsel %vm624, %v391, 0
        %v794 = vsel %vm624, %v392, 0
        %v797 = vsel %vm624, %v393, 0
        %v800 = vsel %vm624, %v394, 0
        %v803 = vsel %vm624, %v395, 0
        %v806 = vsel %vm624, %v396, 0
        %v809 = vsel %vm624, %v397, 0
        %v812 = vsel %vm624, %v398, 0
        %v815 = vsel %vm624, %v399, 0
        %817 = vmatprep.subr.mxu0 0.0
        %818 = vmatpush1.xpose.msra.mxu0 %v722
        %819 = vmatprep.subr.mxu0 0.0
        %820 = vmatpush1.xpose.msra.mxu0 %v725
        %821 = vmatprep.subr.mxu0 0.0
        %822 = vmatpush1.xpose.msra.mxu0 %v728
        %823 = vmatprep.subr.mxu0 0.0
        %824 = vmatpush1.xpose.msra.mxu0 %v731
        %825 = vmatprep.subr.mxu0 0.0
        %826 = vmatpush1.xpose.msra.mxu0 %v734
        %827 = vmatprep.subr.mxu0 0.0
        %828 = vmatpush1.xpose.msra.mxu0 %v737
        %829 = vmatprep.subr.mxu0 0.0
        %830 = vmatpush1.xpose.msra.mxu0 %v740
        %831 = vmatprep.subr.mxu0 0.0
        %832 = vmatpush1.xpose.msra.mxu0 %v743
        %833 = vmatprep.subr.mxu0 0.0
        %834 = vmatpush1.xpose.msra.mxu0 %v746
        %835 = vmatprep.subr.mxu0 0.0
        %836 = vmatpush1.xpose.msra.mxu0 %v749
        %837 = vmatprep.subr.mxu0 0.0
        %838 = vmatpush1.xpose.msra.mxu0 %v752
        %839 = vmatprep.subr.mxu0 0.0
        %840 = vmatpush1.xpose.msra.mxu0 %v755
        %841 = vmatprep.subr.mxu0 0.0
        %842 = vmatpush1.xpose.msra.mxu0 %v758
        %843 = vmatprep.subr.mxu0 0.0
        %844 = vmatpush1.xpose.msra.mxu0 %v761
        %845 = vmatprep.subr.mxu0 0.0
        %846 = vmatpush1.xpose.msra.mxu0 %v764
        %847 = vmatprep.subr.mxu0 0.0
        %848 = vmatpush1.xpose.msra.mxu0 %v767
        %849 = vmatprep.subr.mxu0 0.0
        %850 = vmatpush1.xpose.msra.mxu0 %v770
        %851 = vmatprep.subr.mxu0 0.0
        %852 = vmatpush1.xpose.msra.mxu0 %v773
        %853 = vmatprep.subr.mxu0 0.0
        %854 = vmatpush1.xpose.msra.mxu0 %v776
        %855 = vmatprep.subr.mxu0 0.0
        %856 = vmatpush1.xpose.msra.mxu0 %v779
        %857 = vmatprep.subr.mxu0 0.0
        %858 = vmatpush1.xpose.msra.mxu0 %v782
        %859 = vmatprep.subr.mxu0 0.0
        %860 = vmatpush1.xpose.msra.mxu0 %v785
        %861 = vmatprep.subr.mxu0 0.0
        %862 = vmatpush1.xpose.msra.mxu0 %v788
        %863 = vmatprep.subr.mxu0 0.0
        %864 = vmatpush1.xpose.msra.mxu0 %v791
        %865 = vmatprep.subr.mxu0 0.0
        %866 = vmatpush1.xpose.msra.mxu0 %v794
        %867 = vmatprep.subr.mxu0 0.0
        %868 = vmatpush1.xpose.msra.mxu0 %v797
        %869 = vmatprep.subr.mxu0 0.0
        %870 = vmatpush1.xpose.msra.mxu0 %v800
        %871 = vmatprep.subr.mxu0 0.0
        %872 = vmatpush1.xpose.msra.mxu0 %v803
        %873 = vmatprep.subr.mxu0 0.0
        %874 = vmatpush1.xpose.msra.mxu0 %v806
        %875 = vmatprep.subr.mxu0 0.0
        %876 = vmatpush1.xpose.msra.mxu0 %v809
        %877 = vmatprep.subr.mxu0 0.0
        %878 = vmatpush1.xpose.msra.mxu0 %v812
        %879 = vmatprep.subr.mxu0 0.0
        %880 = vmatpush1.xpose.msra.mxu0 %v815
        %881 = vmatprep.mubr.f32.mxu0 0.0
        %882 = vmatmul.mubr.f32.gmra.mrb[0].mxu0 %v626
        %v883 = vpop.f32.mrb[0].mxu0
        %v884 = vadd.f32 0.0, %v883
        %v885 = vpop.f32.mrb[0].mxu0
        %v886 = vadd.f32 0.0, %v885
        %887 = vmatprep.mubr.f32.mxu0 0.0
        %888 = vmatmul.mubr.f32.gmra.mrb[0].mxu0 %v629
        %v889 = vpop.f32.mrb[0].mxu0
        %v890 = vadd.f32 0.0, %v889
        %v891 = vpop.f32.mrb[0].mxu0
        %v892 = vadd.f32 0.0, %v891
        %893 = vmatprep.mubr.f32.mxu0 0.0
        %894 = vmatmul.mubr.f32.gmra.mrb[0].mxu0 %v632
        %v895 = vpop.f32.mrb[0].mxu0
        %v896 = vadd.f32 0.0, %v895
        %v897 = vpop.f32.mrb[0].mxu0
        %v898 = vadd.f32 0.0, %v897
        %899 = vmatprep.mubr.f32.mxu0 0.0
        %900 = vmatmul.mubr.f32.gmra.mrb[0].mxu0 %v635
        %v901 = vpop.f32.mrb[0].mxu0
        %v902 = vadd.f32 0.0, %v901
        %v903 = vpop.f32.mrb[0].mxu0
        %v904 = vadd.f32 0.0, %v903
        %905 = vmatprep.mubr.f32.mxu0 0.0
        %906 = vmatmul.mubr.f32.gmra.mrb[0].mxu0 %v638
        %v907 = vpop.f32.mrb[0].mxu0
        %v908 = vadd.f32 0.0, %v907
        %v909 = vpop.f32.mrb[0].mxu0
        %v910 = vadd.f32 0.0, %v909
        %911 = vmatprep.mubr.f32.mxu0 0.0
        %912 = vmatmul.mubr.f32.gmra.mrb[0].mxu0 %v641
        %v913 = vpop.f32.mrb[0].mxu0
        %v914 = vadd.f32 0.0, %v913
        %v915 = vpop.f32.mrb[0].mxu0
        %v916 = vadd.f32 0.0, %v915
        %917 = vmatprep.mubr.f32.mxu0 0.0
        %918 = vmatmul.mubr.f32.gmra.mrb[0].mxu0 %v644
        %v919 = vpop.f32.mrb[0].mxu0
        %v920 = vadd.f32 0.0, %v919
        %v921 = vpop.f32.mrb[0].mxu0
        %v922 = vadd.f32 0.0, %v921
        %923 = vmatprep.mubr.f32.mxu0 0.0
        %924 = vmatmul.mubr.f32.gmra.mrb[0].mxu0 %v647
        %v925 = vpop.f32.mrb[0].mxu0
        %v926 = vadd.f32 0.0, %v925
        %v927 = vpop.f32.mrb[0].mxu0
        %v928 = vadd.f32 0.0, %v927
        %929 = vmatprep.mubr.f32.mxu0 0.0
        %930 = vmatmul.mubr.f32.gmra.mrb[0].mxu0 %v650
        %v931 = vpop.f32.mrb[0].mxu0
        %v932 = vadd.f32 0.0, %v931
        %v933 = vpop.f32.mrb[0].mxu0
        %v934 = vadd.f32 0.0, %v933
        %935 = vmatprep.mubr.f32.mxu0 0.0
        %936 = vmatmul.mubr.f32.gmra.mrb[0].mxu0 %v653
        %v937 = vpop.f32.mrb[0].mxu0
        %v938 = vadd.f32 0.0, %v937
        %v939 = vpop.f32.mrb[0].mxu0
        %v940 = vadd.f32 0.0, %v939
        %941 = vmatprep.mubr.f32.mxu0 0.0
        %942 = vmatmul.mubr.f32.gmra.mrb[0].mxu0 %v656
        %v943 = vpop.f32.mrb[0].mxu0
        %v944 = vadd.f32 0.0, %v943
        %v945 = vpop.f32.mrb[0].mxu0
        %v946 = vadd.f32 0.0, %v945
        %947 = vmatprep.mubr.f32.mxu0 0.0
        %948 = vmatmul.mubr.f32.gmra.mrb[0].mxu0 %v659
        %v949 = vpop.f32.mrb[0].mxu0
        %v950 = vadd.f32 0.0, %v949
        %v951 = vpop.f32.mrb[0].mxu0
        %v952 = vadd.f32 0.0, %v951
        %953 = vmatprep.mubr.f32.mxu0 0.0
        %954 = vmatmul.mubr.f32.gmra.mrb[0].mxu0 %v662
        %v955 = vpop.f32.mrb[0].mxu0
        %v956 = vadd.f32 0.0, %v955
        %v957 = vpop.f32.mrb[0].mxu0
        %v958 = vadd.f32 0.0, %v957
        %959 = vmatprep.mubr.f32.mxu0 0.0
        %960 = vmatmul.mubr.f32.gmra.mrb[0].mxu0 %v665
        %v961 = vpop.f32.mrb[0].mxu0
        %v962 = vadd.f32 0.0, %v961
        %v963 = vpop.f32.mrb[0].mxu0
        %v964 = vadd.f32 0.0, %v963
        %965 = vmatprep.mubr.f32.mxu0 0.0
        %966 = vmatmul.mubr.f32.gmra.mrb[0].mxu0 %v668
        %v967 = vpop.f32.mrb[0].mxu0
        %v968 = vadd.f32 0.0, %v967
        %v969 = vpop.f32.mrb[0].mxu0
        %v970 = vadd.f32 0.0, %v969
        %971 = vmatprep.mubr.f32.mxu0 0.0
        %972 = vmatmul.mubr.f32.gmra.mrb[0].mxu0 %v671
        %v973 = vpop.f32.mrb[0].mxu0
        %v974 = vadd.f32 0.0, %v973
        %v975 = vpop.f32.mrb[0].mxu0
        %v976 = vadd.f32 0.0, %v975
        %977 = vmatprep.mubr.f32.mxu0 0.0
        %978 = vmatmul.mubr.f32.gmra.mrb[0].mxu0 %v674
        %v979 = vpop.f32.mrb[0].mxu0
        %v980 = vadd.f32 0.0, %v979
        %v981 = vpop.f32.mrb[0].mxu0
        %v982 = vadd.f32 0.0, %v981
        %983 = vmatprep.mubr.f32.mxu0 0.0
        %984 = vmatmul.mubr.f32.gmra.mrb[0].mxu0 %v677
        %v985 = vpop.f32.mrb[0].mxu0
        %v986 = vadd.f32 0.0, %v985
        %v987 = vpop.f32.mrb[0].mxu0
        %v988 = vadd.f32 0.0, %v987
        %989 = vmatprep.mubr.f32.mxu0 0.0
        %990 = vmatmul.mubr.f32.gmra.mrb[0].mxu0 %v680
        %v991 = vpop.f32.mrb[0].mxu0
        %v992 = vadd.f32 0.0, %v991
        %v993 = vpop.f32.mrb[0].mxu0
        %v994 = vadd.f32 0.0, %v993
        %995 = vmatprep.mubr.f32.mxu0 0.0
        %996 = vmatmul.mubr.f32.gmra.mrb[0].mxu0 %v683
        %v997 = vpop.f32.mrb[0].mxu0
        %v998 = vadd.f32 0.0, %v997
        %v999 = vpop.f32.mrb[0].mxu0
        %v1000 = vadd.f32 0.0, %v999
        %1001 = vmatprep.mubr.f32.mxu0 0.0
        %1002 = vmatmul.mubr.f32.gmra.mrb[0].mxu0 %v686
        %v1003 = vpop.f32.mrb[0].mxu0
        %v1004 = vadd.f32 0.0, %v1003
        %v1005 = vpop.f32.mrb[0].mxu0
        %v1006 = vadd.f32 0.0, %v1005
        %1007 = vmatprep.mubr.f32.mxu0 0.0
        %1008 = vmatmul.mubr.f32.gmra.mrb[0].mxu0 %v689
        %v1009 = vpop.f32.mrb[0].mxu0
        %v1010 = vadd.f32 0.0, %v1009
        %v1011 = vpop.f32.mrb[0].mxu0
        %v1012 = vadd.f32 0.0, %v1011
        %1013 = vmatprep.mubr.f32.mxu0 0.0
        %1014 = vmatmul.mubr.f32.gmra.mrb[0].mxu0 %v692
        %v1015 = vpop.f32.mrb[0].mxu0
        %v1016 = vadd.f32 0.0, %v1015
        %v1017 = vpop.f32.mrb[0].mxu0
        %v1018 = vadd.f32 0.0, %v1017
        %1019 = vmatprep.mubr.f32.mxu0 0.0
        %1020 = vmatmul.mubr.f32.gmra.mrb[0].mxu0 %v695
        %v1021 = vpop.f32.mrb[0].mxu0
        %v1022 = vadd.f32 0.0, %v1021
        %v1023 = vpop.f32.mrb[0].mxu0
        %v1024 = vadd.f32 0.0, %v1023
        %1025 = vmatprep.mubr.f32.mxu0 0.0
        %1026 = vmatmul.mubr.f32.gmra.mrb[0].mxu0 %v698
        %v1027 = vpop.f32.mrb[0].mxu0
        %v1028 = vadd.f32 0.0, %v1027
        %v1029 = vpop.f32.mrb[0].mxu0
        %v1030 = vadd.f32 0.0, %v1029
        %1031 = vmatprep.mubr.f32.mxu0 0.0
        %1032 = vmatmul.mubr.f32.gmra.mrb[0].mxu0 %v701
        %v1033 = vpop.f32.mrb[0].mxu0
        %v1034 = vadd.f32 0.0, %v1033
        %v1035 = vpop.f32.mrb[0].mxu0
        %v1036 = vadd.f32 0.0, %v1035
        %1037 = vmatprep.mubr.f32.mxu0 0.0
        %1038 = vmatmul.mubr.f32.gmra.mrb[0].mxu0 %v704
        %v1039 = vpop.f32.mrb[0].mxu0
        %v1040 = vadd.f32 0.0, %v1039
        %v1041 = vpop.f32.mrb[0].mxu0
        %v1042 = vadd.f32 0.0, %v1041
        %1043 = vmatprep.mubr.f32.mxu0 0.0
        %1044 = vmatmul.mubr.f32.gmra.mrb[0].mxu0 %v707
        %v1045 = vpop.f32.mrb[0].mxu0
        %v1046 = vadd.f32 0.0, %v1045
        %v1047 = vpop.f32.mrb[0].mxu0
        %v1048 = vadd.f32 0.0, %v1047
        %1049 = vmatprep.mubr.f32.mxu0 0.0
        %1050 = vmatmul.mubr.f32.gmra.mrb[0].mxu0 %v710
        %v1051 = vpop.f32.mrb[0].mxu0
        %v1052 = vadd.f32 0.0, %v1051
        %v1053 = vpop.f32.mrb[0].mxu0
        %v1054 = vadd.f32 0.0, %v1053
        %1055 = vmatprep.mubr.f32.mxu0 0.0
        %1056 = vmatmul.mubr.f32.gmra.mrb[0].mxu0 %v713
        %v1057 = vpop.f32.mrb[0].mxu0
        %v1058 = vadd.f32 0.0, %v1057
        %v1059 = vpop.f32.mrb[0].mxu0
        %v1060 = vadd.f32 0.0, %v1059
        %1061 = vmatprep.mubr.f32.mxu0 0.0
        %1062 = vmatmul.mubr.f32.gmra.mrb[0].mxu0 %v716
        %v1063 = vpop.f32.mrb[0].mxu0
        %v1064 = vadd.f32 0.0, %v1063
        %v1065 = vpop.f32.mrb[0].mxu0
        %v1066 = vadd.f32 0.0, %v1065
        %1067 = vmatprep.mubr.f32.mxu0 0.0
        %1068 = vmatmul.mubr.f32.gmra.mrb[0].mxu0 %v719
        %v1069 = vpop.f32.mrb[0].mxu0
        %v1070 = vadd.f32 0.0, %v1069
        %v1071 = vpop.f32.mrb[0].mxu0
        %v1072 = vadd.f32 0.0, %v1071
        %1073 = vdwg.mxu0
        %v1075 = vsel %vm624, %v272, 0
        %v1078 = vsel %vm624, %v273, 0
        %v1081 = vsel %vm624, %v274, 0
        %v1084 = vsel %vm624, %v275, 0
        %v1087 = vsel %vm624, %v276, 0
        %v1090 = vsel %vm624, %v277, 0
        %v1093 = vsel %vm624, %v278, 0
        %v1096 = vsel %vm624, %v279, 0
        %v1099 = vsel %vm624, %v280, 0
        %v1102 = vsel %vm624, %v281, 0
        %v1105 = vsel %vm624, %v282, 0
        %v1108 = vsel %vm624, %v283, 0
        %v1111 = vsel %vm624, %v284, 0
        %v1114 = vsel %vm624, %v285, 0
        %v1117 = vsel %vm624, %v286, 0
        %v1120 = vsel %vm624, %v287, 0
        %v1123 = vsel %vm624, %v288, 0
        %v1126 = vsel %vm624, %v289, 0
        %v1129 = vsel %vm624, %v290, 0
        %v1132 = vsel %vm624, %v291, 0
        %v1135 = vsel %vm624, %v292, 0
        %v1138 = vsel %vm624, %v293, 0
        %v1141 = vsel %vm624, %v294, 0
        %v1144 = vsel %vm624, %v295, 0
        %v1147 = vsel %vm624, %v296, 0
        %v1150 = vsel %vm624, %v297, 0
        %v1153 = vsel %vm624, %v298, 0
        %v1156 = vsel %vm624, %v299, 0
        %v1159 = vsel %vm624, %v300, 0
        %v1162 = vsel %vm624, %v301, 0
        %v1165 = vsel %vm624, %v302, 0
        %v1168 = vsel %vm624, %v303, 0
        %v1171 = vsel %vm624, %v400, 0
        %v1174 = vsel %vm624, %v401, 0
        %v1177 = vsel %vm624, %v402, 0
        %v1180 = vsel %vm624, %v403, 0
        %v1183 = vsel %vm624, %v404, 0
        %v1186 = vsel %vm624, %v405, 0
        %v1189 = vsel %vm624, %v406, 0
        %v1192 = vsel %vm624, %v407, 0
        %v1195 = vsel %vm624, %v408, 0
        %v1198 = vsel %vm624, %v409, 0
        %v1201 = vsel %vm624, %v410, 0
        %v1204 = vsel %vm624, %v411, 0
        %v1207 = vsel %vm624, %v412, 0
        %v1210 = vsel %vm624, %v413, 0
        %v1213 = vsel %vm624, %v414, 0
        %v1216 = vsel %vm624, %v415, 0
        %v1219 = vsel %vm624, %v416, 0
        %v1222 = vsel %vm624, %v417, 0
        %v1225 = vsel %vm624, %v418, 0
        %v1228 = vsel %vm624, %v419, 0
        %v1231 = vsel %vm624, %v420, 0
        %v1234 = vsel %vm624, %v421, 0
        %v1237 = vsel %vm624, %v422, 0
        %v1240 = vsel %vm624, %v423, 0
        %v1243 = vsel %vm624, %v424, 0
        %v1246 = vsel %vm624, %v425, 0
        %v1249 = vsel %vm624, %v426, 0
        %v1252 = vsel %vm624, %v427, 0
        %v1255 = vsel %vm624, %v428, 0
        %v1258 = vsel %vm624, %v429, 0
        %v1261 = vsel %vm624, %v430, 0
        %v1264 = vsel %vm624, %v431, 0
        %1266 = vmatprep.subr.mxu0 0.0
        %1267 = vmatpush1.xpose.msra.mxu0 %v1171
        %1268 = vmatprep.subr.mxu0 0.0
        %1269 = vmatpush1.xpose.msra.mxu0 %v1174
        %1270 = vmatprep.subr.mxu0 0.0
        %1271 = vmatpush1.xpose.msra.mxu0 %v1177
        %1272 = vmatprep.subr.mxu0 0.0
        %1273 = vmatpush1.xpose.msra.mxu0 %v1180
        %1274 = vmatprep.subr.mxu0 0.0
        %1275 = vmatpush1.xpose.msra.mxu0 %v1183
        %1276 = vmatprep.subr.mxu0 0.0
        %1277 = vmatpush1.xpose.msra.mxu0 %v1186
        %1278 = vmatprep.subr.mxu0 0.0
        %1279 = vmatpush1.xpose.msra.mxu0 %v1189
        %1280 = vmatprep.subr.mxu0 0.0
        %1281 = vmatpush1.xpose.msra.mxu0 %v1192
        %1282 = vmatprep.subr.mxu0 0.0
        %1283 = vmatpush1.xpose.msra.mxu0 %v1195
        %1284 = vmatprep.subr.mxu0 0.0
        %1285 = vmatpush1.xpose.msra.mxu0 %v1198
        %1286 = vmatprep.subr.mxu0 0.0
        %1287 = vmatpush1.xpose.msra.mxu0 %v1201
        %1288 = vmatprep.subr.mxu0 0.0
        %1289 = vmatpush1.xpose.msra.mxu0 %v1204
        %1290 = vmatprep.subr.mxu0 0.0
        %1291 = vmatpush1.xpose.msra.mxu0 %v1207
        %1292 = vmatprep.subr.mxu0 0.0
        %1293 = vmatpush1.xpose.msra.mxu0 %v1210
        %1294 = vmatprep.subr.mxu0 0.0
        %1295 = vmatpush1.xpose.msra.mxu0 %v1213
        %1296 = vmatprep.subr.mxu0 0.0
        %1297 = vmatpush1.xpose.msra.mxu0 %v1216
        %1298 = vmatprep.subr.mxu0 0.0
        %1299 = vmatpush1.xpose.msra.mxu0 %v1219
        %1300 = vmatprep.subr.mxu0 0.0
        %1301 = vmatpush1.xpose.msra.mxu0 %v1222
        %1302 = vmatprep.subr.mxu0 0.0
        %1303 = vmatpush1.xpose.msra.mxu0 %v1225
        %1304 = vmatprep.subr.mxu0 0.0
        %1305 = vmatpush1.xpose.msra.mxu0 %v1228
        %1306 = vmatprep.subr.mxu0 0.0
        %1307 = vmatpush1.xpose.msra.mxu0 %v1231
        %1308 = vmatprep.subr.mxu0 0.0
        %1309 = vmatpush1.xpose.msra.mxu0 %v1234
        %1310 = vmatprep.subr.mxu0 0.0
        %1311 = vmatpush1.xpose.msra.mxu0 %v1237
        %1312 = vmatprep.subr.mxu0 0.0
        %1313 = vmatpush1.xpose.msra.mxu0 %v1240
        %1314 = vmatprep.subr.mxu0 0.0
        %1315 = vmatpush1.xpose.msra.mxu0 %v1243
        %1316 = vmatprep.subr.mxu0 0.0
        %1317 = vmatpush1.xpose.msra.mxu0 %v1246
        %1318 = vmatprep.subr.mxu0 0.0
        %1319 = vmatpush1.xpose.msra.mxu0 %v1249
        %1320 = vmatprep.subr.mxu0 0.0
        %1321 = vmatpush1.xpose.msra.mxu0 %v1252
        %1322 = vmatprep.subr.mxu0 0.0
        %1323 = vmatpush1.xpose.msra.mxu0 %v1255
        %1324 = vmatprep.subr.mxu0 0.0
        %1325 = vmatpush1.xpose.msra.mxu0 %v1258
        %1326 = vmatprep.subr.mxu0 0.0
        %1327 = vmatpush1.xpose.msra.mxu0 %v1261
        %1328 = vmatprep.subr.mxu0 0.0
        %1329 = vmatpush1.xpose.msra.mxu0 %v1264
        %1330 = vmatprep.mubr.f32.mxu0 0.0
        %1331 = vmatmul.mubr.f32.gmra.mrb[0].mxu0 %v1075
        %v1332 = vpop.f32.mrb[0].mxu0
        %v1333 = vadd.f32 0.0, %v1332
        %v1334 = vpop.f32.mrb[0].mxu0
        %v1335 = vadd.f32 0.0, %v1334
        %1336 = vmatprep.mubr.f32.mxu0 0.0
        %1337 = vmatmul.mubr.f32.gmra.mrb[0].mxu0 %v1078
        %v1338 = vpop.f32.mrb[0].mxu0
        %v1339 = vadd.f32 0.0, %v1338
        %v1340 = vpop.f32.mrb[0].mxu0
        %v1341 = vadd.f32 0.0, %v1340
        %1342 = vmatprep.mubr.f32.mxu0 0.0
        %1343 = vmatmul.mubr.f32.gmra.mrb[0].mxu0 %v1081
        %v1344 = vpop.f32.mrb[0].mxu0
        %v1345 = vadd.f32 0.0, %v1344
        %v1346 = vpop.f32.mrb[0].mxu0
        %v1347 = vadd.f32 0.0, %v1346
        %1348 = vmatprep.mubr.f32.mxu0 0.0
        %1349 = vmatmul.mubr.f32.gmra.mrb[0].mxu0 %v1084
        %v1350 = vpop.f32.mrb[0].mxu0
        %v1351 = vadd.f32 0.0, %v1350
        %v1352 = vpop.f32.mrb[0].mxu0
        %v1353 = vadd.f32 0.0, %v1352
        %1354 = vmatprep.mubr.f32.mxu0 0.0
        %1355 = vmatmul.mubr.f32.gmra.mrb[0].mxu0 %v1087
        %v1356 = vpop.f32.mrb[0].mxu0
        %v1357 = vadd.f32 0.0, %v1356
        %v1358 = vpop.f32.mrb[0].mxu0
        %v1359 = vadd.f32 0.0, %v1358
        %1360 = vmatprep.mubr.f32.mxu0 0.0
        %1361 = vmatmul.mubr.f32.gmra.mrb[0].mxu0 %v1090
        %v1362 = vpop.f32.mrb[0].mxu0
        %v1363 = vadd.f32 0.0, %v1362
        %v1364 = vpop.f32.mrb[0].mxu0
        %v1365 = vadd.f32 0.0, %v1364
        %1366 = vmatprep.mubr.f32.mxu0 0.0
        %1367 = vmatmul.mubr.f32.gmra.mrb[0].mxu0 %v1093
        %v1368 = vpop.f32.mrb[0].mxu0
        %v1369 = vadd.f32 0.0, %v1368
        %v1370 = vpop.f32.mrb[0].mxu0
        %v1371 = vadd.f32 0.0, %v1370
        %1372 = vmatprep.mubr.f32.mxu0 0.0
        %1373 = vmatmul.mubr.f32.gmra.mrb[0].mxu0 %v1096
        %v1374 = vpop.f32.mrb[0].mxu0
        %v1375 = vadd.f32 0.0, %v1374
        %v1376 = vpop.f32.mrb[0].mxu0
        %v1377 = vadd.f32 0.0, %v1376
        %1378 = vmatprep.mubr.f32.mxu0 0.0
        %1379 = vmatmul.mubr.f32.gmra.mrb[0].mxu0 %v1099
        %v1380 = vpop.f32.mrb[0].mxu0
        %v1381 = vadd.f32 0.0, %v1380
        %v1382 = vpop.f32.mrb[0].mxu0
        %v1383 = vadd.f32 0.0, %v1382
        %1384 = vmatprep.mubr.f32.mxu0 0.0
        %1385 = vmatmul.mubr.f32.gmra.mrb[0].mxu0 %v1102
        %v1386 = vpop.f32.mrb[0].mxu0
        %v1387 = vadd.f32 0.0, %v1386
        %v1388 = vpop.f32.mrb[0].mxu0
        %v1389 = vadd.f32 0.0, %v1388
        %1390 = vmatprep.mubr.f32.mxu0 0.0
        %1391 = vmatmul.mubr.f32.gmra.mrb[0].mxu0 %v1105
        %v1392 = vpop.f32.mrb[0].mxu0
        %v1393 = vadd.f32 0.0, %v1392
        %v1394 = vpop.f32.mrb[0].mxu0
        %v1395 = vadd.f32 0.0, %v1394
        %1396 = vmatprep.mubr.f32.mxu0 0.0
        %1397 = vmatmul.mubr.f32.gmra.mrb[0].mxu0 %v1108
        %v1398 = vpop.f32.mrb[0].mxu0
        %v1399 = vadd.f32 0.0, %v1398
        %v1400 = vpop.f32.mrb[0].mxu0
        %v1401 = vadd.f32 0.0, %v1400
        %1402 = vmatprep.mubr.f32.mxu0 0.0
        %1403 = vmatmul.mubr.f32.gmra.mrb[0].mxu0 %v1111
        %v1404 = vpop.f32.mrb[0].mxu0
        %v1405 = vadd.f32 0.0, %v1404
        %v1406 = vpop.f32.mrb[0].mxu0
        %v1407 = vadd.f32 0.0, %v1406
        %1408 = vmatprep.mubr.f32.mxu0 0.0
        %1409 = vmatmul.mubr.f32.gmra.mrb[0].mxu0 %v1114
        %v1410 = vpop.f32.mrb[0].mxu0
        %v1411 = vadd.f32 0.0, %v1410
        %v1412 = vpop.f32.mrb[0].mxu0
        %v1413 = vadd.f32 0.0, %v1412
        %1414 = vmatprep.mubr.f32.mxu0 0.0
        %1415 = vmatmul.mubr.f32.gmra.mrb[0].mxu0 %v1117
        %v1416 = vpop.f32.mrb[0].mxu0
        %v1417 = vadd.f32 0.0, %v1416
        %v1418 = vpop.f32.mrb[0].mxu0
        %v1419 = vadd.f32 0.0, %v1418
        %1420 = vmatprep.mubr.f32.mxu0 0.0
        %1421 = vmatmul.mubr.f32.gmra.mrb[0].mxu0 %v1120
        %v1422 = vpop.f32.mrb[0].mxu0
        %v1423 = vadd.f32 0.0, %v1422
        %v1424 = vpop.f32.mrb[0].mxu0
        %v1425 = vadd.f32 0.0, %v1424
        %1426 = vmatprep.mubr.f32.mxu0 0.0
        %1427 = vmatmul.mubr.f32.gmra.mrb[0].mxu0 %v1123
        %v1428 = vpop.f32.mrb[0].mxu0
        %v1429 = vadd.f32 0.0, %v1428
        %v1430 = vpop.f32.mrb[0].mxu0
        %v1431 = vadd.f32 0.0, %v1430
        %1432 = vmatprep.mubr.f32.mxu0 0.0
        %1433 = vmatmul.mubr.f32.gmra.mrb[0].mxu0 %v1126
        %v1434 = vpop.f32.mrb[0].mxu0
        %v1435 = vadd.f32 0.0, %v1434
        %v1436 = vpop.f32.mrb[0].mxu0
        %v1437 = vadd.f32 0.0, %v1436
        %1438 = vmatprep.mubr.f32.mxu0 0.0
        %1439 = vmatmul.mubr.f32.gmra.mrb[0].mxu0 %v1129
        %v1440 = vpop.f32.mrb[0].mxu0
        %v1441 = vadd.f32 0.0, %v1440
        %v1442 = vpop.f32.mrb[0].mxu0
        %v1443 = vadd.f32 0.0, %v1442
        %1444 = vmatprep.mubr.f32.mxu0 0.0
        %1445 = vmatmul.mubr.f32.gmra.mrb[0].mxu0 %v1132
        %v1446 = vpop.f32.mrb[0].mxu0
        %v1447 = vadd.f32 0.0, %v1446
        %v1448 = vpop.f32.mrb[0].mxu0
        %v1449 = vadd.f32 0.0, %v1448
        %1450 = vmatprep.mubr.f32.mxu0 0.0
        %1451 = vmatmul.mubr.f32.gmra.mrb[0].mxu0 %v1135
        %v1452 = vpop.f32.mrb[0].mxu0
        %v1453 = vadd.f32 0.0, %v1452
        %v1454 = vpop.f32.mrb[0].mxu0
        %v1455 = vadd.f32 0.0, %v1454
        %1456 = vmatprep.mubr.f32.mxu0 0.0
        %1457 = vmatmul.mubr.f32.gmra.mrb[0].mxu0 %v1138
        %v1458 = vpop.f32.mrb[0].mxu0
        %v1459 = vadd.f32 0.0, %v1458
        %v1460 = vpop.f32.mrb[0].mxu0
        %v1461 = vadd.f32 0.0, %v1460
        %1462 = vmatprep.mubr.f32.mxu0 0.0
        %1463 = vmatmul.mubr.f32.gmra.mrb[0].mxu0 %v1141
        %v1464 = vpop.f32.mrb[0].mxu0
        %v1465 = vadd.f32 0.0, %v1464
        %v1466 = vpop.f32.mrb[0].mxu0
        %v1467 = vadd.f32 0.0, %v1466
        %1468 = vmatprep.mubr.f32.mxu0 0.0
        %1469 = vmatmul.mubr.f32.gmra.mrb[0].mxu0 %v1144
        %v1470 = vpop.f32.mrb[0].mxu0
        %v1471 = vadd.f32 0.0, %v1470
        %v1472 = vpop.f32.mrb[0].mxu0
        %v1473 = vadd.f32 0.0, %v1472
        %1474 = vmatprep.mubr.f32.mxu0 0.0
        %1475 = vmatmul.mubr.f32.gmra.mrb[0].mxu0 %v1147
        %v1476 = vpop.f32.mrb[0].mxu0
        %v1477 = vadd.f32 0.0, %v1476
        %v1478 = vpop.f32.mrb[0].mxu0
        %v1479 = vadd.f32 0.0, %v1478
        %1480 = vmatprep.mubr.f32.mxu0 0.0
        %1481 = vmatmul.mubr.f32.gmra.mrb[0].mxu0 %v1150
        %v1482 = vpop.f32.mrb[0].mxu0
        %v1483 = vadd.f32 0.0, %v1482
        %v1484 = vpop.f32.mrb[0].mxu0
        %v1485 = vadd.f32 0.0, %v1484
        %1486 = vmatprep.mubr.f32.mxu0 0.0
        %1487 = vmatmul.mubr.f32.gmra.mrb[0].mxu0 %v1153
        %v1488 = vpop.f32.mrb[0].mxu0
        %v1489 = vadd.f32 0.0, %v1488
        %v1490 = vpop.f32.mrb[0].mxu0
        %v1491 = vadd.f32 0.0, %v1490
        %1492 = vmatprep.mubr.f32.mxu0 0.0
        %1493 = vmatmul.mubr.f32.gmra.mrb[0].mxu0 %v1156
        %v1494 = vpop.f32.mrb[0].mxu0
        %v1495 = vadd.f32 0.0, %v1494
        %v1496 = vpop.f32.mrb[0].mxu0
        %v1497 = vadd.f32 0.0, %v1496
        %1498 = vmatprep.mubr.f32.mxu0 0.0
        %1499 = vmatmul.mubr.f32.gmra.mrb[0].mxu0 %v1159
        %v1500 = vpop.f32.mrb[0].mxu0
        %v1501 = vadd.f32 0.0, %v1500
        %v1502 = vpop.f32.mrb[0].mxu0
        %v1503 = vadd.f32 0.0, %v1502
        %1504 = vmatprep.mubr.f32.mxu0 0.0
        %1505 = vmatmul.mubr.f32.gmra.mrb[0].mxu0 %v1162
        %v1506 = vpop.f32.mrb[0].mxu0
        %v1507 = vadd.f32 0.0, %v1506
        %v1508 = vpop.f32.mrb[0].mxu0
        %v1509 = vadd.f32 0.0, %v1508
        %1510 = vmatprep.mubr.f32.mxu0 0.0
        %1511 = vmatmul.mubr.f32.gmra.mrb[0].mxu0 %v1165
        %v1512 = vpop.f32.mrb[0].mxu0
        %v1513 = vadd.f32 0.0, %v1512
        %v1514 = vpop.f32.mrb[0].mxu0
        %v1515 = vadd.f32 0.0, %v1514
        %1516 = vmatprep.mubr.f32.mxu0 0.0
        %1517 = vmatmul.mubr.f32.gmra.mrb[0].mxu0 %v1168
        %v1518 = vpop.f32.mrb[0].mxu0
        %v1519 = vadd.f32 0.0, %v1518
        %v1520 = vpop.f32.mrb[0].mxu0
        %v1521 = vadd.f32 0.0, %v1520
        %1522 = vdwg.mxu0
        %v1524 = vsel %vm624, %v304, 0
        %v1527 = vsel %vm624, %v305, 0
        %v1530 = vsel %vm624, %v306, 0
        %v1533 = vsel %vm624, %v307, 0
        %v1536 = vsel %vm624, %v308, 0
        %v1539 = vsel %vm624, %v309, 0
        %v1542 = vsel %vm624, %v310, 0
        %v1545 = vsel %vm624, %v311, 0
        %v1548 = vsel %vm624, %v312, 0
        %v1551 = vsel %vm624, %v313, 0
        %v1554 = vsel %vm624, %v314, 0
        %v1557 = vsel %vm624, %v315, 0
        %v1560 = vsel %vm624, %v316, 0
        %v1563 = vsel %vm624, %v317, 0
        %v1566 = vsel %vm624, %v318, 0
        %v1569 = vsel %vm624, %v319, 0
        %v1572 = vsel %vm624, %v320, 0
        %v1575 = vsel %vm624, %v321, 0
        %v1578 = vsel %vm624, %v322, 0
        %v1581 = vsel %vm624, %v323, 0
        %v1584 = vsel %vm624, %v324, 0
        %v1587 = vsel %vm624, %v325, 0
        %v1590 = vsel %vm624, %v326, 0
        %v1593 = vsel %vm624, %v327, 0
        %v1596 = vsel %vm624, %v328, 0
        %v1599 = vsel %vm624, %v329, 0
        %v1602 = vsel %vm624, %v330, 0
        %v1605 = vsel %vm624, %v331, 0
        %v1608 = vsel %vm624, %v332, 0
        %v1611 = vsel %vm624, %v333, 0
        %v1614 = vsel %vm624, %v334, 0
        %v1617 = vsel %vm624, %v335, 0
        %v1620 = vsel %vm624, %v432, 0
        %v1623 = vsel %vm624, %v433, 0
        %v1626 = vsel %vm624, %v434, 0
        %v1629 = vsel %vm624, %v435, 0
        %v1632 = vsel %vm624, %v436, 0
        %v1635 = vsel %vm624, %v437, 0
        %v1638 = vsel %vm624, %v438, 0
        %v1641 = vsel %vm624, %v439, 0
        %v1644 = vsel %vm624, %v440, 0
        %v1647 = vsel %vm624, %v441, 0
        %v1650 = vsel %vm624, %v442, 0
        %v1653 = vsel %vm624, %v443, 0
        %v1656 = vsel %vm624, %v444, 0
        %v1659 = vsel %vm624, %v445, 0
        %v1662 = vsel %vm624, %v446, 0
        %v1665 = vsel %vm624, %v447, 0
        %v1668 = vsel %vm624, %v448, 0
        %v1671 = vsel %vm624, %v449, 0
        %v1674 = vsel %vm624, %v450, 0
        %v1677 = vsel %vm624, %v451, 0
        %v1680 = vsel %vm624, %v452, 0
        %v1683 = vsel %vm624, %v453, 0
        %v1686 = vsel %vm624, %v454, 0
        %v1689 = vsel %vm624, %v455, 0
        %v1692 = vsel %vm624, %v456, 0
        %v1695 = vsel %vm624, %v457, 0
        %v1698 = vsel %vm624, %v458, 0
        %v1701 = vsel %vm624, %v459, 0
        %v1704 = vsel %vm624, %v460, 0
        %v1707 = vsel %vm624, %v461, 0
        %v1710 = vsel %vm624, %v462, 0
        %v1713 = vsel %vm624, %v463, 0
        %1715 = vmatprep.subr.mxu0 0.0
        %1716 = vmatpush1.xpose.msra.mxu0 %v1620
        %1717 = vmatprep.subr.mxu0 0.0
        %1718 = vmatpush1.xpose.msra.mxu0 %v1623
        %1719 = vmatprep.subr.mxu0 0.0
        %1720 = vmatpush1.xpose.msra.mxu0 %v1626
        %1721 = vmatprep.subr.mxu0 0.0
        %1722 = vmatpush1.xpose.msra.mxu0 %v1629
        %1723 = vmatprep.subr.mxu0 0.0
        %1724 = vmatpush1.xpose.msra.mxu0 %v1632
        %1725 = vmatprep.subr.mxu0 0.0
        %1726 = vmatpush1.xpose.msra.mxu0 %v1635
        %1727 = vmatprep.subr.mxu0 0.0
        %1728 = vmatpush1.xpose.msra.mxu0 %v1638
        %1729 = vmatprep.subr.mxu0 0.0
        %1730 = vmatpush1.xpose.msra.mxu0 %v1641
        %1731 = vmatprep.subr.mxu0 0.0
        %1732 = vmatpush1.xpose.msra.mxu0 %v1644
        %1733 = vmatprep.subr.mxu0 0.0
        %1734 = vmatpush1.xpose.msra.mxu0 %v1647
        %1735 = vmatprep.subr.mxu0 0.0
        %1736 = vmatpush1.xpose.msra.mxu0 %v1650
        %1737 = vmatprep.subr.mxu0 0.0
        %1738 = vmatpush1.xpose.msra.mxu0 %v1653
        %1739 = vmatprep.subr.mxu0 0.0
        %1740 = vmatpush1.xpose.msra.mxu0 %v1656
        %1741 = vmatprep.subr.mxu0 0.0
        %1742 = vmatpush1.xpose.msra.mxu0 %v1659
        %1743 = vmatprep.subr.mxu0 0.0
        %1744 = vmatpush1.xpose.msra.mxu0 %v1662
        %1745 = vmatprep.subr.mxu0 0.0
        %1746 = vmatpush1.xpose.msra.mxu0 %v1665
        %1747 = vmatprep.subr.mxu0 0.0
        %1748 = vmatpush1.xpose.msra.mxu0 %v1668
        %1749 = vmatprep.subr.mxu0 0.0
        %1750 = vmatpush1.xpose.msra.mxu0 %v1671
        %1751 = vmatprep.subr.mxu0 0.0
        %1752 = vmatpush1.xpose.msra.mxu0 %v1674
        %1753 = vmatprep.subr.mxu0 0.0
        %1754 = vmatpush1.xpose.msra.mxu0 %v1677
        %1755 = vmatprep.subr.mxu0 0.0
        %1756 = vmatpush1.xpose.msra.mxu0 %v1680
        %1757 = vmatprep.subr.mxu0 0.0
        %1758 = vmatpush1.xpose.msra.mxu0 %v1683
        %1759 = vmatprep.subr.mxu0 0.0
        %1760 = vmatpush1.xpose.msra.mxu0 %v1686
        %1761 = vmatprep.subr.mxu0 0.0
        %1762 = vmatpush1.xpose.msra.mxu0 %v1689
        %1763 = vmatprep.subr.mxu0 0.0
        %1764 = vmatpush1.xpose.msra.mxu0 %v1692
        %1765 = vmatprep.subr.mxu0 0.0
        %1766 = vmatpush1.xpose.msra.mxu0 %v1695
        %1767 = vmatprep.subr.mxu0 0.0
        %1768 = vmatpush1.xpose.msra.mxu0 %v1698
        %1769 = vmatprep.subr.mxu0 0.0
        %1770 = vmatpush1.xpose.msra.mxu0 %v1701
        %1771 = vmatprep.subr.mxu0 0.0
        %1772 = vmatpush1.xpose.msra.mxu0 %v1704
        %1773 = vmatprep.subr.mxu0 0.0
        %1774 = vmatpush1.xpose.msra.mxu0 %v1707
        %1775 = vmatprep.subr.mxu0 0.0
        %1776 = vmatpush1.xpose.msra.mxu0 %v1710
        %1777 = vmatprep.subr.mxu0 0.0
        %1778 = vmatpush1.xpose.msra.mxu0 %v1713
        %1779 = vmatprep.mubr.f32.mxu0 0.0
        %1780 = vmatmul.mubr.f32.gmra.mrb[0].mxu0 %v1524
        %v1781 = vpop.f32.mrb[0].mxu0
        %v1782 = vadd.f32 0.0, %v1781
        %v1783 = vpop.f32.mrb[0].mxu0
        %v1784 = vadd.f32 0.0, %v1783
        %1785 = vmatprep.mubr.f32.mxu0 0.0
        %1786 = vmatmul.mubr.f32.gmra.mrb[0].mxu0 %v1527
        %v1787 = vpop.f32.mrb[0].mxu0
        %v1788 = vadd.f32 0.0, %v1787
        %v1789 = vpop.f32.mrb[0].mxu0
        %v1790 = vadd.f32 0.0, %v1789
        %1791 = vmatprep.mubr.f32.mxu0 0.0
        %1792 = vmatmul.mubr.f32.gmra.mrb[0].mxu0 %v1530
        %v1793 = vpop.f32.mrb[0].mxu0
        %v1794 = vadd.f32 0.0, %v1793
        %v1795 = vpop.f32.mrb[0].mxu0
        %v1796 = vadd.f32 0.0, %v1795
        %1797 = vmatprep.mubr.f32.mxu0 0.0
        %1798 = vmatmul.mubr.f32.gmra.mrb[0].mxu0 %v1533
        %v1799 = vpop.f32.mrb[0].mxu0
        %v1800 = vadd.f32 0.0, %v1799
        %v1801 = vpop.f32.mrb[0].mxu0
        %v1802 = vadd.f32 0.0, %v1801
        %1803 = vmatprep.mubr.f32.mxu0 0.0
        %1804 = vmatmul.mubr.f32.gmra.mrb[0].mxu0 %v1536
        %v1805 = vpop.f32.mrb[0].mxu0
        %v1806 = vadd.f32 0.0, %v1805
        %v1807 = vpop.f32.mrb[0].mxu0
        %v1808 = vadd.f32 0.0, %v1807
        %1809 = vmatprep.mubr.f32.mxu0 0.0
        %1810 = vmatmul.mubr.f32.gmra.mrb[0].mxu0 %v1539
        %v1811 = vpop.f32.mrb[0].mxu0
        %v1812 = vadd.f32 0.0, %v1811
        %v1813 = vpop.f32.mrb[0].mxu0
        %v1814 = vadd.f32 0.0, %v1813
        %1815 = vmatprep.mubr.f32.mxu0 0.0
        %1816 = vmatmul.mubr.f32.gmra.mrb[0].mxu0 %v1542
        %v1817 = vpop.f32.mrb[0].mxu0
        %v1818 = vadd.f32 0.0, %v1817
        %v1819 = vpop.f32.mrb[0].mxu0
        %v1820 = vadd.f32 0.0, %v1819
        %1821 = vmatprep.mubr.f32.mxu0 0.0
        %1822 = vmatmul.mubr.f32.gmra.mrb[0].mxu0 %v1545
        %v1823 = vpop.f32.mrb[0].mxu0
        %v1824 = vadd.f32 0.0, %v1823
        %v1825 = vpop.f32.mrb[0].mxu0
        %v1826 = vadd.f32 0.0, %v1825
        %1827 = vmatprep.mubr.f32.mxu0 0.0
        %1828 = vmatmul.mubr.f32.gmra.mrb[0].mxu0 %v1548
        %v1829 = vpop.f32.mrb[0].mxu0
        %v1830 = vadd.f32 0.0, %v1829
        %v1831 = vpop.f32.mrb[0].mxu0
        %v1832 = vadd.f32 0.0, %v1831
        %1833 = vmatprep.mubr.f32.mxu0 0.0
        %1834 = vmatmul.mubr.f32.gmra.mrb[0].mxu0 %v1551
        %v1835 = vpop.f32.mrb[0].mxu0
        %v1836 = vadd.f32 0.0, %v1835
        %v1837 = vpop.f32.mrb[0].mxu0
        %v1838 = vadd.f32 0.0, %v1837
        %1839 = vmatprep.mubr.f32.mxu0 0.0
        %1840 = vmatmul.mubr.f32.gmra.mrb[0].mxu0 %v1554
        %v1841 = vpop.f32.mrb[0].mxu0
        %v1842 = vadd.f32 0.0, %v1841
        %v1843 = vpop.f32.mrb[0].mxu0
        %v1844 = vadd.f32 0.0, %v1843
        %1845 = vmatprep.mubr.f32.mxu0 0.0
        %1846 = vmatmul.mubr.f32.gmra.mrb[0].mxu0 %v1557
        %v1847 = vpop.f32.mrb[0].mxu0
        %v1848 = vadd.f32 0.0, %v1847
        %v1849 = vpop.f32.mrb[0].mxu0
        %v1850 = vadd.f32 0.0, %v1849
        %1851 = vmatprep.mubr.f32.mxu0 0.0
        %1852 = vmatmul.mubr.f32.gmra.mrb[0].mxu0 %v1560
        %v1853 = vpop.f32.mrb[0].mxu0
        %v1854 = vadd.f32 0.0, %v1853
        %v1855 = vpop.f32.mrb[0].mxu0
        %v1856 = vadd.f32 0.0, %v1855
        %1857 = vmatprep.mubr.f32.mxu0 0.0
        %1858 = vmatmul.mubr.f32.gmra.mrb[0].mxu0 %v1563
        %v1859 = vpop.f32.mrb[0].mxu0
        %v1860 = vadd.f32 0.0, %v1859
        %v1861 = vpop.f32.mrb[0].mxu0
        %v1862 = vadd.f32 0.0, %v1861
        %1863 = vmatprep.mubr.f32.mxu0 0.0
        %1864 = vmatmul.mubr.f32.gmra.mrb[0].mxu0 %v1566
        %v1865 = vpop.f32.mrb[0].mxu0
        %v1866 = vadd.f32 0.0, %v1865
        %v1867 = vpop.f32.mrb[0].mxu0
        %v1868 = vadd.f32 0.0, %v1867
        %1869 = vmatprep.mubr.f32.mxu0 0.0
        %1870 = vmatmul.mubr.f32.gmra.mrb[0].mxu0 %v1569
        %v1871 = vpop.f32.mrb[0].mxu0
        %v1872 = vadd.f32 0.0, %v1871
        %v1873 = vpop.f32.mrb[0].mxu0
        %v1874 = vadd.f32 0.0, %v1873
        %1875 = vmatprep.mubr.f32.mxu0 0.0
        %1876 = vmatmul.mubr.f32.gmra.mrb[0].mxu0 %v1572
        %v1877 = vpop.f32.mrb[0].mxu0
        %v1878 = vadd.f32 0.0, %v1877
        %v1879 = vpop.f32.mrb[0].mxu0
        %v1880 = vadd.f32 0.0, %v1879
        %1881 = vmatprep.mubr.f32.mxu0 0.0
        %1882 = vmatmul.mubr.f32.gmra.mrb[0].mxu0 %v1575
        %v1883 = vpop.f32.mrb[0].mxu0
        %v1884 = vadd.f32 0.0, %v1883
        %v1885 = vpop.f32.mrb[0].mxu0
        %v1886 = vadd.f32 0.0, %v1885
        %1887 = vmatprep.mubr.f32.mxu0 0.0
        %1888 = vmatmul.mubr.f32.gmra.mrb[0].mxu0 %v1578
        %v1889 = vpop.f32.mrb[0].mxu0
        %v1890 = vadd.f32 0.0, %v1889
        %v1891 = vpop.f32.mrb[0].mxu0
        %v1892 = vadd.f32 0.0, %v1891
        %1893 = vmatprep.mubr.f32.mxu0 0.0
        %1894 = vmatmul.mubr.f32.gmra.mrb[0].mxu0 %v1581
        %v1895 = vpop.f32.mrb[0].mxu0
        %v1896 = vadd.f32 0.0, %v1895
        %v1897 = vpop.f32.mrb[0].mxu0
        %v1898 = vadd.f32 0.0, %v1897
        %1899 = vmatprep.mubr.f32.mxu0 0.0
        %1900 = vmatmul.mubr.f32.gmra.mrb[0].mxu0 %v1584
        %v1901 = vpop.f32.mrb[0].mxu0
        %v1902 = vadd.f32 0.0, %v1901
        %v1903 = vpop.f32.mrb[0].mxu0
        %v1904 = vadd.f32 0.0, %v1903
        %1905 = vmatprep.mubr.f32.mxu0 0.0
        %1906 = vmatmul.mubr.f32.gmra.mrb[0].mxu0 %v1587
        %v1907 = vpop.f32.mrb[0].mxu0
        %v1908 = vadd.f32 0.0, %v1907
        %v1909 = vpop.f32.mrb[0].mxu0
        %v1910 = vadd.f32 0.0, %v1909
        %1911 = vmatprep.mubr.f32.mxu0 0.0
        %1912 = vmatmul.mubr.f32.gmra.mrb[0].mxu0 %v1590
        %v1913 = vpop.f32.mrb[0].mxu0
        %v1914 = vadd.f32 0.0, %v1913
        %v1915 = vpop.f32.mrb[0].mxu0
        %v1916 = vadd.f32 0.0, %v1915
        %1917 = vmatprep.mubr.f32.mxu0 0.0
        %1918 = vmatmul.mubr.f32.gmra.mrb[0].mxu0 %v1593
        %v1919 = vpop.f32.mrb[0].mxu0
        %v1920 = vadd.f32 0.0, %v1919
        %v1921 = vpop.f32.mrb[0].mxu0
        %v1922 = vadd.f32 0.0, %v1921
        %1923 = vmatprep.mubr.f32.mxu0 0.0
        %1924 = vmatmul.mubr.f32.gmra.mrb[0].mxu0 %v1596
        %v1925 = vpop.f32.mrb[0].mxu0
        %v1926 = vadd.f32 0.0, %v1925
        %v1927 = vpop.f32.mrb[0].mxu0
        %v1928 = vadd.f32 0.0, %v1927
        %1929 = vmatprep.mubr.f32.mxu0 0.0
        %1930 = vmatmul.mubr.f32.gmra.mrb[0].mxu0 %v1599
        %v1931 = vpop.f32.mrb[0].mxu0
        %v1932 = vadd.f32 0.0, %v1931
        %v1933 = vpop.f32.mrb[0].mxu0
        %v1934 = vadd.f32 0.0, %v1933
        %1935 = vmatprep.mubr.f32.mxu0 0.0
        %1936 = vmatmul.mubr.f32.gmra.mrb[0].mxu0 %v1602
        %v1937 = vpop.f32.mrb[0].mxu0
        %v1938 = vadd.f32 0.0, %v1937
        %v1939 = vpop.f32.mrb[0].mxu0
        %v1940 = vadd.f32 0.0, %v1939
        %1941 = vmatprep.mubr.f32.mxu0 0.0
        %1942 = vmatmul.mubr.f32.gmra.mrb[0].mxu0 %v1605
        %v1943 = vpop.f32.mrb[0].mxu0
        %v1944 = vadd.f32 0.0, %v1943
        %v1945 = vpop.f32.mrb[0].mxu0
        %v1946 = vadd.f32 0.0, %v1945
        %1947 = vmatprep.mubr.f32.mxu0 0.0
        %1948 = vmatmul.mubr.f32.gmra.mrb[0].mxu0 %v1608
        %v1949 = vpop.f32.mrb[0].mxu0
        %v1950 = vadd.f32 0.0, %v1949
        %v1951 = vpop.f32.mrb[0].mxu0
        %v1952 = vadd.f32 0.0, %v1951
        %1953 = vmatprep.mubr.f32.mxu0 0.0
        %1954 = vmatmul.mubr.f32.gmra.mrb[0].mxu0 %v1611
        %v1955 = vpop.f32.mrb[0].mxu0
        %v1956 = vadd.f32 0.0, %v1955
        %v1957 = vpop.f32.mrb[0].mxu0
        %v1958 = vadd.f32 0.0, %v1957
        %1959 = vmatprep.mubr.f32.mxu0 0.0
        %1960 = vmatmul.mubr.f32.gmra.mrb[0].mxu0 %v1614
        %v1961 = vpop.f32.mrb[0].mxu0
        %v1962 = vadd.f32 0.0, %v1961
        %v1963 = vpop.f32.mrb[0].mxu0
        %v1964 = vadd.f32 0.0, %v1963
        %1965 = vmatprep.mubr.f32.mxu0 0.0
        %1966 = vmatmul.mubr.f32.gmra.mrb[0].mxu0 %v1617
        %v1967 = vpop.f32.mrb[0].mxu0
        %v1968 = vadd.f32 0.0, %v1967
        %v1969 = vpop.f32.mrb[0].mxu0
        %v1970 = vadd.f32 0.0, %v1969
        %1971 = vdwg.mxu0
        %v1973 = vsel %vm624, %v336, 0
        %v1976 = vsel %vm624, %v337, 0
        %v1979 = vsel %vm624, %v338, 0
        %v1982 = vsel %vm624, %v339, 0
        %v1985 = vsel %vm624, %v340, 0
        %v1988 = vsel %vm624, %v341, 0
        %v1991 = vsel %vm624, %v342, 0
        %v1994 = vsel %vm624, %v343, 0
        %v1997 = vsel %vm624, %v344, 0
        %v2000 = vsel %vm624, %v345, 0
        %v2003 = vsel %vm624, %v346, 0
        %v2006 = vsel %vm624, %v347, 0
        %v2009 = vsel %vm624, %v348, 0
        %v2012 = vsel %vm624, %v349, 0
        %v2015 = vsel %vm624, %v350, 0
        %v2018 = vsel %vm624, %v351, 0
        %v2021 = vsel %vm624, %v352, 0
        %v2024 = vsel %vm624, %v353, 0
        %v2027 = vsel %vm624, %v354, 0
        %v2030 = vsel %vm624, %v355, 0
        %v2033 = vsel %vm624, %v356, 0
        %v2036 = vsel %vm624, %v357, 0
        %v2039 = vsel %vm624, %v358, 0
        %v2042 = vsel %vm624, %v359, 0
        %v2045 = vsel %vm624, %v360, 0
        %v2048 = vsel %vm624, %v361, 0
        %v2051 = vsel %vm624, %v362, 0
        %v2054 = vsel %vm624, %v363, 0
        %v2057 = vsel %vm624, %v364, 0
        %v2060 = vsel %vm624, %v365, 0
        %v2063 = vsel %vm624, %v366, 0
        %v2066 = vsel %vm624, %v367, 0
        %v2069 = vsel %vm624, %v464, 0
        %v2072 = vsel %vm624, %v465, 0
        %v2075 = vsel %vm624, %v466, 0
        %v2078 = vsel %vm624, %v467, 0
        %v2081 = vsel %vm624, %v468, 0
        %v2084 = vsel %vm624, %v469, 0
        %v2087 = vsel %vm624, %v470, 0
        %v2090 = vsel %vm624, %v471, 0
        %v2093 = vsel %vm624, %v472, 0
        %v2096 = vsel %vm624, %v473, 0
        %v2099 = vsel %vm624, %v474, 0
        %v2102 = vsel %vm624, %v475, 0
        %v2105 = vsel %vm624, %v476, 0
        %v2108 = vsel %vm624, %v477, 0
        %v2111 = vsel %vm624, %v478, 0
        %v2114 = vsel %vm624, %v479, 0
        %v2117 = vsel %vm624, %v480, 0
        %v2120 = vsel %vm624, %v481, 0
        %v2123 = vsel %vm624, %v482, 0
        %v2126 = vsel %vm624, %v483, 0
        %v2129 = vsel %vm624, %v484, 0
        %v2132 = vsel %vm624, %v485, 0
        %v2135 = vsel %vm624, %v486, 0
        %v2138 = vsel %vm624, %v487, 0
        %v2141 = vsel %vm624, %v488, 0
        %v2144 = vsel %vm624, %v489, 0
        %v2147 = vsel %vm624, %v490, 0
        %v2150 = vsel %vm624, %v491, 0
        %v2153 = vsel %vm624, %v492, 0
        %v2156 = vsel %vm624, %v493, 0
        %v2159 = vsel %vm624, %v494, 0
        %v2162 = vsel %vm624, %v495, 0
        %2164 = vmatprep.subr.mxu0 0.0
        %2165 = vmatpush1.xpose.msra.mxu0 %v2069
        %2166 = vmatprep.subr.mxu0 0.0
        %2167 = vmatpush1.xpose.msra.mxu0 %v2072
        %2168 = vmatprep.subr.mxu0 0.0
        %2169 = vmatpush1.xpose.msra.mxu0 %v2075
        %2170 = vmatprep.subr.mxu0 0.0
        %2171 = vmatpush1.xpose.msra.mxu0 %v2078
        %2172 = vmatprep.subr.mxu0 0.0
        %2173 = vmatpush1.xpose.msra.mxu0 %v2081
        %2174 = vmatprep.subr.mxu0 0.0
        %2175 = vmatpush1.xpose.msra.mxu0 %v2084
        %2176 = vmatprep.subr.mxu0 0.0
        %2177 = vmatpush1.xpose.msra.mxu0 %v2087
        %2178 = vmatprep.subr.mxu0 0.0
        %2179 = vmatpush1.xpose.msra.mxu0 %v2090
        %2180 = vmatprep.subr.mxu0 0.0
        %2181 = vmatpush1.xpose.msra.mxu0 %v2093
        %2182 = vmatprep.subr.mxu0 0.0
        %2183 = vmatpush1.xpose.msra.mxu0 %v2096
        %2184 = vmatprep.subr.mxu0 0.0
        %2185 = vmatpush1.xpose.msra.mxu0 %v2099
        %2186 = vmatprep.subr.mxu0 0.0
        %2187 = vmatpush1.xpose.msra.mxu0 %v2102
        %2188 = vmatprep.subr.mxu0 0.0
        %2189 = vmatpush1.xpose.msra.mxu0 %v2105
        %2190 = vmatprep.subr.mxu0 0.0
        %2191 = vmatpush1.xpose.msra.mxu0 %v2108
        %2192 = vmatprep.subr.mxu0 0.0
        %2193 = vmatpush1.xpose.msra.mxu0 %v2111
        %2194 = vmatprep.subr.mxu0 0.0
        %2195 = vmatpush1.xpose.msra.mxu0 %v2114
        %2196 = vmatprep.subr.mxu0 0.0
        %2197 = vmatpush1.xpose.msra.mxu0 %v2117
        %2198 = vmatprep.subr.mxu0 0.0
        %2199 = vmatpush1.xpose.msra.mxu0 %v2120
        %2200 = vmatprep.subr.mxu0 0.0
        %2201 = vmatpush1.xpose.msra.mxu0 %v2123
        %2202 = vmatprep.subr.mxu0 0.0
        %2203 = vmatpush1.xpose.msra.mxu0 %v2126
        %2204 = vmatprep.subr.mxu0 0.0
        %2205 = vmatpush1.xpose.msra.mxu0 %v2129
        %2206 = vmatprep.subr.mxu0 0.0
        %2207 = vmatpush1.xpose.msra.mxu0 %v2132
        %2208 = vmatprep.subr.mxu0 0.0
        %2209 = vmatpush1.xpose.msra.mxu0 %v2135
        %2210 = vmatprep.subr.mxu0 0.0
        %2211 = vmatpush1.xpose.msra.mxu0 %v2138
        %2212 = vmatprep.subr.mxu0 0.0
        %2213 = vmatpush1.xpose.msra.mxu0 %v2141
        %2214 = vmatprep.subr.mxu0 0.0
        %2215 = vmatpush1.xpose.msra.mxu0 %v2144
        %2216 = vmatprep.subr.mxu0 0.0
        %2217 = vmatpush1.xpose.msra.mxu0 %v2147
        %2218 = vmatprep.subr.mxu0 0.0
        %2219 = vmatpush1.xpose.msra.mxu0 %v2150
        %2220 = vmatprep.subr.mxu0 0.0
        %2221 = vmatpush1.xpose.msra.mxu0 %v2153
        %2222 = vmatprep.subr.mxu0 0.0
        %2223 = vmatpush1.xpose.msra.mxu0 %v2156
        %2224 = vmatprep.subr.mxu0 0.0
        %2225 = vmatpush1.xpose.msra.mxu0 %v2159
        %2226 = vmatprep.subr.mxu0 0.0
        %2227 = vmatpush1.xpose.msra.mxu0 %v2162
        %2228 = vmatprep.mubr.f32.mxu0 0.0
        %2229 = vmatmul.mubr.f32.gmra.mrb[0].mxu0 %v1973
        %v2230 = vpop.f32.mrb[0].mxu0
        %v2231 = vadd.f32 0.0, %v2230
        %v2232 = vpop.f32.mrb[0].mxu0
        %v2233 = vadd.f32 0.0, %v2232
        %2234 = vmatprep.mubr.f32.mxu0 0.0
        %2235 = vmatmul.mubr.f32.gmra.mrb[0].mxu0 %v1976
        %v2236 = vpop.f32.mrb[0].mxu0
        %v2237 = vadd.f32 0.0, %v2236
        %v2238 = vpop.f32.mrb[0].mxu0
        %v2239 = vadd.f32 0.0, %v2238
        %2240 = vmatprep.mubr.f32.mxu0 0.0
        %2241 = vmatmul.mubr.f32.gmra.mrb[0].mxu0 %v1979
        %v2242 = vpop.f32.mrb[0].mxu0
        %v2243 = vadd.f32 0.0, %v2242
        %v2244 = vpop.f32.mrb[0].mxu0
        %v2245 = vadd.f32 0.0, %v2244
        %2246 = vmatprep.mubr.f32.mxu0 0.0
        %2247 = vmatmul.mubr.f32.gmra.mrb[0].mxu0 %v1982
        %v2248 = vpop.f32.mrb[0].mxu0
        %v2249 = vadd.f32 0.0, %v2248
        %v2250 = vpop.f32.mrb[0].mxu0
        %v2251 = vadd.f32 0.0, %v2250
        %2252 = vmatprep.mubr.f32.mxu0 0.0
        %2253 = vmatmul.mubr.f32.gmra.mrb[0].mxu0 %v1985
        %v2254 = vpop.f32.mrb[0].mxu0
        %v2255 = vadd.f32 0.0, %v2254
        %v2256 = vpop.f32.mrb[0].mxu0
        %v2257 = vadd.f32 0.0, %v2256
        %2258 = vmatprep.mubr.f32.mxu0 0.0
        %2259 = vmatmul.mubr.f32.gmra.mrb[0].mxu0 %v1988
        %v2260 = vpop.f32.mrb[0].mxu0
        %v2261 = vadd.f32 0.0, %v2260
        %v2262 = vpop.f32.mrb[0].mxu0
        %v2263 = vadd.f32 0.0, %v2262
        %2264 = vmatprep.mubr.f32.mxu0 0.0
        %2265 = vmatmul.mubr.f32.gmra.mrb[0].mxu0 %v1991
        %v2266 = vpop.f32.mrb[0].mxu0
        %v2267 = vadd.f32 0.0, %v2266
        %v2268 = vpop.f32.mrb[0].mxu0
        %v2269 = vadd.f32 0.0, %v2268
        %2270 = vmatprep.mubr.f32.mxu0 0.0
        %2271 = vmatmul.mubr.f32.gmra.mrb[0].mxu0 %v1994
        %v2272 = vpop.f32.mrb[0].mxu0
        %v2273 = vadd.f32 0.0, %v2272
        %v2274 = vpop.f32.mrb[0].mxu0
        %v2275 = vadd.f32 0.0, %v2274
        %2276 = vmatprep.mubr.f32.mxu0 0.0
        %2277 = vmatmul.mubr.f32.gmra.mrb[0].mxu0 %v1997
        %v2278 = vpop.f32.mrb[0].mxu0
        %v2279 = vadd.f32 0.0, %v2278
        %v2280 = vpop.f32.mrb[0].mxu0
        %v2281 = vadd.f32 0.0, %v2280
        %2282 = vmatprep.mubr.f32.mxu0 0.0
        %2283 = vmatmul.mubr.f32.gmra.mrb[0].mxu0 %v2000
        %v2284 = vpop.f32.mrb[0].mxu0
        %v2285 = vadd.f32 0.0, %v2284
        %v2286 = vpop.f32.mrb[0].mxu0
        %v2287 = vadd.f32 0.0, %v2286
        %2288 = vmatprep.mubr.f32.mxu0 0.0
        %2289 = vmatmul.mubr.f32.gmra.mrb[0].mxu0 %v2003
        %v2290 = vpop.f32.mrb[0].mxu0
        %v2291 = vadd.f32 0.0, %v2290
        %v2292 = vpop.f32.mrb[0].mxu0
        %v2293 = vadd.f32 0.0, %v2292
        %2294 = vmatprep.mubr.f32.mxu0 0.0
        %2295 = vmatmul.mubr.f32.gmra.mrb[0].mxu0 %v2006
        %v2296 = vpop.f32.mrb[0].mxu0
        %v2297 = vadd.f32 0.0, %v2296
        %v2298 = vpop.f32.mrb[0].mxu0
        %v2299 = vadd.f32 0.0, %v2298
        %2300 = vmatprep.mubr.f32.mxu0 0.0
        %2301 = vmatmul.mubr.f32.gmra.mrb[0].mxu0 %v2009
        %v2302 = vpop.f32.mrb[0].mxu0
        %v2303 = vadd.f32 0.0, %v2302
        %v2304 = vpop.f32.mrb[0].mxu0
        %v2305 = vadd.f32 0.0, %v2304
        %2306 = vmatprep.mubr.f32.mxu0 0.0
        %2307 = vmatmul.mubr.f32.gmra.mrb[0].mxu0 %v2012
        %v2308 = vpop.f32.mrb[0].mxu0
        %v2309 = vadd.f32 0.0, %v2308
        %v2310 = vpop.f32.mrb[0].mxu0
        %v2311 = vadd.f32 0.0, %v2310
        %2312 = vmatprep.mubr.f32.mxu0 0.0
        %2313 = vmatmul.mubr.f32.gmra.mrb[0].mxu0 %v2015
        %v2314 = vpop.f32.mrb[0].mxu0
        %v2315 = vadd.f32 0.0, %v2314
        %v2316 = vpop.f32.mrb[0].mxu0
        %v2317 = vadd.f32 0.0, %v2316
        %2318 = vmatprep.mubr.f32.mxu0 0.0
        %2319 = vmatmul.mubr.f32.gmra.mrb[0].mxu0 %v2018
        %v2320 = vpop.f32.mrb[0].mxu0
        %v2321 = vadd.f32 0.0, %v2320
        %v2322 = vpop.f32.mrb[0].mxu0
        %v2323 = vadd.f32 0.0, %v2322
        %2324 = vmatprep.mubr.f32.mxu0 0.0
        %2325 = vmatmul.mubr.f32.gmra.mrb[0].mxu0 %v2021
        %v2326 = vpop.f32.mrb[0].mxu0
        %v2327 = vadd.f32 0.0, %v2326
        %v2328 = vpop.f32.mrb[0].mxu0
        %v2329 = vadd.f32 0.0, %v2328
        %2330 = vmatprep.mubr.f32.mxu0 0.0
        %2331 = vmatmul.mubr.f32.gmra.mrb[0].mxu0 %v2024
        %v2332 = vpop.f32.mrb[0].mxu0
        %v2333 = vadd.f32 0.0, %v2332
        %v2334 = vpop.f32.mrb[0].mxu0
        %v2335 = vadd.f32 0.0, %v2334
        %2336 = vmatprep.mubr.f32.mxu0 0.0
        %2337 = vmatmul.mubr.f32.gmra.mrb[0].mxu0 %v2027
        %v2338 = vpop.f32.mrb[0].mxu0
        %v2339 = vadd.f32 0.0, %v2338
        %v2340 = vpop.f32.mrb[0].mxu0
        %v2341 = vadd.f32 0.0, %v2340
        %2342 = vmatprep.mubr.f32.mxu0 0.0
        %2343 = vmatmul.mubr.f32.gmra.mrb[0].mxu0 %v2030
        %v2344 = vpop.f32.mrb[0].mxu0
        %v2345 = vadd.f32 0.0, %v2344
        %v2346 = vpop.f32.mrb[0].mxu0
        %v2347 = vadd.f32 0.0, %v2346
        %2348 = vmatprep.mubr.f32.mxu0 0.0
        %2349 = vmatmul.mubr.f32.gmra.mrb[0].mxu0 %v2033
        %v2350 = vpop.f32.mrb[0].mxu0
        %v2351 = vadd.f32 0.0, %v2350
        %v2352 = vpop.f32.mrb[0].mxu0
        %v2353 = vadd.f32 0.0, %v2352
        %2354 = vmatprep.mubr.f32.mxu0 0.0
        %2355 = vmatmul.mubr.f32.gmra.mrb[0].mxu0 %v2036
        %v2356 = vpop.f32.mrb[0].mxu0
        %v2357 = vadd.f32 0.0, %v2356
        %v2358 = vpop.f32.mrb[0].mxu0
        %v2359 = vadd.f32 0.0, %v2358
        %2360 = vmatprep.mubr.f32.mxu0 0.0
        %2361 = vmatmul.mubr.f32.gmra.mrb[0].mxu0 %v2039
        %v2362 = vpop.f32.mrb[0].mxu0
        %v2363 = vadd.f32 0.0, %v2362
        %v2364 = vpop.f32.mrb[0].mxu0
        %v2365 = vadd.f32 0.0, %v2364
        %2366 = vmatprep.mubr.f32.mxu0 0.0
        %2367 = vmatmul.mubr.f32.gmra.mrb[0].mxu0 %v2042
        %v2368 = vpop.f32.mrb[0].mxu0
        %v2369 = vadd.f32 0.0, %v2368
        %v2370 = vpop.f32.mrb[0].mxu0
        %v2371 = vadd.f32 0.0, %v2370
        %2372 = vmatprep.mubr.f32.mxu0 0.0
        %2373 = vmatmul.mubr.f32.gmra.mrb[0].mxu0 %v2045
        %v2374 = vpop.f32.mrb[0].mxu0
        %v2375 = vadd.f32 0.0, %v2374
        %v2376 = vpop.f32.mrb[0].mxu0
        %v2377 = vadd.f32 0.0, %v2376
        %2378 = vmatprep.mubr.f32.mxu0 0.0
        %2379 = vmatmul.mubr.f32.gmra.mrb[0].mxu0 %v2048
        %v2380 = vpop.f32.mrb[0].mxu0
        %v2381 = vadd.f32 0.0, %v2380
        %v2382 = vpop.f32.mrb[0].mxu0
        %v2383 = vadd.f32 0.0, %v2382
        %2384 = vmatprep.mubr.f32.mxu0 0.0
        %2385 = vmatmul.mubr.f32.gmra.mrb[0].mxu0 %v2051
        %v2386 = vpop.f32.mrb[0].mxu0
        %v2387 = vadd.f32 0.0, %v2386
        %v2388 = vpop.f32.mrb[0].mxu0
        %v2389 = vadd.f32 0.0, %v2388
        %2390 = vmatprep.mubr.f32.mxu0 0.0
        %2391 = vmatmul.mubr.f32.gmra.mrb[0].mxu0 %v2054
        %v2392 = vpop.f32.mrb[0].mxu0
        %v2393 = vadd.f32 0.0, %v2392
        %v2394 = vpop.f32.mrb[0].mxu0
        %v2395 = vadd.f32 0.0, %v2394
        %2396 = vmatprep.mubr.f32.mxu0 0.0
        %2397 = vmatmul.mubr.f32.gmra.mrb[0].mxu0 %v2057
        %v2398 = vpop.f32.mrb[0].mxu0
        %v2399 = vadd.f32 0.0, %v2398
        %v2400 = vpop.f32.mrb[0].mxu0
        %v2401 = vadd.f32 0.0, %v2400
        %2402 = vmatprep.mubr.f32.mxu0 0.0
        %2403 = vmatmul.mubr.f32.gmra.mrb[0].mxu0 %v2060
        %v2404 = vpop.f32.mrb[0].mxu0
        %v2405 = vadd.f32 0.0, %v2404
        %v2406 = vpop.f32.mrb[0].mxu0
        %v2407 = vadd.f32 0.0, %v2406
        %2408 = vmatprep.mubr.f32.mxu0 0.0
        %2409 = vmatmul.mubr.f32.gmra.mrb[0].mxu0 %v2063
        %v2410 = vpop.f32.mrb[0].mxu0
        %v2411 = vadd.f32 0.0, %v2410
        %v2412 = vpop.f32.mrb[0].mxu0
        %v2413 = vadd.f32 0.0, %v2412
        %2414 = vmatprep.mubr.f32.mxu0 0.0
        %2415 = vmatmul.mubr.f32.gmra.mrb[0].mxu0 %v2066
        %v2416 = vpop.f32.mrb[0].mxu0
        %v2417 = vadd.f32 0.0, %v2416
        %v2418 = vpop.f32.mrb[0].mxu0
        %v2419 = vadd.f32 0.0, %v2418
        %2420 = vdwg.mxu0
        %s2421 = smul.u32 %s22, 256
        %v2422 = vlaneseq
        %v2423 = vshrl.u32 %v2422, 7
        %v2424 = vadd.s32 %v2423, 8
        %v2425 = vadd.s32 %v2423, 16
        %v2426 = vadd.s32 %v2423, 24
        %v2427 = vadd.s32 %v2423, 32
        %v2428 = vadd.s32 %v2423, 40
        %v2429 = vadd.s32 %v2423, 48
        %v2430 = vadd.s32 %v2423, 56
        %v2431 = vadd.s32 %v2423, 64
        %v2432 = vadd.s32 %v2423, 72
        %v2433 = vadd.s32 %v2423, 80
        %v2434 = vadd.s32 %v2423, 88
        %v2435 = vadd.s32 %v2423, 96
        %v2436 = vadd.s32 %v2423, 104
        %v2437 = vadd.s32 %v2423, 112
        %v2438 = vadd.s32 %v2423, 120
        %v2439 = vadd.s32 %v2423, 128
        %v2440 = vadd.s32 %v2423, 136
        %v2441 = vadd.s32 %v2423, 144
        %v2442 = vadd.s32 %v2423, 152
        %v2443 = vadd.s32 %v2423, 160
        %v2444 = vadd.s32 %v2423, 168
        %v2445 = vadd.s32 %v2423, 176
        %v2446 = vadd.s32 %v2423, 184
        %v2447 = vadd.s32 %v2423, 192
        %v2448 = vadd.s32 %v2423, 200
        %v2449 = vadd.s32 %v2423, 208
        %v2450 = vadd.s32 %v2423, 216
        %v2451 = vadd.s32 %v2423, 224
        %v2452 = vadd.s32 %v2423, 232
        %v2453 = vadd.s32 %v2423, 240
        %v2454 = vadd.s32 %v2423, 248
        %v2455 = vstv %s2421
        %v2456 = vadd.s32 %v2455, %v2423
        %v2457 = vadd.s32 %v2455, %v2424
        %v2458 = vadd.s32 %v2455, %v2425
        %v2459 = vadd.s32 %v2455, %v2426
        %v2460 = vadd.s32 %v2455, %v2427
        %v2461 = vadd.s32 %v2455, %v2428
        %v2462 = vadd.s32 %v2455, %v2429
        %v2463 = vadd.s32 %v2455, %v2430
        %v2464 = vadd.s32 %v2455, %v2431
        %v2465 = vadd.s32 %v2455, %v2432
        %v2466 = vadd.s32 %v2455, %v2433
        %v2467 = vadd.s32 %v2455, %v2434
        %v2468 = vadd.s32 %v2455, %v2435
        %v2469 = vadd.s32 %v2455, %v2436
        %v2470 = vadd.s32 %v2455, %v2437
        %v2471 = vadd.s32 %v2455, %v2438
        %v2472 = vadd.s32 %v2455, %v2439
        %v2473 = vadd.s32 %v2455, %v2440
        %v2474 = vadd.s32 %v2455, %v2441
        %v2475 = vadd.s32 %v2455, %v2442
        %v2476 = vadd.s32 %v2455, %v2443
        %v2477 = vadd.s32 %v2455, %v2444
        %v2478 = vadd.s32 %v2455, %v2445
        %v2479 = vadd.s32 %v2455, %v2446
        %v2480 = vadd.s32 %v2455, %v2447
        %v2481 = vadd.s32 %v2455, %v2448
        %v2482 = vadd.s32 %v2455, %v2449
        %v2483 = vadd.s32 %v2455, %v2450
        %v2484 = vadd.s32 %v2455, %v2451
        %v2485 = vadd.s32 %v2455, %v2452
        %v2486 = vadd.s32 %v2455, %v2453
        %v2487 = vadd.s32 %v2455, %v2454
        %v2488 = vlaneseq
        %v2489 = vand.u32 %v2488, 127
        %v2490 = vadd.s32 %v2489, 128
        %vm2491 = vcmp.gt.s32.totalorder %v2489, %v2456
        %vm2492 = vcmp.gt.s32.totalorder %v2490, %v2456
        %vm2493 = vcmp.gt.s32.totalorder %v2489, %v2457
        %vm2494 = vcmp.gt.s32.totalorder %v2490, %v2457
        %vm2495 = vcmp.gt.s32.totalorder %v2489, %v2458
        %vm2496 = vcmp.gt.s32.totalorder %v2490, %v2458
        %vm2497 = vcmp.gt.s32.totalorder %v2489, %v2459
        %vm2498 = vcmp.gt.s32.totalorder %v2490, %v2459
        %vm2499 = vcmp.gt.s32.totalorder %v2489, %v2460
        %vm2500 = vcmp.gt.s32.totalorder %v2490, %v2460
        %vm2501 = vcmp.gt.s32.totalorder %v2489, %v2461
        %vm2502 = vcmp.gt.s32.totalorder %v2490, %v2461
        %vm2503 = vcmp.gt.s32.totalorder %v2489, %v2462
        %vm2504 = vcmp.gt.s32.totalorder %v2490, %v2462
        %vm2505 = vcmp.gt.s32.totalorder %v2489, %v2463
        %vm2506 = vcmp.gt.s32.totalorder %v2490, %v2463
        %vm2507 = vcmp.gt.s32.totalorder %v2489, %v2464
        %vm2508 = vcmp.gt.s32.totalorder %v2490, %v2464
        %vm2509 = vcmp.gt.s32.totalorder %v2489, %v2465
        %vm2510 = vcmp.gt.s32.totalorder %v2490, %v2465
        %vm2511 = vcmp.gt.s32.totalorder %v2489, %v2466
        %vm2512 = vcmp.gt.s32.totalorder %v2490, %v2466
        %vm2513 = vcmp.gt.s32.totalorder %v2489, %v2467
        %vm2514 = vcmp.gt.s32.totalorder %v2490, %v2467
        %vm2515 = vcmp.gt.s32.totalorder %v2489, %v2468
        %vm2516 = vcmp.gt.s32.totalorder %v2490, %v2468
        %vm2517 = vcmp.gt.s32.totalorder %v2489, %v2469
        %vm2518 = vcmp.gt.s32.totalorder %v2490, %v2469
        %vm2519 = vcmp.gt.s32.totalorder %v2489, %v2470
        %vm2520 = vcmp.gt.s32.totalorder %v2490, %v2470
        %vm2521 = vcmp.gt.s32.totalorder %v2489, %v2471
        %vm2522 = vcmp.gt.s32.totalorder %v2490, %v2471
        %vm2523 = vcmp.gt.s32.totalorder %v2489, %v2472
        %vm2524 = vcmp.gt.s32.totalorder %v2490, %v2472
        %vm2525 = vcmp.gt.s32.totalorder %v2489, %v2473
        %vm2526 = vcmp.gt.s32.totalorder %v2490, %v2473
        %vm2527 = vcmp.gt.s32.totalorder %v2489, %v2474
        %vm2528 = vcmp.gt.s32.totalorder %v2490, %v2474
        %vm2529 = vcmp.gt.s32.totalorder %v2489, %v2475
        %vm2530 = vcmp.gt.s32.totalorder %v2490, %v2475
        %vm2531 = vcmp.gt.s32.totalorder %v2489, %v2476
        %vm2532 = vcmp.gt.s32.totalorder %v2490, %v2476
        %vm2533 = vcmp.gt.s32.totalorder %v2489, %v2477
        %vm2534 = vcmp.gt.s32.totalorder %v2490, %v2477
        %vm2535 = vcmp.gt.s32.totalorder %v2489, %v2478
        %vm2536 = vcmp.gt.s32.totalorder %v2490, %v2478
        %vm2537 = vcmp.gt.s32.totalorder %v2489, %v2479
        %vm2538 = vcmp.gt.s32.totalorder %v2490, %v2479
        %vm2539 = vcmp.gt.s32.totalorder %v2489, %v2480
        %vm2540 = vcmp.gt.s32.totalorder %v2490, %v2480
        %vm2541 = vcmp.gt.s32.totalorder %v2489, %v2481
        %vm2542 = vcmp.gt.s32.totalorder %v2490, %v2481
        %vm2543 = vcmp.gt.s32.totalorder %v2489, %v2482
        %vm2544 = vcmp.gt.s32.totalorder %v2490, %v2482
        %vm2545 = vcmp.gt.s32.totalorder %v2489, %v2483
        %vm2546 = vcmp.gt.s32.totalorder %v2490, %v2483
        %vm2547 = vcmp.gt.s32.totalorder %v2489, %v2484
        %vm2548 = vcmp.gt.s32.totalorder %v2490, %v2484
        %vm2549 = vcmp.gt.s32.totalorder %v2489, %v2485
        %vm2550 = vcmp.gt.s32.totalorder %v2490, %v2485
        %vm2551 = vcmp.gt.s32.totalorder %v2489, %v2486
        %vm2552 = vcmp.gt.s32.totalorder %v2490, %v2486
        %vm2553 = vcmp.gt.s32.totalorder %v2489, %v2487
        %vm2554 = vcmp.gt.s32.totalorder %v2490, %v2487
        %v2555 = vsel %vm2491, 1, 0
        %v2556 = vsel %vm2492, 1, 0
        %v2557 = vsel %vm2493, 1, 0
        %v2558 = vsel %vm2494, 1, 0
        %v2559 = vsel %vm2495, 1, 0
        %v2560 = vsel %vm2496, 1, 0
        %v2561 = vsel %vm2497, 1, 0
        %v2562 = vsel %vm2498, 1, 0
        %v2563 = vsel %vm2499, 1, 0
        %v2564 = vsel %vm2500, 1, 0
        %v2565 = vsel %vm2501, 1, 0
        %v2566 = vsel %vm2502, 1, 0
        %v2567 = vsel %vm2503, 1, 0
        %v2568 = vsel %vm2504, 1, 0
        %v2569 = vsel %vm2505, 1, 0
        %v2570 = vsel %vm2506, 1, 0
        %v2571 = vsel %vm2507, 1, 0
        %v2572 = vsel %vm2508, 1, 0
        %v2573 = vsel %vm2509, 1, 0
        %v2574 = vsel %vm2510, 1, 0
        %v2575 = vsel %vm2511, 1, 0
        %v2576 = vsel %vm2512, 1, 0
        %v2577 = vsel %vm2513, 1, 0
        %v2578 = vsel %vm2514, 1, 0
        %v2579 = vsel %vm2515, 1, 0
        %v2580 = vsel %vm2516, 1, 0
        %v2581 = vsel %vm2517, 1, 0
        %v2582 = vsel %vm2518, 1, 0
        %v2583 = vsel %vm2519, 1, 0
        %v2584 = vsel %vm2520, 1, 0
        %v2585 = vsel %vm2521, 1, 0
        %v2586 = vsel %vm2522, 1, 0
        %v2587 = vsel %vm2523, 1, 0
        %v2588 = vsel %vm2524, 1, 0
        %v2589 = vsel %vm2525, 1, 0
        %v2590 = vsel %vm2526, 1, 0
        %v2591 = vsel %vm2527, 1, 0
        %v2592 = vsel %vm2528, 1, 0
        %v2593 = vsel %vm2529, 1, 0
        %v2594 = vsel %vm2530, 1, 0
        %v2595 = vsel %vm2531, 1, 0
        %v2596 = vsel %vm2532, 1, 0
        %v2597 = vsel %vm2533, 1, 0
        %v2598 = vsel %vm2534, 1, 0
        %v2599 = vsel %vm2535, 1, 0
        %v2600 = vsel %vm2536, 1, 0
        %v2601 = vsel %vm2537, 1, 0
        %v2602 = vsel %vm2538, 1, 0
        %v2603 = vsel %vm2539, 1, 0
        %v2604 = vsel %vm2540, 1, 0
        %v2605 = vsel %vm2541, 1, 0
        %v2606 = vsel %vm2542, 1, 0
        %v2607 = vsel %vm2543, 1, 0
        %v2608 = vsel %vm2544, 1, 0
        %v2609 = vsel %vm2545, 1, 0
        %v2610 = vsel %vm2546, 1, 0
        %v2611 = vsel %vm2547, 1, 0
        %v2612 = vsel %vm2548, 1, 0
        %v2613 = vsel %vm2549, 1, 0
        %v2614 = vsel %vm2550, 1, 0
        %v2615 = vsel %vm2551, 1, 0
        %v2616 = vsel %vm2552, 1, 0
        %v2617 = vsel %vm2553, 1, 0
        %v2618 = vsel %vm2554, 1, 0
        %vm2619 = vcmp.eq.s32.totalorder %v2555, 1
        %vm2620 = vcmp.eq.s32.totalorder %v2556, 1
        %vm2621 = vcmp.eq.s32.totalorder %v2557, 1
        %vm2622 = vcmp.eq.s32.totalorder %v2558, 1
        %vm2623 = vcmp.eq.s32.totalorder %v2559, 1
        %vm2624 = vcmp.eq.s32.totalorder %v2560, 1
        %vm2625 = vcmp.eq.s32.totalorder %v2561, 1
        %vm2626 = vcmp.eq.s32.totalorder %v2562, 1
        %vm2627 = vcmp.eq.s32.totalorder %v2563, 1
        %vm2628 = vcmp.eq.s32.totalorder %v2564, 1
        %vm2629 = vcmp.eq.s32.totalorder %v2565, 1
        %vm2630 = vcmp.eq.s32.totalorder %v2566, 1
        %vm2631 = vcmp.eq.s32.totalorder %v2567, 1
        %vm2632 = vcmp.eq.s32.totalorder %v2568, 1
        %vm2633 = vcmp.eq.s32.totalorder %v2569, 1
        %vm2634 = vcmp.eq.s32.totalorder %v2570, 1
        %vm2635 = vcmp.eq.s32.totalorder %v2571, 1
        %vm2636 = vcmp.eq.s32.totalorder %v2572, 1
        %vm2637 = vcmp.eq.s32.totalorder %v2573, 1
        %vm2638 = vcmp.eq.s32.totalorder %v2574, 1
        %vm2639 = vcmp.eq.s32.totalorder %v2575, 1
        %vm2640 = vcmp.eq.s32.totalorder %v2576, 1
        %vm2641 = vcmp.eq.s32.totalorder %v2577, 1
        %vm2642 = vcmp.eq.s32.totalorder %v2578, 1
        %vm2643 = vcmp.eq.s32.totalorder %v2579, 1
        %vm2644 = vcmp.eq.s32.totalorder %v2580, 1
        %vm2645 = vcmp.eq.s32.totalorder %v2581, 1
        %vm2646 = vcmp.eq.s32.totalorder %v2582, 1
        %vm2647 = vcmp.eq.s32.totalorder %v2583, 1
        %vm2648 = vcmp.eq.s32.totalorder %v2584, 1
        %vm2649 = vcmp.eq.s32.totalorder %v2585, 1
        %vm2650 = vcmp.eq.s32.totalorder %v2586, 1
        %vm2651 = vcmp.eq.s32.totalorder %v2587, 1
        %vm2652 = vcmp.eq.s32.totalorder %v2588, 1
        %vm2653 = vcmp.eq.s32.totalorder %v2589, 1
        %vm2654 = vcmp.eq.s32.totalorder %v2590, 1
        %vm2655 = vcmp.eq.s32.totalorder %v2591, 1
        %vm2656 = vcmp.eq.s32.totalorder %v2592, 1
        %vm2657 = vcmp.eq.s32.totalorder %v2593, 1
        %vm2658 = vcmp.eq.s32.totalorder %v2594, 1
        %vm2659 = vcmp.eq.s32.totalorder %v2595, 1
        %vm2660 = vcmp.eq.s32.totalorder %v2596, 1
        %vm2661 = vcmp.eq.s32.totalorder %v2597, 1
        %vm2662 = vcmp.eq.s32.totalorder %v2598, 1
        %vm2663 = vcmp.eq.s32.totalorder %v2599, 1
        %vm2664 = vcmp.eq.s32.totalorder %v2600, 1
        %vm2665 = vcmp.eq.s32.totalorder %v2601, 1
        %vm2666 = vcmp.eq.s32.totalorder %v2602, 1
        %vm2667 = vcmp.eq.s32.totalorder %v2603, 1
        %vm2668 = vcmp.eq.s32.totalorder %v2604, 1
        %vm2669 = vcmp.eq.s32.totalorder %v2605, 1
        %vm2670 = vcmp.eq.s32.totalorder %v2606, 1
        %vm2671 = vcmp.eq.s32.totalorder %v2607, 1
        %vm2672 = vcmp.eq.s32.totalorder %v2608, 1
        %vm2673 = vcmp.eq.s32.totalorder %v2609, 1
        %vm2674 = vcmp.eq.s32.totalorder %v2610, 1
        %vm2675 = vcmp.eq.s32.totalorder %v2611, 1
        %vm2676 = vcmp.eq.s32.totalorder %v2612, 1
        %vm2677 = vcmp.eq.s32.totalorder %v2613, 1
        %vm2678 = vcmp.eq.s32.totalorder %v2614, 1
        %vm2679 = vcmp.eq.s32.totalorder %v2615, 1
        %vm2680 = vcmp.eq.s32.totalorder %v2616, 1
        %vm2681 = vcmp.eq.s32.totalorder %v2617, 1
        %vm2682 = vcmp.eq.s32.totalorder %v2618, 1
        %v2683 = vsel %vm2619, -1e+30, %v884
        %v2684 = vsel %vm2620, -1e+30, %v886
        %v2685 = vsel %vm2621, -1e+30, %v890
        %v2686 = vsel %vm2622, -1e+30, %v892
        %v2687 = vsel %vm2623, -1e+30, %v896
        %v2688 = vsel %vm2624, -1e+30, %v898
        %v2689 = vsel %vm2625, -1e+30, %v902
        %v2690 = vsel %vm2626, -1e+30, %v904
        %v2691 = vsel %vm2627, -1e+30, %v908
        %v2692 = vsel %vm2628, -1e+30, %v910
        %v2693 = vsel %vm2629, -1e+30, %v914
        %v2694 = vsel %vm2630, -1e+30, %v916
        %v2695 = vsel %vm2631, -1e+30, %v920
        %v2696 = vsel %vm2632, -1e+30, %v922
        %v2697 = vsel %vm2633, -1e+30, %v926
        %v2698 = vsel %vm2634, -1e+30, %v928
        %v2699 = vsel %vm2635, -1e+30, %v932
        %v2700 = vsel %vm2636, -1e+30, %v934
        %v2701 = vsel %vm2637, -1e+30, %v938
        %v2702 = vsel %vm2638, -1e+30, %v940
        %v2703 = vsel %vm2639, -1e+30, %v944
        %v2704 = vsel %vm2640, -1e+30, %v946
        %v2705 = vsel %vm2641, -1e+30, %v950
        %v2706 = vsel %vm2642, -1e+30, %v952
        %v2707 = vsel %vm2643, -1e+30, %v956
        %v2708 = vsel %vm2644, -1e+30, %v958
        %v2709 = vsel %vm2645, -1e+30, %v962
        %v2710 = vsel %vm2646, -1e+30, %v964
        %v2711 = vsel %vm2647, -1e+30, %v968
        %v2712 = vsel %vm2648, -1e+30, %v970
        %v2713 = vsel %vm2649, -1e+30, %v974
        %v2714 = vsel %vm2650, -1e+30, %v976
        %v2715 = vsel %vm2651, -1e+30, %v980
        %v2716 = vsel %vm2652, -1e+30, %v982
        %v2717 = vsel %vm2653, -1e+30, %v986
        %v2718 = vsel %vm2654, -1e+30, %v988
        %v2719 = vsel %vm2655, -1e+30, %v992
        %v2720 = vsel %vm2656, -1e+30, %v994
        %v2721 = vsel %vm2657, -1e+30, %v998
        %v2722 = vsel %vm2658, -1e+30, %v1000
        %v2723 = vsel %vm2659, -1e+30, %v1004
        %v2724 = vsel %vm2660, -1e+30, %v1006
        %v2725 = vsel %vm2661, -1e+30, %v1010
        %v2726 = vsel %vm2662, -1e+30, %v1012
        %v2727 = vsel %vm2663, -1e+30, %v1016
        %v2728 = vsel %vm2664, -1e+30, %v1018
        %v2729 = vsel %vm2665, -1e+30, %v1022
        %v2730 = vsel %vm2666, -1e+30, %v1024
        %v2731 = vsel %vm2667, -1e+30, %v1028
        %v2732 = vsel %vm2668, -1e+30, %v1030
        %v2733 = vsel %vm2669, -1e+30, %v1034
        %v2734 = vsel %vm2670, -1e+30, %v1036
        %v2735 = vsel %vm2671, -1e+30, %v1040
        %v2736 = vsel %vm2672, -1e+30, %v1042
        %v2737 = vsel %vm2673, -1e+30, %v1046
        %v2738 = vsel %vm2674, -1e+30, %v1048
        %v2739 = vsel %vm2675, -1e+30, %v1052
        %v2740 = vsel %vm2676, -1e+30, %v1054
        %v2741 = vsel %vm2677, -1e+30, %v1058
        %v2742 = vsel %vm2678, -1e+30, %v1060
        %v2743 = vsel %vm2679, -1e+30, %v1064
        %v2744 = vsel %vm2680, -1e+30, %v1066
        %v2745 = vsel %vm2681, -1e+30, %v1070
        %v2746 = vsel %vm2682, -1e+30, %v1072
        %v2747 = vsel %vm2619, -1e+30, %v1333
        %v2748 = vsel %vm2620, -1e+30, %v1335
        %v2749 = vsel %vm2621, -1e+30, %v1339
        %v2750 = vsel %vm2622, -1e+30, %v1341
        %v2751 = vsel %vm2623, -1e+30, %v1345
        %v2752 = vsel %vm2624, -1e+30, %v1347
        %v2753 = vsel %vm2625, -1e+30, %v1351
        %v2754 = vsel %vm2626, -1e+30, %v1353
        %v2755 = vsel %vm2627, -1e+30, %v1357
        %v2756 = vsel %vm2628, -1e+30, %v1359
        %v2757 = vsel %vm2629, -1e+30, %v1363
        %v2758 = vsel %vm2630, -1e+30, %v1365
        %v2759 = vsel %vm2631, -1e+30, %v1369
        %v2760 = vsel %vm2632, -1e+30, %v1371
        %v2761 = vsel %vm2633, -1e+30, %v1375
        %v2762 = vsel %vm2634, -1e+30, %v1377
        %v2763 = vsel %vm2635, -1e+30, %v1381
        %v2764 = vsel %vm2636, -1e+30, %v1383
        %v2765 = vsel %vm2637, -1e+30, %v1387
        %v2766 = vsel %vm2638, -1e+30, %v1389
        %v2767 = vsel %vm2639, -1e+30, %v1393
        %v2768 = vsel %vm2640, -1e+30, %v1395
        %v2769 = vsel %vm2641, -1e+30, %v1399
        %v2770 = vsel %vm2642, -1e+30, %v1401
        %v2771 = vsel %vm2643, -1e+30, %v1405
        %v2772 = vsel %vm2644, -1e+30, %v1407
        %v2773 = vsel %vm2645, -1e+30, %v1411
        %v2774 = vsel %vm2646, -1e+30, %v1413
        %v2775 = vsel %vm2647, -1e+30, %v1417
        %v2776 = vsel %vm2648, -1e+30, %v1419
        %v2777 = vsel %vm2649, -1e+30, %v1423
        %v2778 = vsel %vm2650, -1e+30, %v1425
        %v2779 = vsel %vm2651, -1e+30, %v1429
        %v2780 = vsel %vm2652, -1e+30, %v1431
        %v2781 = vsel %vm2653, -1e+30, %v1435
        %v2782 = vsel %vm2654, -1e+30, %v1437
        %v2783 = vsel %vm2655, -1e+30, %v1441
        %v2784 = vsel %vm2656, -1e+30, %v1443
        %v2785 = vsel %vm2657, -1e+30, %v1447
        %v2786 = vsel %vm2658, -1e+30, %v1449
        %v2787 = vsel %vm2659, -1e+30, %v1453
        %v2788 = vsel %vm2660, -1e+30, %v1455
        %v2789 = vsel %vm2661, -1e+30, %v1459
        %v2790 = vsel %vm2662, -1e+30, %v1461
        %v2791 = vsel %vm2663, -1e+30, %v1465
        %v2792 = vsel %vm2664, -1e+30, %v1467
        %v2793 = vsel %vm2665, -1e+30, %v1471
        %v2794 = vsel %vm2666, -1e+30, %v1473
        %v2795 = vsel %vm2667, -1e+30, %v1477
        %v2796 = vsel %vm2668, -1e+30, %v1479
        %v2797 = vsel %vm2669, -1e+30, %v1483
        %v2798 = vsel %vm2670, -1e+30, %v1485
        %v2799 = vsel %vm2671, -1e+30, %v1489
        %v2800 = vsel %vm2672, -1e+30, %v1491
        %v2801 = vsel %vm2673, -1e+30, %v1495
        %v2802 = vsel %vm2674, -1e+30, %v1497
        %v2803 = vsel %vm2675, -1e+30, %v1501
        %v2804 = vsel %vm2676, -1e+30, %v1503
        %v2805 = vsel %vm2677, -1e+30, %v1507
        %v2806 = vsel %vm2678, -1e+30, %v1509
        %v2807 = vsel %vm2679, -1e+30, %v1513
        %v2808 = vsel %vm2680, -1e+30, %v1515
        %v2809 = vsel %vm2681, -1e+30, %v1519
        %v2810 = vsel %vm2682, -1e+30, %v1521
        %v2811 = vsel %vm2619, -1e+30, %v1782
        %v2812 = vsel %vm2620, -1e+30, %v1784
        %v2813 = vsel %vm2621, -1e+30, %v1788
        %v2814 = vsel %vm2622, -1e+30, %v1790
        %v2815 = vsel %vm2623, -1e+30, %v1794
        %v2816 = vsel %vm2624, -1e+30, %v1796
        %v2817 = vsel %vm2625, -1e+30, %v1800
        %v2818 = vsel %vm2626, -1e+30, %v1802
        %v2819 = vsel %vm2627, -1e+30, %v1806
        %v2820 = vsel %vm2628, -1e+30, %v1808
        %v2821 = vsel %vm2629, -1e+30, %v1812
        %v2822 = vsel %vm2630, -1e+30, %v1814
        %v2823 = vsel %vm2631, -1e+30, %v1818
        %v2824 = vsel %vm2632, -1e+30, %v1820
        %v2825 = vsel %vm2633, -1e+30, %v1824
        %v2826 = vsel %vm2634, -1e+30, %v1826
        %v2827 = vsel %vm2635, -1e+30, %v1830
        %v2828 = vsel %vm2636, -1e+30, %v1832
        %v2829 = vsel %vm2637, -1e+30, %v1836
        %v2830 = vsel %vm2638, -1e+30, %v1838
        %v2831 = vsel %vm2639, -1e+30, %v1842
        %v2832 = vsel %vm2640, -1e+30, %v1844
        %v2833 = vsel %vm2641, -1e+30, %v1848
        %v2834 = vsel %vm2642, -1e+30, %v1850
        %v2835 = vsel %vm2643, -1e+30, %v1854
        %v2836 = vsel %vm2644, -1e+30, %v1856
        %v2837 = vsel %vm2645, -1e+30, %v1860
        %v2838 = vsel %vm2646, -1e+30, %v1862
        %v2839 = vsel %vm2647, -1e+30, %v1866
        %v2840 = vsel %vm2648, -1e+30, %v1868
        %v2841 = vsel %vm2649, -1e+30, %v1872
        %v2842 = vsel %vm2650, -1e+30, %v1874
        %v2843 = vsel %vm2651, -1e+30, %v1878
        %v2844 = vsel %vm2652, -1e+30, %v1880
        %v2845 = vsel %vm2653, -1e+30, %v1884
        %v2846 = vsel %vm2654, -1e+30, %v1886
        %v2847 = vsel %vm2655, -1e+30, %v1890
        %v2848 = vsel %vm2656, -1e+30, %v1892
        %v2849 = vsel %vm2657, -1e+30, %v1896
        %v2850 = vsel %vm2658, -1e+30, %v1898
        %v2851 = vsel %vm2659, -1e+30, %v1902
        %v2852 = vsel %vm2660, -1e+30, %v1904
        %v2853 = vsel %vm2661, -1e+30, %v1908
        %v2854 = vsel %vm2662, -1e+30, %v1910
        %v2855 = vsel %vm2663, -1e+30, %v1914
        %v2856 = vsel %vm2664, -1e+30, %v1916
        %v2857 = vsel %vm2665, -1e+30, %v1920
        %v2858 = vsel %vm2666, -1e+30, %v1922
        %v2859 = vsel %vm2667, -1e+30, %v1926
        %v2860 = vsel %vm2668, -1e+30, %v1928
        %v2861 = vsel %vm2669, -1e+30, %v1932
        %v2862 = vsel %vm2670, -1e+30, %v1934
        %v2863 = vsel %vm2671, -1e+30, %v1938
        %v2864 = vsel %vm2672, -1e+30, %v1940
        %v2865 = vsel %vm2673, -1e+30, %v1944
        %v2866 = vsel %vm2674, -1e+30, %v1946
        %v2867 = vsel %vm2675, -1e+30, %v1950
        %v2868 = vsel %vm2676, -1e+30, %v1952
        %v2869 = vsel %vm2677, -1e+30, %v1956
        %v2870 = vsel %vm2678, -1e+30, %v1958
        %v2871 = vsel %vm2679, -1e+30, %v1962
        %v2872 = vsel %vm2680, -1e+30, %v1964
        %v2873 = vsel %vm2681, -1e+30, %v1968
        %v2874 = vsel %vm2682, -1e+30, %v1970
        %v2875 = vsel %vm2619, -1e+30, %v2231
        %v2876 = vsel %vm2620, -1e+30, %v2233
        %v2877 = vsel %vm2621, -1e+30, %v2237
        %v2878 = vsel %vm2622, -1e+30, %v2239
        %v2879 = vsel %vm2623, -1e+30, %v2243
        %v2880 = vsel %vm2624, -1e+30, %v2245
        %v2881 = vsel %vm2625, -1e+30, %v2249
        %v2882 = vsel %vm2626, -1e+30, %v2251
        %v2883 = vsel %vm2627, -1e+30, %v2255
        %v2884 = vsel %vm2628, -1e+30, %v2257
        %v2885 = vsel %vm2629, -1e+30, %v2261
        %v2886 = vsel %vm2630, -1e+30, %v2263
        %v2887 = vsel %vm2631, -1e+30, %v2267
        %v2888 = vsel %vm2632, -1e+30, %v2269
        %v2889 = vsel %vm2633, -1e+30, %v2273
        %v2890 = vsel %vm2634, -1e+30, %v2275
        %v2891 = vsel %vm2635, -1e+30, %v2279
        %v2892 = vsel %vm2636, -1e+30, %v2281
        %v2893 = vsel %vm2637, -1e+30, %v2285
        %v2894 = vsel %vm2638, -1e+30, %v2287
        %v2895 = vsel %vm2639, -1e+30, %v2291
        %v2896 = vsel %vm2640, -1e+30, %v2293
        %v2897 = vsel %vm2641, -1e+30, %v2297
        %v2898 = vsel %vm2642, -1e+30, %v2299
        %v2899 = vsel %vm2643, -1e+30, %v2303
        %v2900 = vsel %vm2644, -1e+30, %v2305
        %v2901 = vsel %vm2645, -1e+30, %v2309
        %v2902 = vsel %vm2646, -1e+30, %v2311
        %v2903 = vsel %vm2647, -1e+30, %v2315
        %v2904 = vsel %vm2648, -1e+30, %v2317
        %v2905 = vsel %vm2649, -1e+30, %v2321
        %v2906 = vsel %vm2650, -1e+30, %v2323
        %v2907 = vsel %vm2651, -1e+30, %v2327
        %v2908 = vsel %vm2652, -1e+30, %v2329
        %v2909 = vsel %vm2653, -1e+30, %v2333
        %v2910 = vsel %vm2654, -1e+30, %v2335
        %v2911 = vsel %vm2655, -1e+30, %v2339
        %v2912 = vsel %vm2656, -1e+30, %v2341
        %v2913 = vsel %vm2657, -1e+30, %v2345
        %v2914 = vsel %vm2658, -1e+30, %v2347
        %v2915 = vsel %vm2659, -1e+30, %v2351
        %v2916 = vsel %vm2660, -1e+30, %v2353
        %v2917 = vsel %vm2661, -1e+30, %v2357
        %v2918 = vsel %vm2662, -1e+30, %v2359
        %v2919 = vsel %vm2663, -1e+30, %v2363
        %v2920 = vsel %vm2664, -1e+30, %v2365
        %v2921 = vsel %vm2665, -1e+30, %v2369
        %v2922 = vsel %vm2666, -1e+30, %v2371
        %v2923 = vsel %vm2667, -1e+30, %v2375
        %v2924 = vsel %vm2668, -1e+30, %v2377
        %v2925 = vsel %vm2669, -1e+30, %v2381
        %v2926 = vsel %vm2670, -1e+30, %v2383
        %v2927 = vsel %vm2671, -1e+30, %v2387
        %v2928 = vsel %vm2672, -1e+30, %v2389
        %v2929 = vsel %vm2673, -1e+30, %v2393
        %v2930 = vsel %vm2674, -1e+30, %v2395
        %v2931 = vsel %vm2675, -1e+30, %v2399
        %v2932 = vsel %vm2676, -1e+30, %v2401
        %v2933 = vsel %vm2677, -1e+30, %v2405
        %v2934 = vsel %vm2678, -1e+30, %v2407
        %v2935 = vsel %vm2679, -1e+30, %v2411
        %v2936 = vsel %vm2680, -1e+30, %v2413
        %v2937 = vsel %vm2681, -1e+30, %v2417
        %v2938 = vsel %vm2682, -1e+30, %v2419
        %v2939 = vmax.f32 %v2683, %v2684
        %2940 = vmax.xlane.f32.xlu0 %v2939
        %v2941 = vpop.xlane.xlu0 %2940
        %v2942 = vmax.f32 %v2685, %v2686
        %2943 = vmax.xlane.f32.xlu0 %v2942
        %v2944 = vpop.xlane.xlu0 %2943
        %v2945 = vmax.f32 %v2687, %v2688
        %2946 = vmax.xlane.f32.xlu0 %v2945
        %v2947 = vpop.xlane.xlu0 %2946
        %v2948 = vmax.f32 %v2689, %v2690
        %2949 = vmax.xlane.f32.xlu0 %v2948
        %v2950 = vpop.xlane.xlu0 %2949
        %v2951 = vmax.f32 %v2691, %v2692
        %2952 = vmax.xlane.f32.xlu0 %v2951
        %v2953 = vpop.xlane.xlu0 %2952
        %v2954 = vmax.f32 %v2693, %v2694
        %2955 = vmax.xlane.f32.xlu0 %v2954
        %v2956 = vpop.xlane.xlu0 %2955
        %v2957 = vmax.f32 %v2695, %v2696
        %2958 = vmax.xlane.f32.xlu0 %v2957
        %v2959 = vpop.xlane.xlu0 %2958
        %v2960 = vmax.f32 %v2697, %v2698
        %2961 = vmax.xlane.f32.xlu0 %v2960
        %v2962 = vpop.xlane.xlu0 %2961
        %v2963 = vmax.f32 %v2699, %v2700
        %2964 = vmax.xlane.f32.xlu0 %v2963
        %v2965 = vpop.xlane.xlu0 %2964
        %v2966 = vmax.f32 %v2701, %v2702
        %2967 = vmax.xlane.f32.xlu0 %v2966
        %v2968 = vpop.xlane.xlu0 %2967
        %v2969 = vmax.f32 %v2703, %v2704
        %2970 = vmax.xlane.f32.xlu0 %v2969
        %v2971 = vpop.xlane.xlu0 %2970
        %v2972 = vmax.f32 %v2705, %v2706
        %2973 = vmax.xlane.f32.xlu0 %v2972
        %v2974 = vpop.xlane.xlu0 %2973
        %v2975 = vmax.f32 %v2707, %v2708
        %2976 = vmax.xlane.f32.xlu0 %v2975
        %v2977 = vpop.xlane.xlu0 %2976
        %v2978 = vmax.f32 %v2709, %v2710
        %2979 = vmax.xlane.f32.xlu0 %v2978
        %v2980 = vpop.xlane.xlu0 %2979
        %v2981 = vmax.f32 %v2711, %v2712
        %2982 = vmax.xlane.f32.xlu0 %v2981
        %v2983 = vpop.xlane.xlu0 %2982
        %v2984 = vmax.f32 %v2713, %v2714
        %2985 = vmax.xlane.f32.xlu0 %v2984
        %v2986 = vpop.xlane.xlu0 %2985
        %v2987 = vmax.f32 %v2715, %v2716
        %2988 = vmax.xlane.f32.xlu0 %v2987
        %v2989 = vpop.xlane.xlu0 %2988
        %v2990 = vmax.f32 %v2717, %v2718
        %2991 = vmax.xlane.f32.xlu0 %v2990
        %v2992 = vpop.xlane.xlu0 %2991
        %v2993 = vmax.f32 %v2719, %v2720
        %2994 = vmax.xlane.f32.xlu0 %v2993
        %v2995 = vpop.xlane.xlu0 %2994
        %v2996 = vmax.f32 %v2721, %v2722
        %2997 = vmax.xlane.f32.xlu0 %v2996
        %v2998 = vpop.xlane.xlu0 %2997
        %v2999 = vmax.f32 %v2723, %v2724
        %3000 = vmax.xlane.f32.xlu0 %v2999
        %v3001 = vpop.xlane.xlu0 %3000
        %v3002 = vmax.f32 %v2725, %v2726
        %3003 = vmax.xlane.f32.xlu0 %v3002
        %v3004 = vpop.xlane.xlu0 %3003
        %v3005 = vmax.f32 %v2727, %v2728
        %3006 = vmax.xlane.f32.xlu0 %v3005
        %v3007 = vpop.xlane.xlu0 %3006
        %v3008 = vmax.f32 %v2729, %v2730
        %3009 = vmax.xlane.f32.xlu0 %v3008
        %v3010 = vpop.xlane.xlu0 %3009
        %v3011 = vmax.f32 %v2731, %v2732
        %3012 = vmax.xlane.f32.xlu0 %v3011
        %v3013 = vpop.xlane.xlu0 %3012
        %v3014 = vmax.f32 %v2733, %v2734
        %3015 = vmax.xlane.f32.xlu0 %v3014
        %v3016 = vpop.xlane.xlu0 %3015
        %v3017 = vmax.f32 %v2735, %v2736
        %3018 = vmax.xlane.f32.xlu0 %v3017
        %v3019 = vpop.xlane.xlu0 %3018
        %v3020 = vmax.f32 %v2737, %v2738
        %3021 = vmax.xlane.f32.xlu0 %v3020
        %v3022 = vpop.xlane.xlu0 %3021
        %v3023 = vmax.f32 %v2739, %v2740
        %3024 = vmax.xlane.f32.xlu0 %v3023
        %v3025 = vpop.xlane.xlu0 %3024
        %v3026 = vmax.f32 %v2741, %v2742
        %3027 = vmax.xlane.f32.xlu0 %v3026
        %v3028 = vpop.xlane.xlu0 %3027
        %v3029 = vmax.f32 %v2743, %v2744
        %3030 = vmax.xlane.f32.xlu0 %v3029
        %v3031 = vpop.xlane.xlu0 %3030
        %v3032 = vmax.f32 %v2745, %v2746
        %3033 = vmax.xlane.f32.xlu0 %v3032
        %v3034 = vpop.xlane.xlu0 %3033
        %v3035 = vmax.f32 %v2747, %v2748
        %3036 = vmax.xlane.f32.xlu0 %v3035
        %v3037 = vpop.xlane.xlu0 %3036
        %v3038 = vmax.f32 %v2749, %v2750
        %3039 = vmax.xlane.f32.xlu0 %v3038
        %v3040 = vpop.xlane.xlu0 %3039
        %v3041 = vmax.f32 %v2751, %v2752
        %3042 = vmax.xlane.f32.xlu0 %v3041
        %v3043 = vpop.xlane.xlu0 %3042
        %v3044 = vmax.f32 %v2753, %v2754
        %3045 = vmax.xlane.f32.xlu0 %v3044
        %v3046 = vpop.xlane.xlu0 %3045
        %v3047 = vmax.f32 %v2755, %v2756
        %3048 = vmax.xlane.f32.xlu0 %v3047
        %v3049 = vpop.xlane.xlu0 %3048
        %v3050 = vmax.f32 %v2757, %v2758
        %3051 = vmax.xlane.f32.xlu0 %v3050
        %v3052 = vpop.xlane.xlu0 %3051
        %v3053 = vmax.f32 %v2759, %v2760
        %3054 = vmax.xlane.f32.xlu0 %v3053
        %v3055 = vpop.xlane.xlu0 %3054
        %v3056 = vmax.f32 %v2761, %v2762
        %3057 = vmax.xlane.f32.xlu0 %v3056
        %v3058 = vpop.xlane.xlu0 %3057
        %v3059 = vmax.f32 %v2763, %v2764
        %3060 = vmax.xlane.f32.xlu0 %v3059
        %v3061 = vpop.xlane.xlu0 %3060
        %v3062 = vmax.f32 %v2765, %v2766
        %3063 = vmax.xlane.f32.xlu0 %v3062
        %v3064 = vpop.xlane.xlu0 %3063
        %v3065 = vmax.f32 %v2767, %v2768
        %3066 = vmax.xlane.f32.xlu0 %v3065
        %v3067 = vpop.xlane.xlu0 %3066
        %v3068 = vmax.f32 %v2769, %v2770
        %3069 = vmax.xlane.f32.xlu0 %v3068
        %v3070 = vpop.xlane.xlu0 %3069
        %v3071 = vmax.f32 %v2771, %v2772
        %3072 = vmax.xlane.f32.xlu0 %v3071
        %v3073 = vpop.xlane.xlu0 %3072
        %v3074 = vmax.f32 %v2773, %v2774
        %3075 = vmax.xlane.f32.xlu0 %v3074
        %v3076 = vpop.xlane.xlu0 %3075
        %v3077 = vmax.f32 %v2775, %v2776
        %3078 = vmax.xlane.f32.xlu0 %v3077
        %v3079 = vpop.xlane.xlu0 %3078
        %v3080 = vmax.f32 %v2777, %v2778
        %3081 = vmax.xlane.f32.xlu0 %v3080
        %v3082 = vpop.xlane.xlu0 %3081
        %v3083 = vmax.f32 %v2779, %v2780
        %3084 = vmax.xlane.f32.xlu0 %v3083
        %v3085 = vpop.xlane.xlu0 %3084
        %v3086 = vmax.f32 %v2781, %v2782
        %3087 = vmax.xlane.f32.xlu0 %v3086
        %v3088 = vpop.xlane.xlu0 %3087
        %v3089 = vmax.f32 %v2783, %v2784
        %3090 = vmax.xlane.f32.xlu0 %v3089
        %v3091 = vpop.xlane.xlu0 %3090
        %v3092 = vmax.f32 %v2785, %v2786
        %3093 = vmax.xlane.f32.xlu0 %v3092
        %v3094 = vpop.xlane.xlu0 %3093
        %v3095 = vmax.f32 %v2787, %v2788
        %3096 = vmax.xlane.f32.xlu0 %v3095
        %v3097 = vpop.xlane.xlu0 %3096
        %v3098 = vmax.f32 %v2789, %v2790
        %3099 = vmax.xlane.f32.xlu0 %v3098
        %v3100 = vpop.xlane.xlu0 %3099
        %v3101 = vmax.f32 %v2791, %v2792
        %3102 = vmax.xlane.f32.xlu0 %v3101
        %v3103 = vpop.xlane.xlu0 %3102
        %v3104 = vmax.f32 %v2793, %v2794
        %3105 = vmax.xlane.f32.xlu0 %v3104
        %v3106 = vpop.xlane.xlu0 %3105
        %v3107 = vmax.f32 %v2795, %v2796
        %3108 = vmax.xlane.f32.xlu0 %v3107
        %v3109 = vpop.xlane.xlu0 %3108
        %v3110 = vmax.f32 %v2797, %v2798
        %3111 = vmax.xlane.f32.xlu0 %v3110
        %v3112 = vpop.xlane.xlu0 %3111
        %v3113 = vmax.f32 %v2799, %v2800
        %3114 = vmax.xlane.f32.xlu0 %v3113
        %v3115 = vpop.xlane.xlu0 %3114
        %v3116 = vmax.f32 %v2801, %v2802
        %3117 = vmax.xlane.f32.xlu0 %v3116
        %v3118 = vpop.xlane.xlu0 %3117
        %v3119 = vmax.f32 %v2803, %v2804
        %3120 = vmax.xlane.f32.xlu0 %v3119
        %v3121 = vpop.xlane.xlu0 %3120
        %v3122 = vmax.f32 %v2805, %v2806
        %3123 = vmax.xlane.f32.xlu0 %v3122
        %v3124 = vpop.xlane.xlu0 %3123
        %v3125 = vmax.f32 %v2807, %v2808
        %3126 = vmax.xlane.f32.xlu0 %v3125
        %v3127 = vpop.xlane.xlu0 %3126
        %v3128 = vmax.f32 %v2809, %v2810
        %3129 = vmax.xlane.f32.xlu0 %v3128
        %v3130 = vpop.xlane.xlu0 %3129
        %v3131 = vmax.f32 %v2811, %v2812
        %3132 = vmax.xlane.f32.xlu0 %v3131
        %v3133 = vpop.xlane.xlu0 %3132
        %v3134 = vmax.f32 %v2813, %v2814
        %3135 = vmax.xlane.f32.xlu0 %v3134
        %v3136 = vpop.xlane.xlu0 %3135
        %v3137 = vmax.f32 %v2815, %v2816
        %3138 = vmax.xlane.f32.xlu0 %v3137
        %v3139 = vpop.xlane.xlu0 %3138
        %v3140 = vmax.f32 %v2817, %v2818
        %3141 = vmax.xlane.f32.xlu0 %v3140
        %v3142 = vpop.xlane.xlu0 %3141
        %v3143 = vmax.f32 %v2819, %v2820
        %3144 = vmax.xlane.f32.xlu0 %v3143
        %v3145 = vpop.xlane.xlu0 %3144
        %v3146 = vmax.f32 %v2821, %v2822
        %3147 = vmax.xlane.f32.xlu0 %v3146
        %v3148 = vpop.xlane.xlu0 %3147
        %v3149 = vmax.f32 %v2823, %v2824
        %3150 = vmax.xlane.f32.xlu0 %v3149
        %v3151 = vpop.xlane.xlu0 %3150
        %v3152 = vmax.f32 %v2825, %v2826
        %3153 = vmax.xlane.f32.xlu0 %v3152
        %v3154 = vpop.xlane.xlu0 %3153
        %v3155 = vmax.f32 %v2827, %v2828
        %3156 = vmax.xlane.f32.xlu0 %v3155
        %v3157 = vpop.xlane.xlu0 %3156
        %v3158 = vmax.f32 %v2829, %v2830
        %3159 = vmax.xlane.f32.xlu0 %v3158
        %v3160 = vpop.xlane.xlu0 %3159
        %v3161 = vmax.f32 %v2831, %v2832
        %3162 = vmax.xlane.f32.xlu0 %v3161
        %v3163 = vpop.xlane.xlu0 %3162
        %v3164 = vmax.f32 %v2833, %v2834
        %3165 = vmax.xlane.f32.xlu0 %v3164
        %v3166 = vpop.xlane.xlu0 %3165
        %v3167 = vmax.f32 %v2835, %v2836
        %3168 = vmax.xlane.f32.xlu0 %v3167
        %v3169 = vpop.xlane.xlu0 %3168
        %v3170 = vmax.f32 %v2837, %v2838
        %3171 = vmax.xlane.f32.xlu0 %v3170
        %v3172 = vpop.xlane.xlu0 %3171
        %v3173 = vmax.f32 %v2839, %v2840
        %3174 = vmax.xlane.f32.xlu0 %v3173
        %v3175 = vpop.xlane.xlu0 %3174
        %v3176 = vmax.f32 %v2841, %v2842
        %3177 = vmax.xlane.f32.xlu0 %v3176
        %v3178 = vpop.xlane.xlu0 %3177
        %v3179 = vmax.f32 %v2843, %v2844
        %3180 = vmax.xlane.f32.xlu0 %v3179
        %v3181 = vpop.xlane.xlu0 %3180
        %v3182 = vmax.f32 %v2845, %v2846
        %3183 = vmax.xlane.f32.xlu0 %v3182
        %v3184 = vpop.xlane.xlu0 %3183
        %v3185 = vmax.f32 %v2847, %v2848
        %3186 = vmax.xlane.f32.xlu0 %v3185
        %v3187 = vpop.xlane.xlu0 %3186
        %v3188 = vmax.f32 %v2849, %v2850
        %3189 = vmax.xlane.f32.xlu0 %v3188
        %v3190 = vpop.xlane.xlu0 %3189
        %v3191 = vmax.f32 %v2851, %v2852
        %3192 = vmax.xlane.f32.xlu0 %v3191
        %v3193 = vpop.xlane.xlu0 %3192
        %v3194 = vmax.f32 %v2853, %v2854
        %3195 = vmax.xlane.f32.xlu0 %v3194
        %v3196 = vpop.xlane.xlu0 %3195
        %v3197 = vmax.f32 %v2855, %v2856
        %3198 = vmax.xlane.f32.xlu0 %v3197
        %v3199 = vpop.xlane.xlu0 %3198
        %v3200 = vmax.f32 %v2857, %v2858
        %3201 = vmax.xlane.f32.xlu0 %v3200
        %v3202 = vpop.xlane.xlu0 %3201
        %v3203 = vmax.f32 %v2859, %v2860
        %3204 = vmax.xlane.f32.xlu0 %v3203
        %v3205 = vpop.xlane.xlu0 %3204
        %v3206 = vmax.f32 %v2861, %v2862
        %3207 = vmax.xlane.f32.xlu0 %v3206
        %v3208 = vpop.xlane.xlu0 %3207
        %v3209 = vmax.f32 %v2863, %v2864
        %3210 = vmax.xlane.f32.xlu0 %v3209
        %v3211 = vpop.xlane.xlu0 %3210
        %v3212 = vmax.f32 %v2865, %v2866
        %3213 = vmax.xlane.f32.xlu0 %v3212
        %v3214 = vpop.xlane.xlu0 %3213
        %v3215 = vmax.f32 %v2867, %v2868
        %3216 = vmax.xlane.f32.xlu0 %v3215
        %v3217 = vpop.xlane.xlu0 %3216
        %v3218 = vmax.f32 %v2869, %v2870
        %3219 = vmax.xlane.f32.xlu0 %v3218
        %v3220 = vpop.xlane.xlu0 %3219
        %v3221 = vmax.f32 %v2871, %v2872
        %3222 = vmax.xlane.f32.xlu0 %v3221
        %v3223 = vpop.xlane.xlu0 %3222
        %v3224 = vmax.f32 %v2873, %v2874
        %3225 = vmax.xlane.f32.xlu0 %v3224
        %v3226 = vpop.xlane.xlu0 %3225
        %v3227 = vmax.f32 %v2875, %v2876
        %3228 = vmax.xlane.f32.xlu0 %v3227
        %v3229 = vpop.xlane.xlu0 %3228
        %v3230 = vmax.f32 %v2877, %v2878
        %3231 = vmax.xlane.f32.xlu0 %v3230
        %v3232 = vpop.xlane.xlu0 %3231
        %v3233 = vmax.f32 %v2879, %v2880
        %3234 = vmax.xlane.f32.xlu0 %v3233
        %v3235 = vpop.xlane.xlu0 %3234
        %v3236 = vmax.f32 %v2881, %v2882
        %3237 = vmax.xlane.f32.xlu0 %v3236
        %v3238 = vpop.xlane.xlu0 %3237
        %v3239 = vmax.f32 %v2883, %v2884
        %3240 = vmax.xlane.f32.xlu0 %v3239
        %v3241 = vpop.xlane.xlu0 %3240
        %v3242 = vmax.f32 %v2885, %v2886
        %3243 = vmax.xlane.f32.xlu0 %v3242
        %v3244 = vpop.xlane.xlu0 %3243
        %v3245 = vmax.f32 %v2887, %v2888
        %3246 = vmax.xlane.f32.xlu0 %v3245
        %v3247 = vpop.xlane.xlu0 %3246
        %v3248 = vmax.f32 %v2889, %v2890
        %3249 = vmax.xlane.f32.xlu0 %v3248
        %v3250 = vpop.xlane.xlu0 %3249
        %v3251 = vmax.f32 %v2891, %v2892
        %3252 = vmax.xlane.f32.xlu0 %v3251
        %v3253 = vpop.xlane.xlu0 %3252
        %v3254 = vmax.f32 %v2893, %v2894
        %3255 = vmax.xlane.f32.xlu0 %v3254
        %v3256 = vpop.xlane.xlu0 %3255
        %v3257 = vmax.f32 %v2895, %v2896
        %3258 = vmax.xlane.f32.xlu0 %v3257
        %v3259 = vpop.xlane.xlu0 %3258
        %v3260 = vmax.f32 %v2897, %v2898
        %3261 = vmax.xlane.f32.xlu0 %v3260
        %v3262 = vpop.xlane.xlu0 %3261
        %v3263 = vmax.f32 %v2899, %v2900
        %3264 = vmax.xlane.f32.xlu0 %v3263
        %v3265 = vpop.xlane.xlu0 %3264
        %v3266 = vmax.f32 %v2901, %v2902
        %3267 = vmax.xlane.f32.xlu0 %v3266
        %v3268 = vpop.xlane.xlu0 %3267
        %v3269 = vmax.f32 %v2903, %v2904
        %3270 = vmax.xlane.f32.xlu0 %v3269
        %v3271 = vpop.xlane.xlu0 %3270
        %v3272 = vmax.f32 %v2905, %v2906
        %3273 = vmax.xlane.f32.xlu0 %v3272
        %v3274 = vpop.xlane.xlu0 %3273
        %v3275 = vmax.f32 %v2907, %v2908
        %3276 = vmax.xlane.f32.xlu0 %v3275
        %v3277 = vpop.xlane.xlu0 %3276
        %v3278 = vmax.f32 %v2909, %v2910
        %3279 = vmax.xlane.f32.xlu0 %v3278
        %v3280 = vpop.xlane.xlu0 %3279
        %v3281 = vmax.f32 %v2911, %v2912
        %3282 = vmax.xlane.f32.xlu0 %v3281
        %v3283 = vpop.xlane.xlu0 %3282
        %v3284 = vmax.f32 %v2913, %v2914
        %3285 = vmax.xlane.f32.xlu0 %v3284
        %v3286 = vpop.xlane.xlu0 %3285
        %v3287 = vmax.f32 %v2915, %v2916
        %3288 = vmax.xlane.f32.xlu0 %v3287
        %v3289 = vpop.xlane.xlu0 %3288
        %v3290 = vmax.f32 %v2917, %v2918
        %3291 = vmax.xlane.f32.xlu0 %v3290
        %v3292 = vpop.xlane.xlu0 %3291
        %v3293 = vmax.f32 %v2919, %v2920
        %3294 = vmax.xlane.f32.xlu0 %v3293
        %v3295 = vpop.xlane.xlu0 %3294
        %v3296 = vmax.f32 %v2921, %v2922
        %3297 = vmax.xlane.f32.xlu0 %v3296
        %v3298 = vpop.xlane.xlu0 %3297
        %v3299 = vmax.f32 %v2923, %v2924
        %3300 = vmax.xlane.f32.xlu0 %v3299
        %v3301 = vpop.xlane.xlu0 %3300
        %v3302 = vmax.f32 %v2925, %v2926
        %3303 = vmax.xlane.f32.xlu0 %v3302
        %v3304 = vpop.xlane.xlu0 %3303
        %v3305 = vmax.f32 %v2927, %v2928
        %3306 = vmax.xlane.f32.xlu0 %v3305
        %v3307 = vpop.xlane.xlu0 %3306
        %v3308 = vmax.f32 %v2929, %v2930
        %3309 = vmax.xlane.f32.xlu0 %v3308
        %v3310 = vpop.xlane.xlu0 %3309
        %v3311 = vmax.f32 %v2931, %v2932
        %3312 = vmax.xlane.f32.xlu0 %v3311
        %v3313 = vpop.xlane.xlu0 %3312
        %v3314 = vmax.f32 %v2933, %v2934
        %3315 = vmax.xlane.f32.xlu0 %v3314
        %v3316 = vpop.xlane.xlu0 %3315
        %v3317 = vmax.f32 %v2935, %v2936
        %3318 = vmax.xlane.f32.xlu0 %v3317
        %v3319 = vpop.xlane.xlu0 %3318
        %v3320 = vmax.f32 %v2937, %v2938
        %3321 = vmax.xlane.f32.xlu0 %v3320
        %v3322 = vpop.xlane.xlu0 %3321
        %v3323 = vsub.f32 %v2683, %v2941
        %v3324 = vsub.f32 %v2684, %v2941
        %v3325 = vsub.f32 %v2685, %v2944
        %v3326 = vsub.f32 %v2686, %v2944
        %v3327 = vsub.f32 %v2687, %v2947
        %v3328 = vsub.f32 %v2688, %v2947
        %v3329 = vsub.f32 %v2689, %v2950
        %v3330 = vsub.f32 %v2690, %v2950
        %v3331 = vsub.f32 %v2691, %v2953
        %v3332 = vsub.f32 %v2692, %v2953
        %v3333 = vsub.f32 %v2693, %v2956
        %v3334 = vsub.f32 %v2694, %v2956
        %v3335 = vsub.f32 %v2695, %v2959
        %v3336 = vsub.f32 %v2696, %v2959
        %v3337 = vsub.f32 %v2697, %v2962
        %v3338 = vsub.f32 %v2698, %v2962
        %v3339 = vsub.f32 %v2699, %v2965
        %v3340 = vsub.f32 %v2700, %v2965
        %v3341 = vsub.f32 %v2701, %v2968
        %v3342 = vsub.f32 %v2702, %v2968
        %v3343 = vsub.f32 %v2703, %v2971
        %v3344 = vsub.f32 %v2704, %v2971
        %v3345 = vsub.f32 %v2705, %v2974
        %v3346 = vsub.f32 %v2706, %v2974
        %v3347 = vsub.f32 %v2707, %v2977
        %v3348 = vsub.f32 %v2708, %v2977
        %v3349 = vsub.f32 %v2709, %v2980
        %v3350 = vsub.f32 %v2710, %v2980
        %v3351 = vsub.f32 %v2711, %v2983
        %v3352 = vsub.f32 %v2712, %v2983
        %v3353 = vsub.f32 %v2713, %v2986
        %v3354 = vsub.f32 %v2714, %v2986
        %v3355 = vsub.f32 %v2715, %v2989
        %v3356 = vsub.f32 %v2716, %v2989
        %v3357 = vsub.f32 %v2717, %v2992
        %v3358 = vsub.f32 %v2718, %v2992
        %v3359 = vsub.f32 %v2719, %v2995
        %v3360 = vsub.f32 %v2720, %v2995
        %v3361 = vsub.f32 %v2721, %v2998
        %v3362 = vsub.f32 %v2722, %v2998
        %v3363 = vsub.f32 %v2723, %v3001
        %v3364 = vsub.f32 %v2724, %v3001
        %v3365 = vsub.f32 %v2725, %v3004
        %v3366 = vsub.f32 %v2726, %v3004
        %v3367 = vsub.f32 %v2727, %v3007
        %v3368 = vsub.f32 %v2728, %v3007
        %v3369 = vsub.f32 %v2729, %v3010
        %v3370 = vsub.f32 %v2730, %v3010
        %v3371 = vsub.f32 %v2731, %v3013
        %v3372 = vsub.f32 %v2732, %v3013
        %v3373 = vsub.f32 %v2733, %v3016
        %v3374 = vsub.f32 %v2734, %v3016
        %v3375 = vsub.f32 %v2735, %v3019
        %v3376 = vsub.f32 %v2736, %v3019
        %v3377 = vsub.f32 %v2737, %v3022
        %v3378 = vsub.f32 %v2738, %v3022
        %v3379 = vsub.f32 %v2739, %v3025
        %v3380 = vsub.f32 %v2740, %v3025
        %v3381 = vsub.f32 %v2741, %v3028
        %v3382 = vsub.f32 %v2742, %v3028
        %v3383 = vsub.f32 %v2743, %v3031
        %v3384 = vsub.f32 %v2744, %v3031
        %v3385 = vsub.f32 %v2745, %v3034
        %v3386 = vsub.f32 %v2746, %v3034
        %v3387 = vsub.f32 %v2747, %v3037
        %v3388 = vsub.f32 %v2748, %v3037
        %v3389 = vsub.f32 %v2749, %v3040
        %v3390 = vsub.f32 %v2750, %v3040
        %v3391 = vsub.f32 %v2751, %v3043
        %v3392 = vsub.f32 %v2752, %v3043
        %v3393 = vsub.f32 %v2753, %v3046
        %v3394 = vsub.f32 %v2754, %v3046
        %v3395 = vsub.f32 %v2755, %v3049
        %v3396 = vsub.f32 %v2756, %v3049
        %v3397 = vsub.f32 %v2757, %v3052
        %v3398 = vsub.f32 %v2758, %v3052
        %v3399 = vsub.f32 %v2759, %v3055
        %v3400 = vsub.f32 %v2760, %v3055
        %v3401 = vsub.f32 %v2761, %v3058
        %v3402 = vsub.f32 %v2762, %v3058
        %v3403 = vsub.f32 %v2763, %v3061
        %v3404 = vsub.f32 %v2764, %v3061
        %v3405 = vsub.f32 %v2765, %v3064
        %v3406 = vsub.f32 %v2766, %v3064
        %v3407 = vsub.f32 %v2767, %v3067
        %v3408 = vsub.f32 %v2768, %v3067
        %v3409 = vsub.f32 %v2769, %v3070
        %v3410 = vsub.f32 %v2770, %v3070
        %v3411 = vsub.f32 %v2771, %v3073
        %v3412 = vsub.f32 %v2772, %v3073
        %v3413 = vsub.f32 %v2773, %v3076
        %v3414 = vsub.f32 %v2774, %v3076
        %v3415 = vsub.f32 %v2775, %v3079
        %v3416 = vsub.f32 %v2776, %v3079
        %v3417 = vsub.f32 %v2777, %v3082
        %v3418 = vsub.f32 %v2778, %v3082
        %v3419 = vsub.f32 %v2779, %v3085
        %v3420 = vsub.f32 %v2780, %v3085
        %v3421 = vsub.f32 %v2781, %v3088
        %v3422 = vsub.f32 %v2782, %v3088
        %v3423 = vsub.f32 %v2783, %v3091
        %v3424 = vsub.f32 %v2784, %v3091
        %v3425 = vsub.f32 %v2785, %v3094
        %v3426 = vsub.f32 %v2786, %v3094
        %v3427 = vsub.f32 %v2787, %v3097
        %v3428 = vsub.f32 %v2788, %v3097
        %v3429 = vsub.f32 %v2789, %v3100
        %v3430 = vsub.f32 %v2790, %v3100
        %v3431 = vsub.f32 %v2791, %v3103
        %v3432 = vsub.f32 %v2792, %v3103
        %v3433 = vsub.f32 %v2793, %v3106
        %v3434 = vsub.f32 %v2794, %v3106
        %v3435 = vsub.f32 %v2795, %v3109
        %v3436 = vsub.f32 %v2796, %v3109
        %v3437 = vsub.f32 %v2797, %v3112
        %v3438 = vsub.f32 %v2798, %v3112
        %v3439 = vsub.f32 %v2799, %v3115
        %v3440 = vsub.f32 %v2800, %v3115
        %v3441 = vsub.f32 %v2801, %v3118
        %v3442 = vsub.f32 %v2802, %v3118
        %v3443 = vsub.f32 %v2803, %v3121
        %v3444 = vsub.f32 %v2804, %v3121
        %v3445 = vsub.f32 %v2805, %v3124
        %v3446 = vsub.f32 %v2806, %v3124
        %v3447 = vsub.f32 %v2807, %v3127
        %v3448 = vsub.f32 %v2808, %v3127
        %v3449 = vsub.f32 %v2809, %v3130
        %v3450 = vsub.f32 %v2810, %v3130
        %v3451 = vsub.f32 %v2811, %v3133
        %v3452 = vsub.f32 %v2812, %v3133
        %v3453 = vsub.f32 %v2813, %v3136
        %v3454 = vsub.f32 %v2814, %v3136
        %v3455 = vsub.f32 %v2815, %v3139
        %v3456 = vsub.f32 %v2816, %v3139
        %v3457 = vsub.f32 %v2817, %v3142
        %v3458 = vsub.f32 %v2818, %v3142
        %v3459 = vsub.f32 %v2819, %v3145
        %v3460 = vsub.f32 %v2820, %v3145
        %v3461 = vsub.f32 %v2821, %v3148
        %v3462 = vsub.f32 %v2822, %v3148
        %v3463 = vsub.f32 %v2823, %v3151
        %v3464 = vsub.f32 %v2824, %v3151
        %v3465 = vsub.f32 %v2825, %v3154
        %v3466 = vsub.f32 %v2826, %v3154
        %v3467 = vsub.f32 %v2827, %v3157
        %v3468 = vsub.f32 %v2828, %v3157
        %v3469 = vsub.f32 %v2829, %v3160
        %v3470 = vsub.f32 %v2830, %v3160
        %v3471 = vsub.f32 %v2831, %v3163
        %v3472 = vsub.f32 %v2832, %v3163
        %v3473 = vsub.f32 %v2833, %v3166
        %v3474 = vsub.f32 %v2834, %v3166
        %v3475 = vsub.f32 %v2835, %v3169
        %v3476 = vsub.f32 %v2836, %v3169
        %v3477 = vsub.f32 %v2837, %v3172
        %v3478 = vsub.f32 %v2838, %v3172
        %v3479 = vsub.f32 %v2839, %v3175
        %v3480 = vsub.f32 %v2840, %v3175
        %v3481 = vsub.f32 %v2841, %v3178
        %v3482 = vsub.f32 %v2842, %v3178
        %v3483 = vsub.f32 %v2843, %v3181
        %v3484 = vsub.f32 %v2844, %v3181
        %v3485 = vsub.f32 %v2845, %v3184
        %v3486 = vsub.f32 %v2846, %v3184
        %v3487 = vsub.f32 %v2847, %v3187
        %v3488 = vsub.f32 %v2848, %v3187
        %v3489 = vsub.f32 %v2849, %v3190
        %v3490 = vsub.f32 %v2850, %v3190
        %v3491 = vsub.f32 %v2851, %v3193
        %v3492 = vsub.f32 %v2852, %v3193
        %v3493 = vsub.f32 %v2853, %v3196
        %v3494 = vsub.f32 %v2854, %v3196
        %v3495 = vsub.f32 %v2855, %v3199
        %v3496 = vsub.f32 %v2856, %v3199
        %v3497 = vsub.f32 %v2857, %v3202
        %v3498 = vsub.f32 %v2858, %v3202
        %v3499 = vsub.f32 %v2859, %v3205
        %v3500 = vsub.f32 %v2860, %v3205
        %v3501 = vsub.f32 %v2861, %v3208
        %v3502 = vsub.f32 %v2862, %v3208
        %v3503 = vsub.f32 %v2863, %v3211
        %v3504 = vsub.f32 %v2864, %v3211
        %v3505 = vsub.f32 %v2865, %v3214
        %v3506 = vsub.f32 %v2866, %v3214
        %v3507 = vsub.f32 %v2867, %v3217
        %v3508 = vsub.f32 %v2868, %v3217
        %v3509 = vsub.f32 %v2869, %v3220
        %v3510 = vsub.f32 %v2870, %v3220
        %v3511 = vsub.f32 %v2871, %v3223
        %v3512 = vsub.f32 %v2872, %v3223
        %v3513 = vsub.f32 %v2873, %v3226
        %v3514 = vsub.f32 %v2874, %v3226
        %v3515 = vsub.f32 %v2875, %v3229
        %v3516 = vsub.f32 %v2876, %v3229
        %v3517 = vsub.f32 %v2877, %v3232
        %v3518 = vsub.f32 %v2878, %v3232
        %v3519 = vsub.f32 %v2879, %v3235
        %v3520 = vsub.f32 %v2880, %v3235
        %v3521 = vsub.f32 %v2881, %v3238
        %v3522 = vsub.f32 %v2882, %v3238
        %v3523 = vsub.f32 %v2883, %v3241
        %v3524 = vsub.f32 %v2884, %v3241
        %v3525 = vsub.f32 %v2885, %v3244
        %v3526 = vsub.f32 %v2886, %v3244
        %v3527 = vsub.f32 %v2887, %v3247
        %v3528 = vsub.f32 %v2888, %v3247
        %v3529 = vsub.f32 %v2889, %v3250
        %v3530 = vsub.f32 %v2890, %v3250
        %v3531 = vsub.f32 %v2891, %v3253
        %v3532 = vsub.f32 %v2892, %v3253
        %v3533 = vsub.f32 %v2893, %v3256
        %v3534 = vsub.f32 %v2894, %v3256
        %v3535 = vsub.f32 %v2895, %v3259
        %v3536 = vsub.f32 %v2896, %v3259
        %v3537 = vsub.f32 %v2897, %v3262
        %v3538 = vsub.f32 %v2898, %v3262
        %v3539 = vsub.f32 %v2899, %v3265
        %v3540 = vsub.f32 %v2900, %v3265
        %v3541 = vsub.f32 %v2901, %v3268
        %v3542 = vsub.f32 %v2902, %v3268
        %v3543 = vsub.f32 %v2903, %v3271
        %v3544 = vsub.f32 %v2904, %v3271
        %v3545 = vsub.f32 %v2905, %v3274
        %v3546 = vsub.f32 %v2906, %v3274
        %v3547 = vsub.f32 %v2907, %v3277
        %v3548 = vsub.f32 %v2908, %v3277
        %v3549 = vsub.f32 %v2909, %v3280
        %v3550 = vsub.f32 %v2910, %v3280
        %v3551 = vsub.f32 %v2911, %v3283
        %v3552 = vsub.f32 %v2912, %v3283
        %v3553 = vsub.f32 %v2913, %v3286
        %v3554 = vsub.f32 %v2914, %v3286
        %v3555 = vsub.f32 %v2915, %v3289
        %v3556 = vsub.f32 %v2916, %v3289
        %v3557 = vsub.f32 %v2917, %v3292
        %v3558 = vsub.f32 %v2918, %v3292
        %v3559 = vsub.f32 %v2919, %v3295
        %v3560 = vsub.f32 %v2920, %v3295
        %v3561 = vsub.f32 %v2921, %v3298
        %v3562 = vsub.f32 %v2922, %v3298
        %v3563 = vsub.f32 %v2923, %v3301
        %v3564 = vsub.f32 %v2924, %v3301
        %v3565 = vsub.f32 %v2925, %v3304
        %v3566 = vsub.f32 %v2926, %v3304
        %v3567 = vsub.f32 %v2927, %v3307
        %v3568 = vsub.f32 %v2928, %v3307
        %v3569 = vsub.f32 %v2929, %v3310
        %v3570 = vsub.f32 %v2930, %v3310
        %v3571 = vsub.f32 %v2931, %v3313
        %v3572 = vsub.f32 %v2932, %v3313
        %v3573 = vsub.f32 %v2933, %v3316
        %v3574 = vsub.f32 %v2934, %v3316
        %v3575 = vsub.f32 %v2935, %v3319
        %v3576 = vsub.f32 %v2936, %v3319
        %v3577 = vsub.f32 %v2937, %v3322
        %v3578 = vsub.f32 %v2938, %v3322
        %v3579 = vmul.f32 %v3323, 1.442695
        %v3580 = vpow.pop %v3579
        %v3581 = vmul.f32 %v3324, 1.442695
        %v3582 = vpow.pop %v3581
        %v3583 = vmul.f32 %v3325, 1.442695
        %v3584 = vpow.pop %v3583
        %v3585 = vmul.f32 %v3326, 1.442695
        %v3586 = vpow.pop %v3585
        %v3587 = vmul.f32 %v3327, 1.442695
        %v3588 = vpow.pop %v3587
        %v3589 = vmul.f32 %v3328, 1.442695
        %v3590 = vpow.pop %v3589
        %v3591 = vmul.f32 %v3329, 1.442695
        %v3592 = vpow.pop %v3591
        %v3593 = vmul.f32 %v3330, 1.442695
        %v3594 = vpow.pop %v3593
        %v3595 = vmul.f32 %v3331, 1.442695
        %v3596 = vpow.pop %v3595
        %v3597 = vmul.f32 %v3332, 1.442695
        %v3598 = vpow.pop %v3597
        %v3599 = vmul.f32 %v3333, 1.442695
        %v3600 = vpow.pop %v3599
        %v3601 = vmul.f32 %v3334, 1.442695
        %v3602 = vpow.pop %v3601
        %v3603 = vmul.f32 %v3335, 1.442695
        %v3604 = vpow.pop %v3603
        %v3605 = vmul.f32 %v3336, 1.442695
        %v3606 = vpow.pop %v3605
        %v3607 = vmul.f32 %v3337, 1.442695
        %v3608 = vpow.pop %v3607
        %v3609 = vmul.f32 %v3338, 1.442695
        %v3610 = vpow.pop %v3609
        %v3611 = vmul.f32 %v3339, 1.442695
        %v3612 = vpow.pop %v3611
        %v3613 = vmul.f32 %v3340, 1.442695
        %v3614 = vpow.pop %v3613
        %v3615 = vmul.f32 %v3341, 1.442695
        %v3616 = vpow.pop %v3615
        %v3617 = vmul.f32 %v3342, 1.442695
        %v3618 = vpow.pop %v3617
        %v3619 = vmul.f32 %v3343, 1.442695
        %v3620 = vpow.pop %v3619
        %v3621 = vmul.f32 %v3344, 1.442695
        %v3622 = vpow.pop %v3621
        %v3623 = vmul.f32 %v3345, 1.442695
        %v3624 = vpow.pop %v3623
        %v3625 = vmul.f32 %v3346, 1.442695
        %v3626 = vpow.pop %v3625
        %v3627 = vmul.f32 %v3347, 1.442695
        %v3628 = vpow.pop %v3627
        %v3629 = vmul.f32 %v3348, 1.442695
        %v3630 = vpow.pop %v3629
        %v3631 = vmul.f32 %v3349, 1.442695
        %v3632 = vpow.pop %v3631
        %v3633 = vmul.f32 %v3350, 1.442695
        %v3634 = vpow.pop %v3633
        %v3635 = vmul.f32 %v3351, 1.442695
        %v3636 = vpow.pop %v3635
        %v3637 = vmul.f32 %v3352, 1.442695
        %v3638 = vpow.pop %v3637
        %v3639 = vmul.f32 %v3353, 1.442695
        %v3640 = vpow.pop %v3639
        %v3641 = vmul.f32 %v3354, 1.442695
        %v3642 = vpow.pop %v3641
        %v3643 = vmul.f32 %v3355, 1.442695
        %v3644 = vpow.pop %v3643
        %v3645 = vmul.f32 %v3356, 1.442695
        %v3646 = vpow.pop %v3645
        %v3647 = vmul.f32 %v3357, 1.442695
        %v3648 = vpow.pop %v3647
        %v3649 = vmul.f32 %v3358, 1.442695
        %v3650 = vpow.pop %v3649
        %v3651 = vmul.f32 %v3359, 1.442695
        %v3652 = vpow.pop %v3651
        %v3653 = vmul.f32 %v3360, 1.442695
        %v3654 = vpow.pop %v3653
        %v3655 = vmul.f32 %v3361, 1.442695
        %v3656 = vpow.pop %v3655
        %v3657 = vmul.f32 %v3362, 1.442695
        %v3658 = vpow.pop %v3657
        %v3659 = vmul.f32 %v3363, 1.442695
        %v3660 = vpow.pop %v3659
        %v3661 = vmul.f32 %v3364, 1.442695
        %v3662 = vpow.pop %v3661
        %v3663 = vmul.f32 %v3365, 1.442695
        %v3664 = vpow.pop %v3663
        %v3665 = vmul.f32 %v3366, 1.442695
        %v3666 = vpow.pop %v3665
        %v3667 = vmul.f32 %v3367, 1.442695
        %v3668 = vpow.pop %v3667
        %v3669 = vmul.f32 %v3368, 1.442695
        %v3670 = vpow.pop %v3669
        %v3671 = vmul.f32 %v3369, 1.442695
        %v3672 = vpow.pop %v3671
        %v3673 = vmul.f32 %v3370, 1.442695
        %v3674 = vpow.pop %v3673
        %v3675 = vmul.f32 %v3371, 1.442695
        %v3676 = vpow.pop %v3675
        %v3677 = vmul.f32 %v3372, 1.442695
        %v3678 = vpow.pop %v3677
        %v3679 = vmul.f32 %v3373, 1.442695
        %v3680 = vpow.pop %v3679
        %v3681 = vmul.f32 %v3374, 1.442695
        %v3682 = vpow.pop %v3681
        %v3683 = vmul.f32 %v3375, 1.442695
        %v3684 = vpow.pop %v3683
        %v3685 = vmul.f32 %v3376, 1.442695
        %v3686 = vpow.pop %v3685
        %v3687 = vmul.f32 %v3377, 1.442695
        %v3688 = vpow.pop %v3687
        %v3689 = vmul.f32 %v3378, 1.442695
        %v3690 = vpow.pop %v3689
        %v3691 = vmul.f32 %v3379, 1.442695
        %v3692 = vpow.pop %v3691
        %v3693 = vmul.f32 %v3380, 1.442695
        %v3694 = vpow.pop %v3693
        %v3695 = vmul.f32 %v3381, 1.442695
        %v3696 = vpow.pop %v3695
        %v3697 = vmul.f32 %v3382, 1.442695
        %v3698 = vpow.pop %v3697
        %v3699 = vmul.f32 %v3383, 1.442695
        %v3700 = vpow.pop %v3699
        %v3701 = vmul.f32 %v3384, 1.442695
        %v3702 = vpow.pop %v3701
        %v3703 = vmul.f32 %v3385, 1.442695
        %v3704 = vpow.pop %v3703
        %v3705 = vmul.f32 %v3386, 1.442695
        %v3706 = vpow.pop %v3705
        %v3707 = vmul.f32 %v3387, 1.442695
        %v3708 = vpow.pop %v3707
        %v3709 = vmul.f32 %v3388, 1.442695
        %v3710 = vpow.pop %v3709
        %v3711 = vmul.f32 %v3389, 1.442695
        %v3712 = vpow.pop %v3711
        %v3713 = vmul.f32 %v3390, 1.442695
        %v3714 = vpow.pop %v3713
        %v3715 = vmul.f32 %v3391, 1.442695
        %v3716 = vpow.pop %v3715
        %v3717 = vmul.f32 %v3392, 1.442695
        %v3718 = vpow.pop %v3717
        %v3719 = vmul.f32 %v3393, 1.442695
        %v3720 = vpow.pop %v3719
        %v3721 = vmul.f32 %v3394, 1.442695
        %v3722 = vpow.pop %v3721
        %v3723 = vmul.f32 %v3395, 1.442695
        %v3724 = vpow.pop %v3723
        %v3725 = vmul.f32 %v3396, 1.442695
        %v3726 = vpow.pop %v3725
        %v3727 = vmul.f32 %v3397, 1.442695
        %v3728 = vpow.pop %v3727
        %v3729 = vmul.f32 %v3398, 1.442695
        %v3730 = vpow.pop %v3729
        %v3731 = vmul.f32 %v3399, 1.442695
        %v3732 = vpow.pop %v3731
        %v3733 = vmul.f32 %v3400, 1.442695
        %v3734 = vpow.pop %v3733
        %v3735 = vmul.f32 %v3401, 1.442695
        %v3736 = vpow.pop %v3735
        %v3737 = vmul.f32 %v3402, 1.442695
        %v3738 = vpow.pop %v3737
        %v3739 = vmul.f32 %v3403, 1.442695
        %v3740 = vpow.pop %v3739
        %v3741 = vmul.f32 %v3404, 1.442695
        %v3742 = vpow.pop %v3741
        %v3743 = vmul.f32 %v3405, 1.442695
        %v3744 = vpow.pop %v3743
        %v3745 = vmul.f32 %v3406, 1.442695
        %v3746 = vpow.pop %v3745
        %v3747 = vmul.f32 %v3407, 1.442695
        %v3748 = vpow.pop %v3747
        %v3749 = vmul.f32 %v3408, 1.442695
        %v3750 = vpow.pop %v3749
        %v3751 = vmul.f32 %v3409, 1.442695
        %v3752 = vpow.pop %v3751
        %v3753 = vmul.f32 %v3410, 1.442695
        %v3754 = vpow.pop %v3753
        %v3755 = vmul.f32 %v3411, 1.442695
        %v3756 = vpow.pop %v3755
        %v3757 = vmul.f32 %v3412, 1.442695
        %v3758 = vpow.pop %v3757
        %v3759 = vmul.f32 %v3413, 1.442695
        %v3760 = vpow.pop %v3759
        %v3761 = vmul.f32 %v3414, 1.442695
        %v3762 = vpow.pop %v3761
        %v3763 = vmul.f32 %v3415, 1.442695
        %v3764 = vpow.pop %v3763
        %v3765 = vmul.f32 %v3416, 1.442695
        %v3766 = vpow.pop %v3765
        %v3767 = vmul.f32 %v3417, 1.442695
        %v3768 = vpow.pop %v3767
        %v3769 = vmul.f32 %v3418, 1.442695
        %v3770 = vpow.pop %v3769
        %v3771 = vmul.f32 %v3419, 1.442695
        %v3772 = vpow.pop %v3771
        %v3773 = vmul.f32 %v3420, 1.442695
        %v3774 = vpow.pop %v3773
        %v3775 = vmul.f32 %v3421, 1.442695
        %v3776 = vpow.pop %v3775
        %v3777 = vmul.f32 %v3422, 1.442695
        %v3778 = vpow.pop %v3777
        %v3779 = vmul.f32 %v3423, 1.442695
        %v3780 = vpow.pop %v3779
        %v3781 = vmul.f32 %v3424, 1.442695
        %v3782 = vpow.pop %v3781
        %v3783 = vmul.f32 %v3425, 1.442695
        %v3784 = vpow.pop %v3783
        %v3785 = vmul.f32 %v3426, 1.442695
        %v3786 = vpow.pop %v3785
        %v3787 = vmul.f32 %v3427, 1.442695
        %v3788 = vpow.pop %v3787
        %v3789 = vmul.f32 %v3428, 1.442695
        %v3790 = vpow.pop %v3789
        %v3791 = vmul.f32 %v3429, 1.442695
        %v3792 = vpow.pop %v3791
        %v3793 = vmul.f32 %v3430, 1.442695
        %v3794 = vpow.pop %v3793
        %v3795 = vmul.f32 %v3431, 1.442695
        %v3796 = vpow.pop %v3795
        %v3797 = vmul.f32 %v3432, 1.442695
        %v3798 = vpow.pop %v3797
        %v3799 = vmul.f32 %v3433, 1.442695
        %v3800 = vpow.pop %v3799
        %v3801 = vmul.f32 %v3434, 1.442695
        %v3802 = vpow.pop %v3801
        %v3803 = vmul.f32 %v3435, 1.442695
        %v3804 = vpow.pop %v3803
        %v3805 = vmul.f32 %v3436, 1.442695
        %v3806 = vpow.pop %v3805
        %v3807 = vmul.f32 %v3437, 1.442695
        %v3808 = vpow.pop %v3807
        %v3809 = vmul.f32 %v3438, 1.442695
        %v3810 = vpow.pop %v3809
        %v3811 = vmul.f32 %v3439, 1.442695
        %v3812 = vpow.pop %v3811
        %v3813 = vmul.f32 %v3440, 1.442695
        %v3814 = vpow.pop %v3813
        %v3815 = vmul.f32 %v3441, 1.442695
        %v3816 = vpow.pop %v3815
        %v3817 = vmul.f32 %v3442, 1.442695
        %v3818 = vpow.pop %v3817
        %v3819 = vmul.f32 %v3443, 1.442695
        %v3820 = vpow.pop %v3819
        %v3821 = vmul.f32 %v3444, 1.442695
        %v3822 = vpow.pop %v3821
        %v3823 = vmul.f32 %v3445, 1.442695
        %v3824 = vpow.pop %v3823
        %v3825 = vmul.f32 %v3446, 1.442695
        %v3826 = vpow.pop %v3825
        %v3827 = vmul.f32 %v3447, 1.442695
        %v3828 = vpow.pop %v3827
        %v3829 = vmul.f32 %v3448, 1.442695
        %v3830 = vpow.pop %v3829
        %v3831 = vmul.f32 %v3449, 1.442695
        %v3832 = vpow.pop %v3831
        %v3833 = vmul.f32 %v3450, 1.442695
        %v3834 = vpow.pop %v3833
        %v3835 = vmul.f32 %v3451, 1.442695
        %v3836 = vpow.pop %v3835
        %v3837 = vmul.f32 %v3452, 1.442695
        %v3838 = vpow.pop %v3837
        %v3839 = vmul.f32 %v3453, 1.442695
        %v3840 = vpow.pop %v3839
        %v3841 = vmul.f32 %v3454, 1.442695
        %v3842 = vpow.pop %v3841
        %v3843 = vmul.f32 %v3455, 1.442695
        %v3844 = vpow.pop %v3843
        %v3845 = vmul.f32 %v3456, 1.442695
        %v3846 = vpow.pop %v3845
        %v3847 = vmul.f32 %v3457, 1.442695
        %v3848 = vpow.pop %v3847
        %v3849 = vmul.f32 %v3458, 1.442695
        %v3850 = vpow.pop %v3849
        %v3851 = vmul.f32 %v3459, 1.442695
        %v3852 = vpow.pop %v3851
        %v3853 = vmul.f32 %v3460, 1.442695
        %v3854 = vpow.pop %v3853
        %v3855 = vmul.f32 %v3461, 1.442695
        %v3856 = vpow.pop %v3855
        %v3857 = vmul.f32 %v3462, 1.442695
        %v3858 = vpow.pop %v3857
        %v3859 = vmul.f32 %v3463, 1.442695
        %v3860 = vpow.pop %v3859
        %v3861 = vmul.f32 %v3464, 1.442695
        %v3862 = vpow.pop %v3861
        %v3863 = vmul.f32 %v3465, 1.442695
        %v3864 = vpow.pop %v3863
        %v3865 = vmul.f32 %v3466, 1.442695
        %v3866 = vpow.pop %v3865
        %v3867 = vmul.f32 %v3467, 1.442695
        %v3868 = vpow.pop %v3867
        %v3869 = vmul.f32 %v3468, 1.442695
        %v3870 = vpow.pop %v3869
        %v3871 = vmul.f32 %v3469, 1.442695
        %v3872 = vpow.pop %v3871
        %v3873 = vmul.f32 %v3470, 1.442695
        %v3874 = vpow.pop %v3873
        %v3875 = vmul.f32 %v3471, 1.442695
        %v3876 = vpow.pop %v3875
        %v3877 = vmul.f32 %v3472, 1.442695
        %v3878 = vpow.pop %v3877
        %v3879 = vmul.f32 %v3473, 1.442695
        %v3880 = vpow.pop %v3879
        %v3881 = vmul.f32 %v3474, 1.442695
        %v3882 = vpow.pop %v3881
        %v3883 = vmul.f32 %v3475, 1.442695
        %v3884 = vpow.pop %v3883
        %v3885 = vmul.f32 %v3476, 1.442695
        %v3886 = vpow.pop %v3885
        %v3887 = vmul.f32 %v3477, 1.442695
        %v3888 = vpow.pop %v3887
        %v3889 = vmul.f32 %v3478, 1.442695
        %v3890 = vpow.pop %v3889
        %v3891 = vmul.f32 %v3479, 1.442695
        %v3892 = vpow.pop %v3891
        %v3893 = vmul.f32 %v3480, 1.442695
        %v3894 = vpow.pop %v3893
        %v3895 = vmul.f32 %v3481, 1.442695
        %v3896 = vpow.pop %v3895
        %v3897 = vmul.f32 %v3482, 1.442695
        %v3898 = vpow.pop %v3897
        %v3899 = vmul.f32 %v3483, 1.442695
        %v3900 = vpow.pop %v3899
        %v3901 = vmul.f32 %v3484, 1.442695
        %v3902 = vpow.pop %v3901
        %v3903 = vmul.f32 %v3485, 1.442695
        %v3904 = vpow.pop %v3903
        %v3905 = vmul.f32 %v3486, 1.442695
        %v3906 = vpow.pop %v3905
        %v3907 = vmul.f32 %v3487, 1.442695
        %v3908 = vpow.pop %v3907
        %v3909 = vmul.f32 %v3488, 1.442695
        %v3910 = vpow.pop %v3909
        %v3911 = vmul.f32 %v3489, 1.442695
        %v3912 = vpow.pop %v3911
        %v3913 = vmul.f32 %v3490, 1.442695
        %v3914 = vpow.pop %v3913
        %v3915 = vmul.f32 %v3491, 1.442695
        %v3916 = vpow.pop %v3915
        %v3917 = vmul.f32 %v3492, 1.442695
        %v3918 = vpow.pop %v3917
        %v3919 = vmul.f32 %v3493, 1.442695
        %v3920 = vpow.pop %v3919
        %v3921 = vmul.f32 %v3494, 1.442695
        %v3922 = vpow.pop %v3921
        %v3923 = vmul.f32 %v3495, 1.442695
        %v3924 = vpow.pop %v3923
        %v3925 = vmul.f32 %v3496, 1.442695
        %v3926 = vpow.pop %v3925
        %v3927 = vmul.f32 %v3497, 1.442695
        %v3928 = vpow.pop %v3927
        %v3929 = vmul.f32 %v3498, 1.442695
        %v3930 = vpow.pop %v3929
        %v3931 = vmul.f32 %v3499, 1.442695
        %v3932 = vpow.pop %v3931
        %v3933 = vmul.f32 %v3500, 1.442695
        %v3934 = vpow.pop %v3933
        %v3935 = vmul.f32 %v3501, 1.442695
        %v3936 = vpow.pop %v3935
        %v3937 = vmul.f32 %v3502, 1.442695
        %v3938 = vpow.pop %v3937
        %v3939 = vmul.f32 %v3503, 1.442695
        %v3940 = vpow.pop %v3939
        %v3941 = vmul.f32 %v3504, 1.442695
        %v3942 = vpow.pop %v3941
        %v3943 = vmul.f32 %v3505, 1.442695
        %v3944 = vpow.pop %v3943
        %v3945 = vmul.f32 %v3506, 1.442695
        %v3946 = vpow.pop %v3945
        %v3947 = vmul.f32 %v3507, 1.442695
        %v3948 = vpow.pop %v3947
        %v3949 = vmul.f32 %v3508, 1.442695
        %v3950 = vpow.pop %v3949
        %v3951 = vmul.f32 %v3509, 1.442695
        %v3952 = vpow.pop %v3951
        %v3953 = vmul.f32 %v3510, 1.442695
        %v3954 = vpow.pop %v3953
        %v3955 = vmul.f32 %v3511, 1.442695
        %v3956 = vpow.pop %v3955
        %v3957 = vmul.f32 %v3512, 1.442695
        %v3958 = vpow.pop %v3957
        %v3959 = vmul.f32 %v3513, 1.442695
        %v3960 = vpow.pop %v3959
        %v3961 = vmul.f32 %v3514, 1.442695
        %v3962 = vpow.pop %v3961
        %v3963 = vmul.f32 %v3515, 1.442695
        %v3964 = vpow.pop %v3963
        %v3965 = vmul.f32 %v3516, 1.442695
        %v3966 = vpow.pop %v3965
        %v3967 = vmul.f32 %v3517, 1.442695
        %v3968 = vpow.pop %v3967
        %v3969 = vmul.f32 %v3518, 1.442695
        %v3970 = vpow.pop %v3969
        %v3971 = vmul.f32 %v3519, 1.442695
        %v3972 = vpow.pop %v3971
        %v3973 = vmul.f32 %v3520, 1.442695
        %v3974 = vpow.pop %v3973
        %v3975 = vmul.f32 %v3521, 1.442695
        %v3976 = vpow.pop %v3975
        %v3977 = vmul.f32 %v3522, 1.442695
        %v3978 = vpow.pop %v3977
        %v3979 = vmul.f32 %v3523, 1.442695
        %v3980 = vpow.pop %v3979
        %v3981 = vmul.f32 %v3524, 1.442695
        %v3982 = vpow.pop %v3981
        %v3983 = vmul.f32 %v3525, 1.442695
        %v3984 = vpow.pop %v3983
        %v3985 = vmul.f32 %v3526, 1.442695
        %v3986 = vpow.pop %v3985
        %v3987 = vmul.f32 %v3527, 1.442695
        %v3988 = vpow.pop %v3987
        %v3989 = vmul.f32 %v3528, 1.442695
        %v3990 = vpow.pop %v3989
        %v3991 = vmul.f32 %v3529, 1.442695
        %v3992 = vpow.pop %v3991
        %v3993 = vmul.f32 %v3530, 1.442695
        %v3994 = vpow.pop %v3993
        %v3995 = vmul.f32 %v3531, 1.442695
        %v3996 = vpow.pop %v3995
        %v3997 = vmul.f32 %v3532, 1.442695
        %v3998 = vpow.pop %v3997
        %v3999 = vmul.f32 %v3533, 1.442695
        %v4000 = vpow.pop %v3999
        %v4001 = vmul.f32 %v3534, 1.442695
        %v4002 = vpow.pop %v4001
        %v4003 = vmul.f32 %v3535, 1.442695
        %v4004 = vpow.pop %v4003
        %v4005 = vmul.f32 %v3536, 1.442695
        %v4006 = vpow.pop %v4005
        %v4007 = vmul.f32 %v3537, 1.442695
        %v4008 = vpow.pop %v4007
        %v4009 = vmul.f32 %v3538, 1.442695
        %v4010 = vpow.pop %v4009
        %v4011 = vmul.f32 %v3539, 1.442695
        %v4012 = vpow.pop %v4011
        %v4013 = vmul.f32 %v3540, 1.442695
        %v4014 = vpow.pop %v4013
        %v4015 = vmul.f32 %v3541, 1.442695
        %v4016 = vpow.pop %v4015
        %v4017 = vmul.f32 %v3542, 1.442695
        %v4018 = vpow.pop %v4017
        %v4019 = vmul.f32 %v3543, 1.442695
        %v4020 = vpow.pop %v4019
        %v4021 = vmul.f32 %v3544, 1.442695
        %v4022 = vpow.pop %v4021
        %v4023 = vmul.f32 %v3545, 1.442695
        %v4024 = vpow.pop %v4023
        %v4025 = vmul.f32 %v3546, 1.442695
        %v4026 = vpow.pop %v4025
        %v4027 = vmul.f32 %v3547, 1.442695
        %v4028 = vpow.pop %v4027
        %v4029 = vmul.f32 %v3548, 1.442695
        %v4030 = vpow.pop %v4029
        %v4031 = vmul.f32 %v3549, 1.442695
        %v4032 = vpow.pop %v4031
        %v4033 = vmul.f32 %v3550, 1.442695
        %v4034 = vpow.pop %v4033
        %v4035 = vmul.f32 %v3551, 1.442695
        %v4036 = vpow.pop %v4035
        %v4037 = vmul.f32 %v3552, 1.442695
        %v4038 = vpow.pop %v4037
        %v4039 = vmul.f32 %v3553, 1.442695
        %v4040 = vpow.pop %v4039
        %v4041 = vmul.f32 %v3554, 1.442695
        %v4042 = vpow.pop %v4041
        %v4043 = vmul.f32 %v3555, 1.442695
        %v4044 = vpow.pop %v4043
        %v4045 = vmul.f32 %v3556, 1.442695
        %v4046 = vpow.pop %v4045
        %v4047 = vmul.f32 %v3557, 1.442695
        %v4048 = vpow.pop %v4047
        %v4049 = vmul.f32 %v3558, 1.442695
        %v4050 = vpow.pop %v4049
        %v4051 = vmul.f32 %v3559, 1.442695
        %v4052 = vpow.pop %v4051
        %v4053 = vmul.f32 %v3560, 1.442695
        %v4054 = vpow.pop %v4053
        %v4055 = vmul.f32 %v3561, 1.442695
        %v4056 = vpow.pop %v4055
        %v4057 = vmul.f32 %v3562, 1.442695
        %v4058 = vpow.pop %v4057
        %v4059 = vmul.f32 %v3563, 1.442695
        %v4060 = vpow.pop %v4059
        %v4061 = vmul.f32 %v3564, 1.442695
        %v4062 = vpow.pop %v4061
        %v4063 = vmul.f32 %v3565, 1.442695
        %v4064 = vpow.pop %v4063
        %v4065 = vmul.f32 %v3566, 1.442695
        %v4066 = vpow.pop %v4065
        %v4067 = vmul.f32 %v3567, 1.442695
        %v4068 = vpow.pop %v4067
        %v4069 = vmul.f32 %v3568, 1.442695
        %v4070 = vpow.pop %v4069
        %v4071 = vmul.f32 %v3569, 1.442695
        %v4072 = vpow.pop %v4071
        %v4073 = vmul.f32 %v3570, 1.442695
        %v4074 = vpow.pop %v4073
        %v4075 = vmul.f32 %v3571, 1.442695
        %v4076 = vpow.pop %v4075
        %v4077 = vmul.f32 %v3572, 1.442695
        %v4078 = vpow.pop %v4077
        %v4079 = vmul.f32 %v3573, 1.442695
        %v4080 = vpow.pop %v4079
        %v4081 = vmul.f32 %v3574, 1.442695
        %v4082 = vpow.pop %v4081
        %v4083 = vmul.f32 %v3575, 1.442695
        %v4084 = vpow.pop %v4083
        %v4085 = vmul.f32 %v3576, 1.442695
        %v4086 = vpow.pop %v4085
        %v4087 = vmul.f32 %v3577, 1.442695
        %v4088 = vpow.pop %v4087
        %v4089 = vmul.f32 %v3578, 1.442695
        %v4090 = vpow.pop %v4089
        %v4091 = vadd.f32 %v3580, %v3582
        %4092 = vadd.xlane.f32.xlu0 %v4091
        %v4093 = vpop.xlane.xlu0 %4092
        %v4094 = vadd.f32 %v3584, %v3586
        %4095 = vadd.xlane.f32.xlu0 %v4094
        %v4096 = vpop.xlane.xlu0 %4095
        %v4097 = vadd.f32 %v3588, %v3590
        %4098 = vadd.xlane.f32.xlu0 %v4097
        %v4099 = vpop.xlane.xlu0 %4098
        %v4100 = vadd.f32 %v3592, %v3594
        %4101 = vadd.xlane.f32.xlu0 %v4100
        %v4102 = vpop.xlane.xlu0 %4101
        %v4103 = vadd.f32 %v3596, %v3598
        %4104 = vadd.xlane.f32.xlu0 %v4103
        %v4105 = vpop.xlane.xlu0 %4104
        %v4106 = vadd.f32 %v3600, %v3602
        %4107 = vadd.xlane.f32.xlu0 %v4106
        %v4108 = vpop.xlane.xlu0 %4107
        %v4109 = vadd.f32 %v3604, %v3606
        %4110 = vadd.xlane.f32.xlu0 %v4109
        %v4111 = vpop.xlane.xlu0 %4110
        %v4112 = vadd.f32 %v3608, %v3610
        %4113 = vadd.xlane.f32.xlu0 %v4112
        %v4114 = vpop.xlane.xlu0 %4113
        %v4115 = vadd.f32 %v3612, %v3614
        %4116 = vadd.xlane.f32.xlu0 %v4115
        %v4117 = vpop.xlane.xlu0 %4116
        %v4118 = vadd.f32 %v3616, %v3618
        %4119 = vadd.xlane.f32.xlu0 %v4118
        %v4120 = vpop.xlane.xlu0 %4119
        %v4121 = vadd.f32 %v3620, %v3622
        %4122 = vadd.xlane.f32.xlu0 %v4121
        %v4123 = vpop.xlane.xlu0 %4122
        %v4124 = vadd.f32 %v3624, %v3626
        %4125 = vadd.xlane.f32.xlu0 %v4124
        %v4126 = vpop.xlane.xlu0 %4125
        %v4127 = vadd.f32 %v3628, %v3630
        %4128 = vadd.xlane.f32.xlu0 %v4127
        %v4129 = vpop.xlane.xlu0 %4128
        %v4130 = vadd.f32 %v3632, %v3634
        %4131 = vadd.xlane.f32.xlu0 %v4130
        %v4132 = vpop.xlane.xlu0 %4131
        %v4133 = vadd.f32 %v3636, %v3638
        %4134 = vadd.xlane.f32.xlu0 %v4133
        %v4135 = vpop.xlane.xlu0 %4134
        %v4136 = vadd.f32 %v3640, %v3642
        %4137 = vadd.xlane.f32.xlu0 %v4136
        %v4138 = vpop.xlane.xlu0 %4137
        %v4139 = vadd.f32 %v3644, %v3646
        %4140 = vadd.xlane.f32.xlu0 %v4139
        %v4141 = vpop.xlane.xlu0 %4140
        %v4142 = vadd.f32 %v3648, %v3650
        %4143 = vadd.xlane.f32.xlu0 %v4142
        %v4144 = vpop.xlane.xlu0 %4143
        %v4145 = vadd.f32 %v3652, %v3654
        %4146 = vadd.xlane.f32.xlu0 %v4145
        %v4147 = vpop.xlane.xlu0 %4146
        %v4148 = vadd.f32 %v3656, %v3658
        %4149 = vadd.xlane.f32.xlu0 %v4148
        %v4150 = vpop.xlane.xlu0 %4149
        %v4151 = vadd.f32 %v3660, %v3662
        %4152 = vadd.xlane.f32.xlu0 %v4151
        %v4153 = vpop.xlane.xlu0 %4152
        %v4154 = vadd.f32 %v3664, %v3666
        %4155 = vadd.xlane.f32.xlu0 %v4154
        %v4156 = vpop.xlane.xlu0 %4155
        %v4157 = vadd.f32 %v3668, %v3670
        %4158 = vadd.xlane.f32.xlu0 %v4157
        %v4159 = vpop.xlane.xlu0 %4158
        %v4160 = vadd.f32 %v3672, %v3674
        %4161 = vadd.xlane.f32.xlu0 %v4160
        %v4162 = vpop.xlane.xlu0 %4161
        %v4163 = vadd.f32 %v3676, %v3678
        %4164 = vadd.xlane.f32.xlu0 %v4163
        %v4165 = vpop.xlane.xlu0 %4164
        %v4166 = vadd.f32 %v3680, %v3682
        %4167 = vadd.xlane.f32.xlu0 %v4166
        %v4168 = vpop.xlane.xlu0 %4167
        %v4169 = vadd.f32 %v3684, %v3686
        %4170 = vadd.xlane.f32.xlu0 %v4169
        %v4171 = vpop.xlane.xlu0 %4170
        %v4172 = vadd.f32 %v3688, %v3690
        %4173 = vadd.xlane.f32.xlu0 %v4172
        %v4174 = vpop.xlane.xlu0 %4173
        %v4175 = vadd.f32 %v3692, %v3694
        %4176 = vadd.xlane.f32.xlu0 %v4175
        %v4177 = vpop.xlane.xlu0 %4176
        %v4178 = vadd.f32 %v3696, %v3698
        %4179 = vadd.xlane.f32.xlu0 %v4178
        %v4180 = vpop.xlane.xlu0 %4179
        %v4181 = vadd.f32 %v3700, %v3702
        %4182 = vadd.xlane.f32.xlu0 %v4181
        %v4183 = vpop.xlane.xlu0 %4182
        %v4184 = vadd.f32 %v3704, %v3706
        %4185 = vadd.xlane.f32.xlu0 %v4184
        %v4186 = vpop.xlane.xlu0 %4185
        %v4187 = vadd.f32 %v3708, %v3710
        %4188 = vadd.xlane.f32.xlu0 %v4187
        %v4189 = vpop.xlane.xlu0 %4188
        %v4190 = vadd.f32 %v3712, %v3714
        %4191 = vadd.xlane.f32.xlu0 %v4190
        %v4192 = vpop.xlane.xlu0 %4191
        %v4193 = vadd.f32 %v3716, %v3718
        %4194 = vadd.xlane.f32.xlu0 %v4193
        %v4195 = vpop.xlane.xlu0 %4194
        %v4196 = vadd.f32 %v3720, %v3722
        %4197 = vadd.xlane.f32.xlu0 %v4196
        %v4198 = vpop.xlane.xlu0 %4197
        %v4199 = vadd.f32 %v3724, %v3726
        %4200 = vadd.xlane.f32.xlu0 %v4199
        %v4201 = vpop.xlane.xlu0 %4200
        %v4202 = vadd.f32 %v3728, %v3730
        %4203 = vadd.xlane.f32.xlu0 %v4202
        %v4204 = vpop.xlane.xlu0 %4203
        %v4205 = vadd.f32 %v3732, %v3734
        %4206 = vadd.xlane.f32.xlu0 %v4205
        %v4207 = vpop.xlane.xlu0 %4206
        %v4208 = vadd.f32 %v3736, %v3738
        %4209 = vadd.xlane.f32.xlu0 %v4208
        %v4210 = vpop.xlane.xlu0 %4209
        %v4211 = vadd.f32 %v3740, %v3742
        %4212 = vadd.xlane.f32.xlu0 %v4211
        %v4213 = vpop.xlane.xlu0 %4212
        %v4214 = vadd.f32 %v3744, %v3746
        %4215 = vadd.xlane.f32.xlu0 %v4214
        %v4216 = vpop.xlane.xlu0 %4215
        %v4217 = vadd.f32 %v3748, %v3750
        %4218 = vadd.xlane.f32.xlu0 %v4217
        %v4219 = vpop.xlane.xlu0 %4218
        %v4220 = vadd.f32 %v3752, %v3754
        %4221 = vadd.xlane.f32.xlu0 %v4220
        %v4222 = vpop.xlane.xlu0 %4221
        %v4223 = vadd.f32 %v3756, %v3758
        %4224 = vadd.xlane.f32.xlu0 %v4223
        %v4225 = vpop.xlane.xlu0 %4224
        %v4226 = vadd.f32 %v3760, %v3762
        %4227 = vadd.xlane.f32.xlu0 %v4226
        %v4228 = vpop.xlane.xlu0 %4227
        %v4229 = vadd.f32 %v3764, %v3766
        %4230 = vadd.xlane.f32.xlu0 %v4229
        %v4231 = vpop.xlane.xlu0 %4230
        %v4232 = vadd.f32 %v3768, %v3770
        %4233 = vadd.xlane.f32.xlu0 %v4232
        %v4234 = vpop.xlane.xlu0 %4233
        %v4235 = vadd.f32 %v3772, %v3774
        %4236 = vadd.xlane.f32.xlu0 %v4235
        %v4237 = vpop.xlane.xlu0 %4236
        %v4238 = vadd.f32 %v3776, %v3778
        %4239 = vadd.xlane.f32.xlu0 %v4238
        %v4240 = vpop.xlane.xlu0 %4239
        %v4241 = vadd.f32 %v3780, %v3782
        %4242 = vadd.xlane.f32.xlu0 %v4241
        %v4243 = vpop.xlane.xlu0 %4242
        %v4244 = vadd.f32 %v3784, %v3786
        %4245 = vadd.xlane.f32.xlu0 %v4244
        %v4246 = vpop.xlane.xlu0 %4245
        %v4247 = vadd.f32 %v3788, %v3790
        %4248 = vadd.xlane.f32.xlu0 %v4247
        %v4249 = vpop.xlane.xlu0 %4248
        %v4250 = vadd.f32 %v3792, %v3794
        %4251 = vadd.xlane.f32.xlu0 %v4250
        %v4252 = vpop.xlane.xlu0 %4251
        %v4253 = vadd.f32 %v3796, %v3798
        %4254 = vadd.xlane.f32.xlu0 %v4253
        %v4255 = vpop.xlane.xlu0 %4254
        %v4256 = vadd.f32 %v3800, %v3802
        %4257 = vadd.xlane.f32.xlu0 %v4256
        %v4258 = vpop.xlane.xlu0 %4257
        %v4259 = vadd.f32 %v3804, %v3806
        %4260 = vadd.xlane.f32.xlu0 %v4259
        %v4261 = vpop.xlane.xlu0 %4260
        %v4262 = vadd.f32 %v3808, %v3810
        %4263 = vadd.xlane.f32.xlu0 %v4262
        %v4264 = vpop.xlane.xlu0 %4263
        %v4265 = vadd.f32 %v3812, %v3814
        %4266 = vadd.xlane.f32.xlu0 %v4265
        %v4267 = vpop.xlane.xlu0 %4266
        %v4268 = vadd.f32 %v3816, %v3818
        %4269 = vadd.xlane.f32.xlu0 %v4268
        %v4270 = vpop.xlane.xlu0 %4269
        %v4271 = vadd.f32 %v3820, %v3822
        %4272 = vadd.xlane.f32.xlu0 %v4271
        %v4273 = vpop.xlane.xlu0 %4272
        %v4274 = vadd.f32 %v3824, %v3826
        %4275 = vadd.xlane.f32.xlu0 %v4274
        %v4276 = vpop.xlane.xlu0 %4275
        %v4277 = vadd.f32 %v3828, %v3830
        %4278 = vadd.xlane.f32.xlu0 %v4277
        %v4279 = vpop.xlane.xlu0 %4278
        %v4280 = vadd.f32 %v3832, %v3834
        %4281 = vadd.xlane.f32.xlu0 %v4280
        %v4282 = vpop.xlane.xlu0 %4281
        %v4283 = vadd.f32 %v3836, %v3838
        %4284 = vadd.xlane.f32.xlu0 %v4283
        %v4285 = vpop.xlane.xlu0 %4284
        %v4286 = vadd.f32 %v3840, %v3842
        %4287 = vadd.xlane.f32.xlu0 %v4286
        %v4288 = vpop.xlane.xlu0 %4287
        %v4289 = vadd.f32 %v3844, %v3846
        %4290 = vadd.xlane.f32.xlu0 %v4289
        %v4291 = vpop.xlane.xlu0 %4290
        %v4292 = vadd.f32 %v3848, %v3850
        %4293 = vadd.xlane.f32.xlu0 %v4292
        %v4294 = vpop.xlane.xlu0 %4293
        %v4295 = vadd.f32 %v3852, %v3854
        %4296 = vadd.xlane.f32.xlu0 %v4295
        %v4297 = vpop.xlane.xlu0 %4296
        %v4298 = vadd.f32 %v3856, %v3858
        %4299 = vadd.xlane.f32.xlu0 %v4298
        %v4300 = vpop.xlane.xlu0 %4299
        %v4301 = vadd.f32 %v3860, %v3862
        %4302 = vadd.xlane.f32.xlu0 %v4301
        %v4303 = vpop.xlane.xlu0 %4302
        %v4304 = vadd.f32 %v3864, %v3866
        %4305 = vadd.xlane.f32.xlu0 %v4304
        %v4306 = vpop.xlane.xlu0 %4305
        %v4307 = vadd.f32 %v3868, %v3870
        %4308 = vadd.xlane.f32.xlu0 %v4307
        %v4309 = vpop.xlane.xlu0 %4308
        %v4310 = vadd.f32 %v3872, %v3874
        %4311 = vadd.xlane.f32.xlu0 %v4310
        %v4312 = vpop.xlane.xlu0 %4311
        %v4313 = vadd.f32 %v3876, %v3878
        %4314 = vadd.xlane.f32.xlu0 %v4313
        %v4315 = vpop.xlane.xlu0 %4314
        %v4316 = vadd.f32 %v3880, %v3882
        %4317 = vadd.xlane.f32.xlu0 %v4316
        %v4318 = vpop.xlane.xlu0 %4317
        %v4319 = vadd.f32 %v3884, %v3886
        %4320 = vadd.xlane.f32.xlu0 %v4319
        %v4321 = vpop.xlane.xlu0 %4320
        %v4322 = vadd.f32 %v3888, %v3890
        %4323 = vadd.xlane.f32.xlu0 %v4322
        %v4324 = vpop.xlane.xlu0 %4323
        %v4325 = vadd.f32 %v3892, %v3894
        %4326 = vadd.xlane.f32.xlu0 %v4325
        %v4327 = vpop.xlane.xlu0 %4326
        %v4328 = vadd.f32 %v3896, %v3898
        %4329 = vadd.xlane.f32.xlu0 %v4328
        %v4330 = vpop.xlane.xlu0 %4329
        %v4331 = vadd.f32 %v3900, %v3902
        %4332 = vadd.xlane.f32.xlu0 %v4331
        %v4333 = vpop.xlane.xlu0 %4332
        %v4334 = vadd.f32 %v3904, %v3906
        %4335 = vadd.xlane.f32.xlu0 %v4334
        %v4336 = vpop.xlane.xlu0 %4335
        %v4337 = vadd.f32 %v3908, %v3910
        %4338 = vadd.xlane.f32.xlu0 %v4337
        %v4339 = vpop.xlane.xlu0 %4338
        %v4340 = vadd.f32 %v3912, %v3914
        %4341 = vadd.xlane.f32.xlu0 %v4340
        %v4342 = vpop.xlane.xlu0 %4341
        %v4343 = vadd.f32 %v3916, %v3918
        %4344 = vadd.xlane.f32.xlu0 %v4343
        %v4345 = vpop.xlane.xlu0 %4344
        %v4346 = vadd.f32 %v3920, %v3922
        %4347 = vadd.xlane.f32.xlu0 %v4346
        %v4348 = vpop.xlane.xlu0 %4347
        %v4349 = vadd.f32 %v3924, %v3926
        %4350 = vadd.xlane.f32.xlu0 %v4349
        %v4351 = vpop.xlane.xlu0 %4350
        %v4352 = vadd.f32 %v3928, %v3930
        %4353 = vadd.xlane.f32.xlu0 %v4352
        %v4354 = vpop.xlane.xlu0 %4353
        %v4355 = vadd.f32 %v3932, %v3934
        %4356 = vadd.xlane.f32.xlu0 %v4355
        %v4357 = vpop.xlane.xlu0 %4356
        %v4358 = vadd.f32 %v3936, %v3938
        %4359 = vadd.xlane.f32.xlu0 %v4358
        %v4360 = vpop.xlane.xlu0 %4359
        %v4361 = vadd.f32 %v3940, %v3942
        %4362 = vadd.xlane.f32.xlu0 %v4361
        %v4363 = vpop.xlane.xlu0 %4362
        %v4364 = vadd.f32 %v3944, %v3946
        %4365 = vadd.xlane.f32.xlu0 %v4364
        %v4366 = vpop.xlane.xlu0 %4365
        %v4367 = vadd.f32 %v3948, %v3950
        %4368 = vadd.xlane.f32.xlu0 %v4367
        %v4369 = vpop.xlane.xlu0 %4368
        %v4370 = vadd.f32 %v3952, %v3954
        %4371 = vadd.xlane.f32.xlu0 %v4370
        %v4372 = vpop.xlane.xlu0 %4371
        %v4373 = vadd.f32 %v3956, %v3958
        %4374 = vadd.xlane.f32.xlu0 %v4373
        %v4375 = vpop.xlane.xlu0 %4374
        %v4376 = vadd.f32 %v3960, %v3962
        %4377 = vadd.xlane.f32.xlu0 %v4376
        %v4378 = vpop.xlane.xlu0 %4377
        %v4379 = vadd.f32 %v3964, %v3966
        %4380 = vadd.xlane.f32.xlu0 %v4379
        %v4381 = vpop.xlane.xlu0 %4380
        %v4382 = vadd.f32 %v3968, %v3970
        %4383 = vadd.xlane.f32.xlu0 %v4382
        %v4384 = vpop.xlane.xlu0 %4383
        %v4385 = vadd.f32 %v3972, %v3974
        %4386 = vadd.xlane.f32.xlu0 %v4385
        %v4387 = vpop.xlane.xlu0 %4386
        %v4388 = vadd.f32 %v3976, %v3978
        %4389 = vadd.xlane.f32.xlu0 %v4388
        %v4390 = vpop.xlane.xlu0 %4389
        %v4391 = vadd.f32 %v3980, %v3982
        %4392 = vadd.xlane.f32.xlu0 %v4391
        %v4393 = vpop.xlane.xlu0 %4392
        %v4394 = vadd.f32 %v3984, %v3986
        %4395 = vadd.xlane.f32.xlu0 %v4394
        %v4396 = vpop.xlane.xlu0 %4395
        %v4397 = vadd.f32 %v3988, %v3990
        %4398 = vadd.xlane.f32.xlu0 %v4397
        %v4399 = vpop.xlane.xlu0 %4398
        %v4400 = vadd.f32 %v3992, %v3994
        %4401 = vadd.xlane.f32.xlu0 %v4400
        %v4402 = vpop.xlane.xlu0 %4401
        %v4403 = vadd.f32 %v3996, %v3998
        %4404 = vadd.xlane.f32.xlu0 %v4403
        %v4405 = vpop.xlane.xlu0 %4404
        %v4406 = vadd.f32 %v4000, %v4002
        %4407 = vadd.xlane.f32.xlu0 %v4406
        %v4408 = vpop.xlane.xlu0 %4407
        %v4409 = vadd.f32 %v4004, %v4006
        %4410 = vadd.xlane.f32.xlu0 %v4409
        %v4411 = vpop.xlane.xlu0 %4410
        %v4412 = vadd.f32 %v4008, %v4010
        %4413 = vadd.xlane.f32.xlu0 %v4412
        %v4414 = vpop.xlane.xlu0 %4413
        %v4415 = vadd.f32 %v4012, %v4014
        %4416 = vadd.xlane.f32.xlu0 %v4415
        %v4417 = vpop.xlane.xlu0 %4416
        %v4418 = vadd.f32 %v4016, %v4018
        %4419 = vadd.xlane.f32.xlu0 %v4418
        %v4420 = vpop.xlane.xlu0 %4419
        %v4421 = vadd.f32 %v4020, %v4022
        %4422 = vadd.xlane.f32.xlu0 %v4421
        %v4423 = vpop.xlane.xlu0 %4422
        %v4424 = vadd.f32 %v4024, %v4026
        %4425 = vadd.xlane.f32.xlu0 %v4424
        %v4426 = vpop.xlane.xlu0 %4425
        %v4427 = vadd.f32 %v4028, %v4030
        %4428 = vadd.xlane.f32.xlu0 %v4427
        %v4429 = vpop.xlane.xlu0 %4428
        %v4430 = vadd.f32 %v4032, %v4034
        %4431 = vadd.xlane.f32.xlu0 %v4430
        %v4432 = vpop.xlane.xlu0 %4431
        %v4433 = vadd.f32 %v4036, %v4038
        %4434 = vadd.xlane.f32.xlu0 %v4433
        %v4435 = vpop.xlane.xlu0 %4434
        %v4436 = vadd.f32 %v4040, %v4042
        %4437 = vadd.xlane.f32.xlu0 %v4436
        %v4438 = vpop.xlane.xlu0 %4437
        %v4439 = vadd.f32 %v4044, %v4046
        %4440 = vadd.xlane.f32.xlu0 %v4439
        %v4441 = vpop.xlane.xlu0 %4440
        %v4442 = vadd.f32 %v4048, %v4050
        %4443 = vadd.xlane.f32.xlu0 %v4442
        %v4444 = vpop.xlane.xlu0 %4443
        %v4445 = vadd.f32 %v4052, %v4054
        %4446 = vadd.xlane.f32.xlu0 %v4445
        %v4447 = vpop.xlane.xlu0 %4446
        %v4448 = vadd.f32 %v4056, %v4058
        %4449 = vadd.xlane.f32.xlu0 %v4448
        %v4450 = vpop.xlane.xlu0 %4449
        %v4451 = vadd.f32 %v4060, %v4062
        %4452 = vadd.xlane.f32.xlu0 %v4451
        %v4453 = vpop.xlane.xlu0 %4452
        %v4454 = vadd.f32 %v4064, %v4066
        %4455 = vadd.xlane.f32.xlu0 %v4454
        %v4456 = vpop.xlane.xlu0 %4455
        %v4457 = vadd.f32 %v4068, %v4070
        %4458 = vadd.xlane.f32.xlu0 %v4457
        %v4459 = vpop.xlane.xlu0 %4458
        %v4460 = vadd.f32 %v4072, %v4074
        %4461 = vadd.xlane.f32.xlu0 %v4460
        %v4462 = vpop.xlane.xlu0 %4461
        %v4463 = vadd.f32 %v4076, %v4078
        %4464 = vadd.xlane.f32.xlu0 %v4463
        %v4465 = vpop.xlane.xlu0 %4464
        %v4466 = vadd.f32 %v4080, %v4082
        %4467 = vadd.xlane.f32.xlu0 %v4466
        %v4468 = vpop.xlane.xlu0 %4467
        %v4469 = vadd.f32 %v4084, %v4086
        %4470 = vadd.xlane.f32.xlu0 %v4469
        %v4471 = vpop.xlane.xlu0 %4470
        %v4472 = vadd.f32 %v4088, %v4090
        %4473 = vadd.xlane.f32.xlu0 %v4472
        %v4474 = vpop.xlane.xlu0 %4473
        %v4475 = vrcp.pop %v4093
        %v4476 = vrcp.pop %v4096
        %v4477 = vrcp.pop %v4099
        %v4478 = vrcp.pop %v4102
        %v4479 = vrcp.pop %v4105
        %v4480 = vrcp.pop %v4108
        %v4481 = vrcp.pop %v4111
        %v4482 = vrcp.pop %v4114
        %v4483 = vrcp.pop %v4117
        %v4484 = vrcp.pop %v4120
        %v4485 = vrcp.pop %v4123
        %v4486 = vrcp.pop %v4126
        %v4487 = vrcp.pop %v4129
        %v4488 = vrcp.pop %v4132
        %v4489 = vrcp.pop %v4135
        %v4490 = vrcp.pop %v4138
        %v4491 = vrcp.pop %v4141
        %v4492 = vrcp.pop %v4144
        %v4493 = vrcp.pop %v4147
        %v4494 = vrcp.pop %v4150
        %v4495 = vrcp.pop %v4153
        %v4496 = vrcp.pop %v4156
        %v4497 = vrcp.pop %v4159
        %v4498 = vrcp.pop %v4162
        %v4499 = vrcp.pop %v4165
        %v4500 = vrcp.pop %v4168
        %v4501 = vrcp.pop %v4171
        %v4502 = vrcp.pop %v4174
        %v4503 = vrcp.pop %v4177
        %v4504 = vrcp.pop %v4180
        %v4505 = vrcp.pop %v4183
        %v4506 = vrcp.pop %v4186
        %v4507 = vrcp.pop %v4189
        %v4508 = vrcp.pop %v4192
        %v4509 = vrcp.pop %v4195
        %v4510 = vrcp.pop %v4198
        %v4511 = vrcp.pop %v4201
        %v4512 = vrcp.pop %v4204
        %v4513 = vrcp.pop %v4207
        %v4514 = vrcp.pop %v4210
        %v4515 = vrcp.pop %v4213
        %v4516 = vrcp.pop %v4216
        %v4517 = vrcp.pop %v4219
        %v4518 = vrcp.pop %v4222
        %v4519 = vrcp.pop %v4225
        %v4520 = vrcp.pop %v4228
        %v4521 = vrcp.pop %v4231
        %v4522 = vrcp.pop %v4234
        %v4523 = vrcp.pop %v4237
        %v4524 = vrcp.pop %v4240
        %v4525 = vrcp.pop %v4243
        %v4526 = vrcp.pop %v4246
        %v4527 = vrcp.pop %v4249
        %v4528 = vrcp.pop %v4252
        %v4529 = vrcp.pop %v4255
        %v4530 = vrcp.pop %v4258
        %v4531 = vrcp.pop %v4261
        %v4532 = vrcp.pop %v4264
        %v4533 = vrcp.pop %v4267
        %v4534 = vrcp.pop %v4270
        %v4535 = vrcp.pop %v4273
        %v4536 = vrcp.pop %v4276
        %v4537 = vrcp.pop %v4279
        %v4538 = vrcp.pop %v4282
        %v4539 = vrcp.pop %v4285
        %v4540 = vrcp.pop %v4288
        %v4541 = vrcp.pop %v4291
        %v4542 = vrcp.pop %v4294
        %v4543 = vrcp.pop %v4297
        %v4544 = vrcp.pop %v4300
        %v4545 = vrcp.pop %v4303
        %v4546 = vrcp.pop %v4306
        %v4547 = vrcp.pop %v4309
        %v4548 = vrcp.pop %v4312
        %v4549 = vrcp.pop %v4315
        %v4550 = vrcp.pop %v4318
        %v4551 = vrcp.pop %v4321
        %v4552 = vrcp.pop %v4324
        %v4553 = vrcp.pop %v4327
        %v4554 = vrcp.pop %v4330
        %v4555 = vrcp.pop %v4333
        %v4556 = vrcp.pop %v4336
        %v4557 = vrcp.pop %v4339
        %v4558 = vrcp.pop %v4342
        %v4559 = vrcp.pop %v4345
        %v4560 = vrcp.pop %v4348
        %v4561 = vrcp.pop %v4351
        %v4562 = vrcp.pop %v4354
        %v4563 = vrcp.pop %v4357
        %v4564 = vrcp.pop %v4360
        %v4565 = vrcp.pop %v4363
        %v4566 = vrcp.pop %v4366
        %v4567 = vrcp.pop %v4369
        %v4568 = vrcp.pop %v4372
        %v4569 = vrcp.pop %v4375
        %v4570 = vrcp.pop %v4378
        %v4571 = vrcp.pop %v4381
        %v4572 = vrcp.pop %v4384
        %v4573 = vrcp.pop %v4387
        %v4574 = vrcp.pop %v4390
        %v4575 = vrcp.pop %v4393
        %v4576 = vrcp.pop %v4396
        %v4577 = vrcp.pop %v4399
        %v4578 = vrcp.pop %v4402
        %v4579 = vrcp.pop %v4405
        %v4580 = vrcp.pop %v4408
        %v4581 = vrcp.pop %v4411
        %v4582 = vrcp.pop %v4414
        %v4583 = vrcp.pop %v4417
        %v4584 = vrcp.pop %v4420
        %v4585 = vrcp.pop %v4423
        %v4586 = vrcp.pop %v4426
        %v4587 = vrcp.pop %v4429
        %v4588 = vrcp.pop %v4432
        %v4589 = vrcp.pop %v4435
        %v4590 = vrcp.pop %v4438
        %v4591 = vrcp.pop %v4441
        %v4592 = vrcp.pop %v4444
        %v4593 = vrcp.pop %v4447
        %v4594 = vrcp.pop %v4450
        %v4595 = vrcp.pop %v4453
        %v4596 = vrcp.pop %v4456
        %v4597 = vrcp.pop %v4459
        %v4598 = vrcp.pop %v4462
        %v4599 = vrcp.pop %v4465
        %v4600 = vrcp.pop %v4468
        %v4601 = vrcp.pop %v4471
        %v4602 = vrcp.pop %v4474
        %v4603 = vmul.f32 %v4093, %v4475
        %v4604 = vmul.f32 %v4096, %v4476
        %v4605 = vmul.f32 %v4099, %v4477
        %v4606 = vmul.f32 %v4102, %v4478
        %v4607 = vmul.f32 %v4105, %v4479
        %v4608 = vmul.f32 %v4108, %v4480
        %v4609 = vmul.f32 %v4111, %v4481
        %v4610 = vmul.f32 %v4114, %v4482
        %v4611 = vmul.f32 %v4117, %v4483
        %v4612 = vmul.f32 %v4120, %v4484
        %v4613 = vmul.f32 %v4123, %v4485
        %v4614 = vmul.f32 %v4126, %v4486
        %v4615 = vmul.f32 %v4129, %v4487
        %v4616 = vmul.f32 %v4132, %v4488
        %v4617 = vmul.f32 %v4135, %v4489
        %v4618 = vmul.f32 %v4138, %v4490
        %v4619 = vmul.f32 %v4141, %v4491
        %v4620 = vmul.f32 %v4144, %v4492
        %v4621 = vmul.f32 %v4147, %v4493
        %v4622 = vmul.f32 %v4150, %v4494
        %v4623 = vmul.f32 %v4153, %v4495
        %v4624 = vmul.f32 %v4156, %v4496
        %v4625 = vmul.f32 %v4159, %v4497
        %v4626 = vmul.f32 %v4162, %v4498
        %v4627 = vmul.f32 %v4165, %v4499
        %v4628 = vmul.f32 %v4168, %v4500
        %v4629 = vmul.f32 %v4171, %v4501
        %v4630 = vmul.f32 %v4174, %v4502
        %v4631 = vmul.f32 %v4177, %v4503
        %v4632 = vmul.f32 %v4180, %v4504
        %v4633 = vmul.f32 %v4183, %v4505
        %v4634 = vmul.f32 %v4186, %v4506
        %v4635 = vmul.f32 %v4189, %v4507
        %v4636 = vmul.f32 %v4192, %v4508
        %v4637 = vmul.f32 %v4195, %v4509
        %v4638 = vmul.f32 %v4198, %v4510
        %v4639 = vmul.f32 %v4201, %v4511
        %v4640 = vmul.f32 %v4204, %v4512
        %v4641 = vmul.f32 %v4207, %v4513
        %v4642 = vmul.f32 %v4210, %v4514
        %v4643 = vmul.f32 %v4213, %v4515
        %v4644 = vmul.f32 %v4216, %v4516
        %v4645 = vmul.f32 %v4219, %v4517
        %v4646 = vmul.f32 %v4222, %v4518
        %v4647 = vmul.f32 %v4225, %v4519
        %v4648 = vmul.f32 %v4228, %v4520
        %v4649 = vmul.f32 %v4231, %v4521
        %v4650 = vmul.f32 %v4234, %v4522
        %v4651 = vmul.f32 %v4237, %v4523
        %v4652 = vmul.f32 %v4240, %v4524
        %v4653 = vmul.f32 %v4243, %v4525
        %v4654 = vmul.f32 %v4246, %v4526
        %v4655 = vmul.f32 %v4249, %v4527
        %v4656 = vmul.f32 %v4252, %v4528
        %v4657 = vmul.f32 %v4255, %v4529
        %v4658 = vmul.f32 %v4258, %v4530
        %v4659 = vmul.f32 %v4261, %v4531
        %v4660 = vmul.f32 %v4264, %v4532
        %v4661 = vmul.f32 %v4267, %v4533
        %v4662 = vmul.f32 %v4270, %v4534
        %v4663 = vmul.f32 %v4273, %v4535
        %v4664 = vmul.f32 %v4276, %v4536
        %v4665 = vmul.f32 %v4279, %v4537
        %v4666 = vmul.f32 %v4282, %v4538
        %v4667 = vmul.f32 %v4285, %v4539
        %v4668 = vmul.f32 %v4288, %v4540
        %v4669 = vmul.f32 %v4291, %v4541
        %v4670 = vmul.f32 %v4294, %v4542
        %v4671 = vmul.f32 %v4297, %v4543
        %v4672 = vmul.f32 %v4300, %v4544
        %v4673 = vmul.f32 %v4303, %v4545
        %v4674 = vmul.f32 %v4306, %v4546
        %v4675 = vmul.f32 %v4309, %v4547
        %v4676 = vmul.f32 %v4312, %v4548
        %v4677 = vmul.f32 %v4315, %v4549
        %v4678 = vmul.f32 %v4318, %v4550
        %v4679 = vmul.f32 %v4321, %v4551
        %v4680 = vmul.f32 %v4324, %v4552
        %v4681 = vmul.f32 %v4327, %v4553
        %v4682 = vmul.f32 %v4330, %v4554
        %v4683 = vmul.f32 %v4333, %v4555
        %v4684 = vmul.f32 %v4336, %v4556
        %v4685 = vmul.f32 %v4339, %v4557
        %v4686 = vmul.f32 %v4342, %v4558
        %v4687 = vmul.f32 %v4345, %v4559
        %v4688 = vmul.f32 %v4348, %v4560
        %v4689 = vmul.f32 %v4351, %v4561
        %v4690 = vmul.f32 %v4354, %v4562
        %v4691 = vmul.f32 %v4357, %v4563
        %v4692 = vmul.f32 %v4360, %v4564
        %v4693 = vmul.f32 %v4363, %v4565
        %v4694 = vmul.f32 %v4366, %v4566
        %v4695 = vmul.f32 %v4369, %v4567
        %v4696 = vmul.f32 %v4372, %v4568
        %v4697 = vmul.f32 %v4375, %v4569
        %v4698 = vmul.f32 %v4378, %v4570
        %v4699 = vmul.f32 %v4381, %v4571
        %v4700 = vmul.f32 %v4384, %v4572
        %v4701 = vmul.f32 %v4387, %v4573
        %v4702 = vmul.f32 %v4390, %v4574
        %v4703 = vmul.f32 %v4393, %v4575
        %v4704 = vmul.f32 %v4396, %v4576
        %v4705 = vmul.f32 %v4399, %v4577
        %v4706 = vmul.f32 %v4402, %v4578
        %v4707 = vmul.f32 %v4405, %v4579
        %v4708 = vmul.f32 %v4408, %v4580
        %v4709 = vmul.f32 %v4411, %v4581
        %v4710 = vmul.f32 %v4414, %v4582
        %v4711 = vmul.f32 %v4417, %v4583
        %v4712 = vmul.f32 %v4420, %v4584
        %v4713 = vmul.f32 %v4423, %v4585
        %v4714 = vmul.f32 %v4426, %v4586
        %v4715 = vmul.f32 %v4429, %v4587
        %v4716 = vmul.f32 %v4432, %v4588
        %v4717 = vmul.f32 %v4435, %v4589
        %v4718 = vmul.f32 %v4438, %v4590
        %v4719 = vmul.f32 %v4441, %v4591
        %v4720 = vmul.f32 %v4444, %v4592
        %v4721 = vmul.f32 %v4447, %v4593
        %v4722 = vmul.f32 %v4450, %v4594
        %v4723 = vmul.f32 %v4453, %v4595
        %v4724 = vmul.f32 %v4456, %v4596
        %v4725 = vmul.f32 %v4459, %v4597
        %v4726 = vmul.f32 %v4462, %v4598
        %v4727 = vmul.f32 %v4465, %v4599
        %v4728 = vmul.f32 %v4468, %v4600
        %v4729 = vmul.f32 %v4471, %v4601
        %v4730 = vmul.f32 %v4474, %v4602
        %v4731 = vsub.f32 2.0, %v4603
        %v4732 = vsub.f32 2.0, %v4604
        %v4733 = vsub.f32 2.0, %v4605
        %v4734 = vsub.f32 2.0, %v4606
        %v4735 = vsub.f32 2.0, %v4607
        %v4736 = vsub.f32 2.0, %v4608
        %v4737 = vsub.f32 2.0, %v4609
        %v4738 = vsub.f32 2.0, %v4610
        %v4739 = vsub.f32 2.0, %v4611
        %v4740 = vsub.f32 2.0, %v4612
        %v4741 = vsub.f32 2.0, %v4613
        %v4742 = vsub.f32 2.0, %v4614
        %v4743 = vsub.f32 2.0, %v4615
        %v4744 = vsub.f32 2.0, %v4616
        %v4745 = vsub.f32 2.0, %v4617
        %v4746 = vsub.f32 2.0, %v4618
        %v4747 = vsub.f32 2.0, %v4619
        %v4748 = vsub.f32 2.0, %v4620
        %v4749 = vsub.f32 2.0, %v4621
        %v4750 = vsub.f32 2.0, %v4622
        %v4751 = vsub.f32 2.0, %v4623
        %v4752 = vsub.f32 2.0, %v4624
        %v4753 = vsub.f32 2.0, %v4625
        %v4754 = vsub.f32 2.0, %v4626
        %v4755 = vsub.f32 2.0, %v4627
        %v4756 = vsub.f32 2.0, %v4628
        %v4757 = vsub.f32 2.0, %v4629
        %v4758 = vsub.f32 2.0, %v4630
        %v4759 = vsub.f32 2.0, %v4631
        %v4760 = vsub.f32 2.0, %v4632
        %v4761 = vsub.f32 2.0, %v4633
        %v4762 = vsub.f32 2.0, %v4634
        %v4763 = vsub.f32 2.0, %v4635
        %v4764 = vsub.f32 2.0, %v4636
        %v4765 = vsub.f32 2.0, %v4637
        %v4766 = vsub.f32 2.0, %v4638
        %v4767 = vsub.f32 2.0, %v4639
        %v4768 = vsub.f32 2.0, %v4640
        %v4769 = vsub.f32 2.0, %v4641
        %v4770 = vsub.f32 2.0, %v4642
        %v4771 = vsub.f32 2.0, %v4643
        %v4772 = vsub.f32 2.0, %v4644
        %v4773 = vsub.f32 2.0, %v4645
        %v4774 = vsub.f32 2.0, %v4646
        %v4775 = vsub.f32 2.0, %v4647
        %v4776 = vsub.f32 2.0, %v4648
        %v4777 = vsub.f32 2.0, %v4649
        %v4778 = vsub.f32 2.0, %v4650
        %v4779 = vsub.f32 2.0, %v4651
        %v4780 = vsub.f32 2.0, %v4652
        %v4781 = vsub.f32 2.0, %v4653
        %v4782 = vsub.f32 2.0, %v4654
        %v4783 = vsub.f32 2.0, %v4655
        %v4784 = vsub.f32 2.0, %v4656
        %v4785 = vsub.f32 2.0, %v4657
        %v4786 = vsub.f32 2.0, %v4658
        %v4787 = vsub.f32 2.0, %v4659
        %v4788 = vsub.f32 2.0, %v4660
        %v4789 = vsub.f32 2.0, %v4661
        %v4790 = vsub.f32 2.0, %v4662
        %v4791 = vsub.f32 2.0, %v4663
        %v4792 = vsub.f32 2.0, %v4664
        %v4793 = vsub.f32 2.0, %v4665
        %v4794 = vsub.f32 2.0, %v4666
        %v4795 = vsub.f32 2.0, %v4667
        %v4796 = vsub.f32 2.0, %v4668
        %v4797 = vsub.f32 2.0, %v4669
        %v4798 = vsub.f32 2.0, %v4670
        %v4799 = vsub.f32 2.0, %v4671
        %v4800 = vsub.f32 2.0, %v4672
        %v4801 = vsub.f32 2.0, %v4673
        %v4802 = vsub.f32 2.0, %v4674
        %v4803 = vsub.f32 2.0, %v4675
        %v4804 = vsub.f32 2.0, %v4676
        %v4805 = vsub.f32 2.0, %v4677
        %v4806 = vsub.f32 2.0, %v4678
        %v4807 = vsub.f32 2.0, %v4679
        %v4808 = vsub.f32 2.0, %v4680
        %v4809 = vsub.f32 2.0, %v4681
        %v4810 = vsub.f32 2.0, %v4682
        %v4811 = vsub.f32 2.0, %v4683
        %v4812 = vsub.f32 2.0, %v4684
        %v4813 = vsub.f32 2.0, %v4685
        %v4814 = vsub.f32 2.0, %v4686
        %v4815 = vsub.f32 2.0, %v4687
        %v4816 = vsub.f32 2.0, %v4688
        %v4817 = vsub.f32 2.0, %v4689
        %v4818 = vsub.f32 2.0, %v4690
        %v4819 = vsub.f32 2.0, %v4691
        %v4820 = vsub.f32 2.0, %v4692
        %v4821 = vsub.f32 2.0, %v4693
        %v4822 = vsub.f32 2.0, %v4694
        %v4823 = vsub.f32 2.0, %v4695
        %v4824 = vsub.f32 2.0, %v4696
        %v4825 = vsub.f32 2.0, %v4697
        %v4826 = vsub.f32 2.0, %v4698
        %v4827 = vsub.f32 2.0, %v4699
        %v4828 = vsub.f32 2.0, %v4700
        %v4829 = vsub.f32 2.0, %v4701
        %v4830 = vsub.f32 2.0, %v4702
        %v4831 = vsub.f32 2.0, %v4703
        %v4832 = vsub.f32 2.0, %v4704
        %v4833 = vsub.f32 2.0, %v4705
        %v4834 = vsub.f32 2.0, %v4706
        %v4835 = vsub.f32 2.0, %v4707
        %v4836 = vsub.f32 2.0, %v4708
        %v4837 = vsub.f32 2.0, %v4709
        %v4838 = vsub.f32 2.0, %v4710
        %v4839 = vsub.f32 2.0, %v4711
        %v4840 = vsub.f32 2.0, %v4712
        %v4841 = vsub.f32 2.0, %v4713
        %v4842 = vsub.f32 2.0, %v4714
        %v4843 = vsub.f32 2.0, %v4715
        %v4844 = vsub.f32 2.0, %v4716
        %v4845 = vsub.f32 2.0, %v4717
        %v4846 = vsub.f32 2.0, %v4718
        %v4847 = vsub.f32 2.0, %v4719
        %v4848 = vsub.f32 2.0, %v4720
        %v4849 = vsub.f32 2.0, %v4721
        %v4850 = vsub.f32 2.0, %v4722
        %v4851 = vsub.f32 2.0, %v4723
        %v4852 = vsub.f32 2.0, %v4724
        %v4853 = vsub.f32 2.0, %v4725
        %v4854 = vsub.f32 2.0, %v4726
        %v4855 = vsub.f32 2.0, %v4727
        %v4856 = vsub.f32 2.0, %v4728
        %v4857 = vsub.f32 2.0, %v4729
        %v4858 = vsub.f32 2.0, %v4730
        %v4859 = vmul.f32 %v4475, %v4731
        %v4860 = vmul.f32 %v4476, %v4732
        %v4861 = vmul.f32 %v4477, %v4733
        %v4862 = vmul.f32 %v4478, %v4734
        %v4863 = vmul.f32 %v4479, %v4735
        %v4864 = vmul.f32 %v4480, %v4736
        %v4865 = vmul.f32 %v4481, %v4737
        %v4866 = vmul.f32 %v4482, %v4738
        %v4867 = vmul.f32 %v4483, %v4739
        %v4868 = vmul.f32 %v4484, %v4740
        %v4869 = vmul.f32 %v4485, %v4741
        %v4870 = vmul.f32 %v4486, %v4742
        %v4871 = vmul.f32 %v4487, %v4743
        %v4872 = vmul.f32 %v4488, %v4744
        %v4873 = vmul.f32 %v4489, %v4745
        %v4874 = vmul.f32 %v4490, %v4746
        %v4875 = vmul.f32 %v4491, %v4747
        %v4876 = vmul.f32 %v4492, %v4748
        %v4877 = vmul.f32 %v4493, %v4749
        %v4878 = vmul.f32 %v4494, %v4750
        %v4879 = vmul.f32 %v4495, %v4751
        %v4880 = vmul.f32 %v4496, %v4752
        %v4881 = vmul.f32 %v4497, %v4753
        %v4882 = vmul.f32 %v4498, %v4754
        %v4883 = vmul.f32 %v4499, %v4755
        %v4884 = vmul.f32 %v4500, %v4756
        %v4885 = vmul.f32 %v4501, %v4757
        %v4886 = vmul.f32 %v4502, %v4758
        %v4887 = vmul.f32 %v4503, %v4759
        %v4888 = vmul.f32 %v4504, %v4760
        %v4889 = vmul.f32 %v4505, %v4761
        %v4890 = vmul.f32 %v4506, %v4762
        %v4891 = vmul.f32 %v4507, %v4763
        %v4892 = vmul.f32 %v4508, %v4764
        %v4893 = vmul.f32 %v4509, %v4765
        %v4894 = vmul.f32 %v4510, %v4766
        %v4895 = vmul.f32 %v4511, %v4767
        %v4896 = vmul.f32 %v4512, %v4768
        %v4897 = vmul.f32 %v4513, %v4769
        %v4898 = vmul.f32 %v4514, %v4770
        %v4899 = vmul.f32 %v4515, %v4771
        %v4900 = vmul.f32 %v4516, %v4772
        %v4901 = vmul.f32 %v4517, %v4773
        %v4902 = vmul.f32 %v4518, %v4774
        %v4903 = vmul.f32 %v4519, %v4775
        %v4904 = vmul.f32 %v4520, %v4776
        %v4905 = vmul.f32 %v4521, %v4777
        %v4906 = vmul.f32 %v4522, %v4778
        %v4907 = vmul.f32 %v4523, %v4779
        %v4908 = vmul.f32 %v4524, %v4780
        %v4909 = vmul.f32 %v4525, %v4781
        %v4910 = vmul.f32 %v4526, %v4782
        %v4911 = vmul.f32 %v4527, %v4783
        %v4912 = vmul.f32 %v4528, %v4784
        %v4913 = vmul.f32 %v4529, %v4785
        %v4914 = vmul.f32 %v4530, %v4786
        %v4915 = vmul.f32 %v4531, %v4787
        %v4916 = vmul.f32 %v4532, %v4788
        %v4917 = vmul.f32 %v4533, %v4789
        %v4918 = vmul.f32 %v4534, %v4790
        %v4919 = vmul.f32 %v4535, %v4791
        %v4920 = vmul.f32 %v4536, %v4792
        %v4921 = vmul.f32 %v4537, %v4793
        %v4922 = vmul.f32 %v4538, %v4794
        %v4923 = vmul.f32 %v4539, %v4795
        %v4924 = vmul.f32 %v4540, %v4796
        %v4925 = vmul.f32 %v4541, %v4797
        %v4926 = vmul.f32 %v4542, %v4798
        %v4927 = vmul.f32 %v4543, %v4799
        %v4928 = vmul.f32 %v4544, %v4800
        %v4929 = vmul.f32 %v4545, %v4801
        %v4930 = vmul.f32 %v4546, %v4802
        %v4931 = vmul.f32 %v4547, %v4803
        %v4932 = vmul.f32 %v4548, %v4804
        %v4933 = vmul.f32 %v4549, %v4805
        %v4934 = vmul.f32 %v4550, %v4806
        %v4935 = vmul.f32 %v4551, %v4807
        %v4936 = vmul.f32 %v4552, %v4808
        %v4937 = vmul.f32 %v4553, %v4809
        %v4938 = vmul.f32 %v4554, %v4810
        %v4939 = vmul.f32 %v4555, %v4811
        %v4940 = vmul.f32 %v4556, %v4812
        %v4941 = vmul.f32 %v4557, %v4813
        %v4942 = vmul.f32 %v4558, %v4814
        %v4943 = vmul.f32 %v4559, %v4815
        %v4944 = vmul.f32 %v4560, %v4816
        %v4945 = vmul.f32 %v4561, %v4817
        %v4946 = vmul.f32 %v4562, %v4818
        %v4947 = vmul.f32 %v4563, %v4819
        %v4948 = vmul.f32 %v4564, %v4820
        %v4949 = vmul.f32 %v4565, %v4821
        %v4950 = vmul.f32 %v4566, %v4822
        %v4951 = vmul.f32 %v4567, %v4823
        %v4952 = vmul.f32 %v4568, %v4824
        %v4953 = vmul.f32 %v4569, %v4825
        %v4954 = vmul.f32 %v4570, %v4826
        %v4955 = vmul.f32 %v4571, %v4827
        %v4956 = vmul.f32 %v4572, %v4828
        %v4957 = vmul.f32 %v4573, %v4829
        %v4958 = vmul.f32 %v4574, %v4830
        %v4959 = vmul.f32 %v4575, %v4831
        %v4960 = vmul.f32 %v4576, %v4832
        %v4961 = vmul.f32 %v4577, %v4833
        %v4962 = vmul.f32 %v4578, %v4834
        %v4963 = vmul.f32 %v4579, %v4835
        %v4964 = vmul.f32 %v4580, %v4836
        %v4965 = vmul.f32 %v4581, %v4837
        %v4966 = vmul.f32 %v4582, %v4838
        %v4967 = vmul.f32 %v4583, %v4839
        %v4968 = vmul.f32 %v4584, %v4840
        %v4969 = vmul.f32 %v4585, %v4841
        %v4970 = vmul.f32 %v4586, %v4842
        %v4971 = vmul.f32 %v4587, %v4843
        %v4972 = vmul.f32 %v4588, %v4844
        %v4973 = vmul.f32 %v4589, %v4845
        %v4974 = vmul.f32 %v4590, %v4846
        %v4975 = vmul.f32 %v4591, %v4847
        %v4976 = vmul.f32 %v4592, %v4848
        %v4977 = vmul.f32 %v4593, %v4849
        %v4978 = vmul.f32 %v4594, %v4850
        %v4979 = vmul.f32 %v4595, %v4851
        %v4980 = vmul.f32 %v4596, %v4852
        %v4981 = vmul.f32 %v4597, %v4853
        %v4982 = vmul.f32 %v4598, %v4854
        %v4983 = vmul.f32 %v4599, %v4855
        %v4984 = vmul.f32 %v4600, %v4856
        %v4985 = vmul.f32 %v4601, %v4857
        %v4986 = vmul.f32 %v4602, %v4858
        %4987 = vmatprep.subr.mxu0 0.0
        %4988 = vmatpush1.msra.mxu0 %v496
        %4989 = vmatprep.subr.mxu0 0.0
        %4990 = vmatpush1.msra.mxu0 %v497
        %4991 = vmatprep.subr.mxu0 0.0
        %4992 = vmatpush1.msra.mxu0 %v498
        %4993 = vmatprep.subr.mxu0 0.0
        %4994 = vmatpush1.msra.mxu0 %v499
        %4995 = vmatprep.subr.mxu0 0.0
        %4996 = vmatpush1.msra.mxu0 %v500
        %4997 = vmatprep.subr.mxu0 0.0
        %4998 = vmatpush1.msra.mxu0 %v501
        %4999 = vmatprep.subr.mxu0 0.0
        %5000 = vmatpush1.msra.mxu0 %v502
        %5001 = vmatprep.subr.mxu0 0.0
        %5002 = vmatpush1.msra.mxu0 %v503
        %5003 = vmatprep.subr.mxu0 0.0
        %5004 = vmatpush1.msra.mxu0 %v504
        %5005 = vmatprep.subr.mxu0 0.0
        %5006 = vmatpush1.msra.mxu0 %v505
        %5007 = vmatprep.subr.mxu0 0.0
        %5008 = vmatpush1.msra.mxu0 %v506
        %5009 = vmatprep.subr.mxu0 0.0
        %5010 = vmatpush1.msra.mxu0 %v507
        %5011 = vmatprep.subr.mxu0 0.0
        %5012 = vmatpush1.msra.mxu0 %v508
        %5013 = vmatprep.subr.mxu0 0.0
        %5014 = vmatpush1.msra.mxu0 %v509
        %5015 = vmatprep.subr.mxu0 0.0
        %5016 = vmatpush1.msra.mxu0 %v510
        %5017 = vmatprep.subr.mxu0 0.0
        %5018 = vmatpush1.msra.mxu0 %v511
        %5019 = vmatprep.subr.mxu0 0.0
        %5020 = vmatpush1.msra.mxu0 %v512
        %5021 = vmatprep.subr.mxu0 0.0
        %5022 = vmatpush1.msra.mxu0 %v513
        %5023 = vmatprep.subr.mxu0 0.0
        %5024 = vmatpush1.msra.mxu0 %v514
        %5025 = vmatprep.subr.mxu0 0.0
        %5026 = vmatpush1.msra.mxu0 %v515
        %5027 = vmatprep.subr.mxu0 0.0
        %5028 = vmatpush1.msra.mxu0 %v516
        %5029 = vmatprep.subr.mxu0 0.0
        %5030 = vmatpush1.msra.mxu0 %v517
        %5031 = vmatprep.subr.mxu0 0.0
        %5032 = vmatpush1.msra.mxu0 %v518
        %5033 = vmatprep.subr.mxu0 0.0
        %5034 = vmatpush1.msra.mxu0 %v519
        %5035 = vmatprep.subr.mxu0 0.0
        %5036 = vmatpush1.msra.mxu0 %v520
        %5037 = vmatprep.subr.mxu0 0.0
        %5038 = vmatpush1.msra.mxu0 %v521
        %5039 = vmatprep.subr.mxu0 0.0
        %5040 = vmatpush1.msra.mxu0 %v522
        %5041 = vmatprep.subr.mxu0 0.0
        %5042 = vmatpush1.msra.mxu0 %v523
        %5043 = vmatprep.subr.mxu0 0.0
        %5044 = vmatpush1.msra.mxu0 %v524
        %5045 = vmatprep.subr.mxu0 0.0
        %5046 = vmatpush1.msra.mxu0 %v525
        %5047 = vmatprep.subr.mxu0 0.0
        %5048 = vmatpush1.msra.mxu0 %v526
        %5049 = vmatprep.subr.mxu0 0.0
        %5050 = vmatpush1.msra.mxu0 %v527
        %5051 = vmatprep.mubr.f32.mxu0 %v3582
        %5052 = vmatmul.mubr.f32.gmra.mrb[0].mxu0 %v3580
        %v5053 = vpop.f32.mrb[0].mxu0
        %v5054 = vadd.f32 0.0, %v5053
        %v5055 = vpop.f32.mrb[0].mxu0
        %5056 = vmatprep.mubr.f32.mxu0 %v3586
        %5057 = vmatmul.mubr.f32.gmra.mrb[0].mxu0 %v3584
        %v5058 = vpop.f32.mrb[0].mxu0
        %v5059 = vadd.f32 0.0, %v5058
        %v5060 = vpop.f32.mrb[0].mxu0
        %5061 = vmatprep.mubr.f32.mxu0 %v3590
        %5062 = vmatmul.mubr.f32.gmra.mrb[0].mxu0 %v3588
        %v5063 = vpop.f32.mrb[0].mxu0
        %v5064 = vadd.f32 0.0, %v5063
        %v5065 = vpop.f32.mrb[0].mxu0
        %5066 = vmatprep.mubr.f32.mxu0 %v3594
        %5067 = vmatmul.mubr.f32.gmra.mrb[0].mxu0 %v3592
        %v5068 = vpop.f32.mrb[0].mxu0
        %v5069 = vadd.f32 0.0, %v5068
        %v5070 = vpop.f32.mrb[0].mxu0
        %5071 = vmatprep.mubr.f32.mxu0 %v3598
        %5072 = vmatmul.mubr.f32.gmra.mrb[0].mxu0 %v3596
        %v5073 = vpop.f32.mrb[0].mxu0
        %v5074 = vadd.f32 0.0, %v5073
        %v5075 = vpop.f32.mrb[0].mxu0
        %5076 = vmatprep.mubr.f32.mxu0 %v3602
        %5077 = vmatmul.mubr.f32.gmra.mrb[0].mxu0 %v3600
        %v5078 = vpop.f32.mrb[0].mxu0
        %v5079 = vadd.f32 0.0, %v5078
        %v5080 = vpop.f32.mrb[0].mxu0
        %5081 = vmatprep.mubr.f32.mxu0 %v3606
        %5082 = vmatmul.mubr.f32.gmra.mrb[0].mxu0 %v3604
        %v5083 = vpop.f32.mrb[0].mxu0
        %v5084 = vadd.f32 0.0, %v5083
        %v5085 = vpop.f32.mrb[0].mxu0
        %5086 = vmatprep.mubr.f32.mxu0 %v3610
        %5087 = vmatmul.mubr.f32.gmra.mrb[0].mxu0 %v3608
        %v5088 = vpop.f32.mrb[0].mxu0
        %v5089 = vadd.f32 0.0, %v5088
        %v5090 = vpop.f32.mrb[0].mxu0
        %5091 = vmatprep.mubr.f32.mxu0 %v3614
        %5092 = vmatmul.mubr.f32.gmra.mrb[0].mxu0 %v3612
        %v5093 = vpop.f32.mrb[0].mxu0
        %v5094 = vadd.f32 0.0, %v5093
        %v5095 = vpop.f32.mrb[0].mxu0
        %5096 = vmatprep.mubr.f32.mxu0 %v3618
        %5097 = vmatmul.mubr.f32.gmra.mrb[0].mxu0 %v3616
        %v5098 = vpop.f32.mrb[0].mxu0
        %v5099 = vadd.f32 0.0, %v5098
        %v5100 = vpop.f32.mrb[0].mxu0
        %5101 = vmatprep.mubr.f32.mxu0 %v3622
        %5102 = vmatmul.mubr.f32.gmra.mrb[0].mxu0 %v3620
        %v5103 = vpop.f32.mrb[0].mxu0
        %v5104 = vadd.f32 0.0, %v5103
        %v5105 = vpop.f32.mrb[0].mxu0
        %5106 = vmatprep.mubr.f32.mxu0 %v3626
        %5107 = vmatmul.mubr.f32.gmra.mrb[0].mxu0 %v3624
        %v5108 = vpop.f32.mrb[0].mxu0
        %v5109 = vadd.f32 0.0, %v5108
        %v5110 = vpop.f32.mrb[0].mxu0
        %5111 = vmatprep.mubr.f32.mxu0 %v3630
        %5112 = vmatmul.mubr.f32.gmra.mrb[0].mxu0 %v3628
        %v5113 = vpop.f32.mrb[0].mxu0
        %v5114 = vadd.f32 0.0, %v5113
        %v5115 = vpop.f32.mrb[0].mxu0
        %5116 = vmatprep.mubr.f32.mxu0 %v3634
        %5117 = vmatmul.mubr.f32.gmra.mrb[0].mxu0 %v3632
        %v5118 = vpop.f32.mrb[0].mxu0
        %v5119 = vadd.f32 0.0, %v5118
        %v5120 = vpop.f32.mrb[0].mxu0
        %5121 = vmatprep.mubr.f32.mxu0 %v3638
        %5122 = vmatmul.mubr.f32.gmra.mrb[0].mxu0 %v3636
        %v5123 = vpop.f32.mrb[0].mxu0
        %v5124 = vadd.f32 0.0, %v5123
        %v5125 = vpop.f32.mrb[0].mxu0
        %5126 = vmatprep.mubr.f32.mxu0 %v3642
        %5127 = vmatmul.mubr.f32.gmra.mrb[0].mxu0 %v3640
        %v5128 = vpop.f32.mrb[0].mxu0
        %v5129 = vadd.f32 0.0, %v5128
        %v5130 = vpop.f32.mrb[0].mxu0
        %5131 = vmatprep.mubr.f32.mxu0 %v3646
        %5132 = vmatmul.mubr.f32.gmra.mrb[0].mxu0 %v3644
        %v5133 = vpop.f32.mrb[0].mxu0
        %v5134 = vadd.f32 0.0, %v5133
        %v5135 = vpop.f32.mrb[0].mxu0
        %5136 = vmatprep.mubr.f32.mxu0 %v3650
        %5137 = vmatmul.mubr.f32.gmra.mrb[0].mxu0 %v3648
        %v5138 = vpop.f32.mrb[0].mxu0
        %v5139 = vadd.f32 0.0, %v5138
        %v5140 = vpop.f32.mrb[0].mxu0
        %5141 = vmatprep.mubr.f32.mxu0 %v3654
        %5142 = vmatmul.mubr.f32.gmra.mrb[0].mxu0 %v3652
        %v5143 = vpop.f32.mrb[0].mxu0
        %v5144 = vadd.f32 0.0, %v5143
        %v5145 = vpop.f32.mrb[0].mxu0
        %5146 = vmatprep.mubr.f32.mxu0 %v3658
        %5147 = vmatmul.mubr.f32.gmra.mrb[0].mxu0 %v3656
        %v5148 = vpop.f32.mrb[0].mxu0
        %v5149 = vadd.f32 0.0, %v5148
        %v5150 = vpop.f32.mrb[0].mxu0
        %5151 = vmatprep.mubr.f32.mxu0 %v3662
        %5152 = vmatmul.mubr.f32.gmra.mrb[0].mxu0 %v3660
        %v5153 = vpop.f32.mrb[0].mxu0
        %v5154 = vadd.f32 0.0, %v5153
        %v5155 = vpop.f32.mrb[0].mxu0
        %5156 = vmatprep.mubr.f32.mxu0 %v3666
        %5157 = vmatmul.mubr.f32.gmra.mrb[0].mxu0 %v3664
        %v5158 = vpop.f32.mrb[0].mxu0
        %v5159 = vadd.f32 0.0, %v5158
        %v5160 = vpop.f32.mrb[0].mxu0
        %5161 = vmatprep.mubr.f32.mxu0 %v3670
        %5162 = vmatmul.mubr.f32.gmra.mrb[0].mxu0 %v3668
        %v5163 = vpop.f32.mrb[0].mxu0
        %v5164 = vadd.f32 0.0, %v5163
        %v5165 = vpop.f32.mrb[0].mxu0
        %5166 = vmatprep.mubr.f32.mxu0 %v3674
        %5167 = vmatmul.mubr.f32.gmra.mrb[0].mxu0 %v3672
        %v5168 = vpop.f32.mrb[0].mxu0
        %v5169 = vadd.f32 0.0, %v5168
        %v5170 = vpop.f32.mrb[0].mxu0
        %5171 = vmatprep.mubr.f32.mxu0 %v3678
        %5172 = vmatmul.mubr.f32.gmra.mrb[0].mxu0 %v3676
        %v5173 = vpop.f32.mrb[0].mxu0
        %v5174 = vadd.f32 0.0, %v5173
        %v5175 = vpop.f32.mrb[0].mxu0
        %5176 = vmatprep.mubr.f32.mxu0 %v3682
        %5177 = vmatmul.mubr.f32.gmra.mrb[0].mxu0 %v3680
        %v5178 = vpop.f32.mrb[0].mxu0
        %v5179 = vadd.f32 0.0, %v5178
        %v5180 = vpop.f32.mrb[0].mxu0
        %5181 = vmatprep.mubr.f32.mxu0 %v3686
        %5182 = vmatmul.mubr.f32.gmra.mrb[0].mxu0 %v3684
        %v5183 = vpop.f32.mrb[0].mxu0
        %v5184 = vadd.f32 0.0, %v5183
        %v5185 = vpop.f32.mrb[0].mxu0
        %5186 = vmatprep.mubr.f32.mxu0 %v3690
        %5187 = vmatmul.mubr.f32.gmra.mrb[0].mxu0 %v3688
        %v5188 = vpop.f32.mrb[0].mxu0
        %v5189 = vadd.f32 0.0, %v5188
        %v5190 = vpop.f32.mrb[0].mxu0
        %5191 = vmatprep.mubr.f32.mxu0 %v3694
        %5192 = vmatmul.mubr.f32.gmra.mrb[0].mxu0 %v3692
        %v5193 = vpop.f32.mrb[0].mxu0
        %v5194 = vadd.f32 0.0, %v5193
        %v5195 = vpop.f32.mrb[0].mxu0
        %5196 = vmatprep.mubr.f32.mxu0 %v3698
        %5197 = vmatmul.mubr.f32.gmra.mrb[0].mxu0 %v3696
        %v5198 = vpop.f32.mrb[0].mxu0
        %v5199 = vadd.f32 0.0, %v5198
        %v5200 = vpop.f32.mrb[0].mxu0
        %5201 = vmatprep.mubr.f32.mxu0 %v3702
        %5202 = vmatmul.mubr.f32.gmra.mrb[0].mxu0 %v3700
        %v5203 = vpop.f32.mrb[0].mxu0
        %v5204 = vadd.f32 0.0, %v5203
        %v5205 = vpop.f32.mrb[0].mxu0
        %5206 = vmatprep.mubr.f32.mxu0 %v3706
        %5207 = vmatmul.mubr.f32.gmra.mrb[0].mxu0 %v3704
        %v5208 = vpop.f32.mrb[0].mxu0
        %v5209 = vadd.f32 0.0, %v5208
        %v5210 = vpop.f32.mrb[0].mxu0
        %5211 = vdwg.mxu0
        %5212 = vmatprep.subr.mxu0 0.0
        %5213 = vmatpush1.msra.mxu0 %v528
        %5214 = vmatprep.subr.mxu0 0.0
        %5215 = vmatpush1.msra.mxu0 %v529
        %5216 = vmatprep.subr.mxu0 0.0
        %5217 = vmatpush1.msra.mxu0 %v530
        %5218 = vmatprep.subr.mxu0 0.0
        %5219 = vmatpush1.msra.mxu0 %v531
        %5220 = vmatprep.subr.mxu0 0.0
        %5221 = vmatpush1.msra.mxu0 %v532
        %5222 = vmatprep.subr.mxu0 0.0
        %5223 = vmatpush1.msra.mxu0 %v533
        %5224 = vmatprep.subr.mxu0 0.0
        %5225 = vmatpush1.msra.mxu0 %v534
        %5226 = vmatprep.subr.mxu0 0.0
        %5227 = vmatpush1.msra.mxu0 %v535
        %5228 = vmatprep.subr.mxu0 0.0
        %5229 = vmatpush1.msra.mxu0 %v536
        %5230 = vmatprep.subr.mxu0 0.0
        %5231 = vmatpush1.msra.mxu0 %v537
        %5232 = vmatprep.subr.mxu0 0.0
        %5233 = vmatpush1.msra.mxu0 %v538
        %5234 = vmatprep.subr.mxu0 0.0
        %5235 = vmatpush1.msra.mxu0 %v539
        %5236 = vmatprep.subr.mxu0 0.0
        %5237 = vmatpush1.msra.mxu0 %v540
        %5238 = vmatprep.subr.mxu0 0.0
        %5239 = vmatpush1.msra.mxu0 %v541
        %5240 = vmatprep.subr.mxu0 0.0
        %5241 = vmatpush1.msra.mxu0 %v542
        %5242 = vmatprep.subr.mxu0 0.0
        %5243 = vmatpush1.msra.mxu0 %v543
        %5244 = vmatprep.subr.mxu0 0.0
        %5245 = vmatpush1.msra.mxu0 %v544
        %5246 = vmatprep.subr.mxu0 0.0
        %5247 = vmatpush1.msra.mxu0 %v545
        %5248 = vmatprep.subr.mxu0 0.0
        %5249 = vmatpush1.msra.mxu0 %v546
        %5250 = vmatprep.subr.mxu0 0.0
        %5251 = vmatpush1.msra.mxu0 %v547
        %5252 = vmatprep.subr.mxu0 0.0
        %5253 = vmatpush1.msra.mxu0 %v548
        %5254 = vmatprep.subr.mxu0 0.0
        %5255 = vmatpush1.msra.mxu0 %v549
        %5256 = vmatprep.subr.mxu0 0.0
        %5257 = vmatpush1.msra.mxu0 %v550
        %5258 = vmatprep.subr.mxu0 0.0
        %5259 = vmatpush1.msra.mxu0 %v551
        %5260 = vmatprep.subr.mxu0 0.0
        %5261 = vmatpush1.msra.mxu0 %v552
        %5262 = vmatprep.subr.mxu0 0.0
        %5263 = vmatpush1.msra.mxu0 %v553
        %5264 = vmatprep.subr.mxu0 0.0
        %5265 = vmatpush1.msra.mxu0 %v554
        %5266 = vmatprep.subr.mxu0 0.0
        %5267 = vmatpush1.msra.mxu0 %v555
        %5268 = vmatprep.subr.mxu0 0.0
        %5269 = vmatpush1.msra.mxu0 %v556
        %5270 = vmatprep.subr.mxu0 0.0
        %5271 = vmatpush1.msra.mxu0 %v557
        %5272 = vmatprep.subr.mxu0 0.0
        %5273 = vmatpush1.msra.mxu0 %v558
        %5274 = vmatprep.subr.mxu0 0.0
        %5275 = vmatpush1.msra.mxu0 %v559
        %5276 = vmatprep.mubr.f32.mxu0 %v3710
        %5277 = vmatmul.mubr.f32.gmra.mrb[0].mxu0 %v3708
        %v5278 = vpop.f32.mrb[0].mxu0
        %v5279 = vadd.f32 0.0, %v5278
        %v5280 = vpop.f32.mrb[0].mxu0
        %5281 = vmatprep.mubr.f32.mxu0 %v3714
        %5282 = vmatmul.mubr.f32.gmra.mrb[0].mxu0 %v3712
        %v5283 = vpop.f32.mrb[0].mxu0
        %v5284 = vadd.f32 0.0, %v5283
        %v5285 = vpop.f32.mrb[0].mxu0
        %5286 = vmatprep.mubr.f32.mxu0 %v3718
        %5287 = vmatmul.mubr.f32.gmra.mrb[0].mxu0 %v3716
        %v5288 = vpop.f32.mrb[0].mxu0
        %v5289 = vadd.f32 0.0, %v5288
        %v5290 = vpop.f32.mrb[0].mxu0
        %5291 = vmatprep.mubr.f32.mxu0 %v3722
        %5292 = vmatmul.mubr.f32.gmra.mrb[0].mxu0 %v3720
        %v5293 = vpop.f32.mrb[0].mxu0
        %v5294 = vadd.f32 0.0, %v5293
        %v5295 = vpop.f32.mrb[0].mxu0
        %5296 = vmatprep.mubr.f32.mxu0 %v3726
        %5297 = vmatmul.mubr.f32.gmra.mrb[0].mxu0 %v3724
        %v5298 = vpop.f32.mrb[0].mxu0
        %v5299 = vadd.f32 0.0, %v5298
        %v5300 = vpop.f32.mrb[0].mxu0
        %5301 = vmatprep.mubr.f32.mxu0 %v3730
        %5302 = vmatmul.mubr.f32.gmra.mrb[0].mxu0 %v3728
        %v5303 = vpop.f32.mrb[0].mxu0
        %v5304 = vadd.f32 0.0, %v5303
        %v5305 = vpop.f32.mrb[0].mxu0
        %5306 = vmatprep.mubr.f32.mxu0 %v3734
        %5307 = vmatmul.mubr.f32.gmra.mrb[0].mxu0 %v3732
        %v5308 = vpop.f32.mrb[0].mxu0
        %v5309 = vadd.f32 0.0, %v5308
        %v5310 = vpop.f32.mrb[0].mxu0
        %5311 = vmatprep.mubr.f32.mxu0 %v3738
        %5312 = vmatmul.mubr.f32.gmra.mrb[0].mxu0 %v3736
        %v5313 = vpop.f32.mrb[0].mxu0
        %v5314 = vadd.f32 0.0, %v5313
        %v5315 = vpop.f32.mrb[0].mxu0
        %5316 = vmatprep.mubr.f32.mxu0 %v3742
        %5317 = vmatmul.mubr.f32.gmra.mrb[0].mxu0 %v3740
        %v5318 = vpop.f32.mrb[0].mxu0
        %v5319 = vadd.f32 0.0, %v5318
        %v5320 = vpop.f32.mrb[0].mxu0
        %5321 = vmatprep.mubr.f32.mxu0 %v3746
        %5322 = vmatmul.mubr.f32.gmra.mrb[0].mxu0 %v3744
        %v5323 = vpop.f32.mrb[0].mxu0
        %v5324 = vadd.f32 0.0, %v5323
        %v5325 = vpop.f32.mrb[0].mxu0
        %5326 = vmatprep.mubr.f32.mxu0 %v3750
        %5327 = vmatmul.mubr.f32.gmra.mrb[0].mxu0 %v3748
        %v5328 = vpop.f32.mrb[0].mxu0
        %v5329 = vadd.f32 0.0, %v5328
        %v5330 = vpop.f32.mrb[0].mxu0
        %5331 = vmatprep.mubr.f32.mxu0 %v3754
        %5332 = vmatmul.mubr.f32.gmra.mrb[0].mxu0 %v3752
        %v5333 = vpop.f32.mrb[0].mxu0
        %v5334 = vadd.f32 0.0, %v5333
        %v5335 = vpop.f32.mrb[0].mxu0
        %5336 = vmatprep.mubr.f32.mxu0 %v3758
        %5337 = vmatmul.mubr.f32.gmra.mrb[0].mxu0 %v3756
        %v5338 = vpop.f32.mrb[0].mxu0
        %v5339 = vadd.f32 0.0, %v5338
        %v5340 = vpop.f32.mrb[0].mxu0
        %5341 = vmatprep.mubr.f32.mxu0 %v3762
        %5342 = vmatmul.mubr.f32.gmra.mrb[0].mxu0 %v3760
        %v5343 = vpop.f32.mrb[0].mxu0
        %v5344 = vadd.f32 0.0, %v5343
        %v5345 = vpop.f32.mrb[0].mxu0
        %5346 = vmatprep.mubr.f32.mxu0 %v3766
        %5347 = vmatmul.mubr.f32.gmra.mrb[0].mxu0 %v3764
        %v5348 = vpop.f32.mrb[0].mxu0
        %v5349 = vadd.f32 0.0, %v5348
        %v5350 = vpop.f32.mrb[0].mxu0
        %5351 = vmatprep.mubr.f32.mxu0 %v3770
        %5352 = vmatmul.mubr.f32.gmra.mrb[0].mxu0 %v3768
        %v5353 = vpop.f32.mrb[0].mxu0
        %v5354 = vadd.f32 0.0, %v5353
        %v5355 = vpop.f32.mrb[0].mxu0
        %5356 = vmatprep.mubr.f32.mxu0 %v3774
        %5357 = vmatmul.mubr.f32.gmra.mrb[0].mxu0 %v3772
        %v5358 = vpop.f32.mrb[0].mxu0
        %v5359 = vadd.f32 0.0, %v5358
        %v5360 = vpop.f32.mrb[0].mxu0
        %5361 = vmatprep.mubr.f32.mxu0 %v3778
        %5362 = vmatmul.mubr.f32.gmra.mrb[0].mxu0 %v3776
        %v5363 = vpop.f32.mrb[0].mxu0
        %v5364 = vadd.f32 0.0, %v5363
        %v5365 = vpop.f32.mrb[0].mxu0
        %5366 = vmatprep.mubr.f32.mxu0 %v3782
        %5367 = vmatmul.mubr.f32.gmra.mrb[0].mxu0 %v3780
        %v5368 = vpop.f32.mrb[0].mxu0
        %v5369 = vadd.f32 0.0, %v5368
        %v5370 = vpop.f32.mrb[0].mxu0
        %5371 = vmatprep.mubr.f32.mxu0 %v3786
        %5372 = vmatmul.mubr.f32.gmra.mrb[0].mxu0 %v3784
        %v5373 = vpop.f32.mrb[0].mxu0
        %v5374 = vadd.f32 0.0, %v5373
        %v5375 = vpop.f32.mrb[0].mxu0
        %5376 = vmatprep.mubr.f32.mxu0 %v3790
        %5377 = vmatmul.mubr.f32.gmra.mrb[0].mxu0 %v3788
        %v5378 = vpop.f32.mrb[0].mxu0
        %v5379 = vadd.f32 0.0, %v5378
        %v5380 = vpop.f32.mrb[0].mxu0
        %5381 = vmatprep.mubr.f32.mxu0 %v3794
        %5382 = vmatmul.mubr.f32.gmra.mrb[0].mxu0 %v3792
        %v5383 = vpop.f32.mrb[0].mxu0
        %v5384 = vadd.f32 0.0, %v5383
        %v5385 = vpop.f32.mrb[0].mxu0
        %5386 = vmatprep.mubr.f32.mxu0 %v3798
        %5387 = vmatmul.mubr.f32.gmra.mrb[0].mxu0 %v3796
        %v5388 = vpop.f32.mrb[0].mxu0
        %v5389 = vadd.f32 0.0, %v5388
        %v5390 = vpop.f32.mrb[0].mxu0
        %5391 = vmatprep.mubr.f32.mxu0 %v3802
        %5392 = vmatmul.mubr.f32.gmra.mrb[0].mxu0 %v3800
        %v5393 = vpop.f32.mrb[0].mxu0
        %v5394 = vadd.f32 0.0, %v5393
        %v5395 = vpop.f32.mrb[0].mxu0
        %5396 = vmatprep.mubr.f32.mxu0 %v3806
        %5397 = vmatmul.mubr.f32.gmra.mrb[0].mxu0 %v3804
        %v5398 = vpop.f32.mrb[0].mxu0
        %v5399 = vadd.f32 0.0, %v5398
        %v5400 = vpop.f32.mrb[0].mxu0
        %5401 = vmatprep.mubr.f32.mxu0 %v3810
        %5402 = vmatmul.mubr.f32.gmra.mrb[0].mxu0 %v3808
        %v5403 = vpop.f32.mrb[0].mxu0
        %v5404 = vadd.f32 0.0, %v5403
        %v5405 = vpop.f32.mrb[0].mxu0
        %5406 = vmatprep.mubr.f32.mxu0 %v3814
        %5407 = vmatmul.mubr.f32.gmra.mrb[0].mxu0 %v3812
        %v5408 = vpop.f32.mrb[0].mxu0
        %v5409 = vadd.f32 0.0, %v5408
        %v5410 = vpop.f32.mrb[0].mxu0
        %5411 = vmatprep.mubr.f32.mxu0 %v3818
        %5412 = vmatmul.mubr.f32.gmra.mrb[0].mxu0 %v3816
        %v5413 = vpop.f32.mrb[0].mxu0
        %v5414 = vadd.f32 0.0, %v5413
        %v5415 = vpop.f32.mrb[0].mxu0
        %5416 = vmatprep.mubr.f32.mxu0 %v3822
        %5417 = vmatmul.mubr.f32.gmra.mrb[0].mxu0 %v3820
        %v5418 = vpop.f32.mrb[0].mxu0
        %v5419 = vadd.f32 0.0, %v5418
        %v5420 = vpop.f32.mrb[0].mxu0
        %5421 = vmatprep.mubr.f32.mxu0 %v3826
        %5422 = vmatmul.mubr.f32.gmra.mrb[0].mxu0 %v3824
        %v5423 = vpop.f32.mrb[0].mxu0
        %v5424 = vadd.f32 0.0, %v5423
        %v5425 = vpop.f32.mrb[0].mxu0
        %5426 = vmatprep.mubr.f32.mxu0 %v3830
        %5427 = vmatmul.mubr.f32.gmra.mrb[0].mxu0 %v3828
        %v5428 = vpop.f32.mrb[0].mxu0
        %v5429 = vadd.f32 0.0, %v5428
        %v5430 = vpop.f32.mrb[0].mxu0
        %5431 = vmatprep.mubr.f32.mxu0 %v3834
        %5432 = vmatmul.mubr.f32.gmra.mrb[0].mxu0 %v3832
        %v5433 = vpop.f32.mrb[0].mxu0
        %v5434 = vadd.f32 0.0, %v5433
        %v5435 = vpop.f32.mrb[0].mxu0
        %5436 = vdwg.mxu0
        %5437 = vmatprep.subr.mxu0 0.0
        %5438 = vmatpush1.msra.mxu0 %v560
        %5439 = vmatprep.subr.mxu0 0.0
        %5440 = vmatpush1.msra.mxu0 %v561
        %5441 = vmatprep.subr.mxu0 0.0
        %5442 = vmatpush1.msra.mxu0 %v562
        %5443 = vmatprep.subr.mxu0 0.0
        %5444 = vmatpush1.msra.mxu0 %v563
        %5445 = vmatprep.subr.mxu0 0.0
        %5446 = vmatpush1.msra.mxu0 %v564
        %5447 = vmatprep.subr.mxu0 0.0
        %5448 = vmatpush1.msra.mxu0 %v565
        %5449 = vmatprep.subr.mxu0 0.0
        %5450 = vmatpush1.msra.mxu0 %v566
        %5451 = vmatprep.subr.mxu0 0.0
        %5452 = vmatpush1.msra.mxu0 %v567
        %5453 = vmatprep.subr.mxu0 0.0
        %5454 = vmatpush1.msra.mxu0 %v568
        %5455 = vmatprep.subr.mxu0 0.0
        %5456 = vmatpush1.msra.mxu0 %v569
        %5457 = vmatprep.subr.mxu0 0.0
        %5458 = vmatpush1.msra.mxu0 %v570
        %5459 = vmatprep.subr.mxu0 0.0
        %5460 = vmatpush1.msra.mxu0 %v571
        %5461 = vmatprep.subr.mxu0 0.0
        %5462 = vmatpush1.msra.mxu0 %v572
        %5463 = vmatprep.subr.mxu0 0.0
        %5464 = vmatpush1.msra.mxu0 %v573
        %5465 = vmatprep.subr.mxu0 0.0
        %5466 = vmatpush1.msra.mxu0 %v574
        %5467 = vmatprep.subr.mxu0 0.0
        %5468 = vmatpush1.msra.mxu0 %v575
        %5469 = vmatprep.subr.mxu0 0.0
        %5470 = vmatpush1.msra.mxu0 %v576
        %5471 = vmatprep.subr.mxu0 0.0
        %5472 = vmatpush1.msra.mxu0 %v577
        %5473 = vmatprep.subr.mxu0 0.0
        %5474 = vmatpush1.msra.mxu0 %v578
        %5475 = vmatprep.subr.mxu0 0.0
        %5476 = vmatpush1.msra.mxu0 %v579
        %5477 = vmatprep.subr.mxu0 0.0
        %5478 = vmatpush1.msra.mxu0 %v580
        %5479 = vmatprep.subr.mxu0 0.0
        %5480 = vmatpush1.msra.mxu0 %v581
        %5481 = vmatprep.subr.mxu0 0.0
        %5482 = vmatpush1.msra.mxu0 %v582
        %5483 = vmatprep.subr.mxu0 0.0
        %5484 = vmatpush1.msra.mxu0 %v583
        %5485 = vmatprep.subr.mxu0 0.0
        %5486 = vmatpush1.msra.mxu0 %v584
        %5487 = vmatprep.subr.mxu0 0.0
        %5488 = vmatpush1.msra.mxu0 %v585
        %5489 = vmatprep.subr.mxu0 0.0
        %5490 = vmatpush1.msra.mxu0 %v586
        %5491 = vmatprep.subr.mxu0 0.0
        %5492 = vmatpush1.msra.mxu0 %v587
        %5493 = vmatprep.subr.mxu0 0.0
        %5494 = vmatpush1.msra.mxu0 %v588
        %5495 = vmatprep.subr.mxu0 0.0
        %5496 = vmatpush1.msra.mxu0 %v589
        %5497 = vmatprep.subr.mxu0 0.0
        %5498 = vmatpush1.msra.mxu0 %v590
        %5499 = vmatprep.subr.mxu0 0.0
        %5500 = vmatpush1.msra.mxu0 %v591
        %5501 = vmatprep.mubr.f32.mxu0 %v3838
        %5502 = vmatmul.mubr.f32.gmra.mrb[0].mxu0 %v3836
        %v5503 = vpop.f32.mrb[0].mxu0
        %v5504 = vadd.f32 0.0, %v5503
        %v5505 = vpop.f32.mrb[0].mxu0
        %5506 = vmatprep.mubr.f32.mxu0 %v3842
        %5507 = vmatmul.mubr.f32.gmra.mrb[0].mxu0 %v3840
        %v5508 = vpop.f32.mrb[0].mxu0
        %v5509 = vadd.f32 0.0, %v5508
        %v5510 = vpop.f32.mrb[0].mxu0
        %5511 = vmatprep.mubr.f32.mxu0 %v3846
        %5512 = vmatmul.mubr.f32.gmra.mrb[0].mxu0 %v3844
        %v5513 = vpop.f32.mrb[0].mxu0
        %v5514 = vadd.f32 0.0, %v5513
        %v5515 = vpop.f32.mrb[0].mxu0
        %5516 = vmatprep.mubr.f32.mxu0 %v3850
        %5517 = vmatmul.mubr.f32.gmra.mrb[0].mxu0 %v3848
        %v5518 = vpop.f32.mrb[0].mxu0
        %v5519 = vadd.f32 0.0, %v5518
        %v5520 = vpop.f32.mrb[0].mxu0
        %5521 = vmatprep.mubr.f32.mxu0 %v3854
        %5522 = vmatmul.mubr.f32.gmra.mrb[0].mxu0 %v3852
        %v5523 = vpop.f32.mrb[0].mxu0
        %v5524 = vadd.f32 0.0, %v5523
        %v5525 = vpop.f32.mrb[0].mxu0
        %5526 = vmatprep.mubr.f32.mxu0 %v3858
        %5527 = vmatmul.mubr.f32.gmra.mrb[0].mxu0 %v3856
        %v5528 = vpop.f32.mrb[0].mxu0
        %v5529 = vadd.f32 0.0, %v5528
        %v5530 = vpop.f32.mrb[0].mxu0
        %5531 = vmatprep.mubr.f32.mxu0 %v3862
        %5532 = vmatmul.mubr.f32.gmra.mrb[0].mxu0 %v3860
        %v5533 = vpop.f32.mrb[0].mxu0
        %v5534 = vadd.f32 0.0, %v5533
        %v5535 = vpop.f32.mrb[0].mxu0
        %5536 = vmatprep.mubr.f32.mxu0 %v3866
        %5537 = vmatmul.mubr.f32.gmra.mrb[0].mxu0 %v3864
        %v5538 = vpop.f32.mrb[0].mxu0
        %v5539 = vadd.f32 0.0, %v5538
        %v5540 = vpop.f32.mrb[0].mxu0
        %5541 = vmatprep.mubr.f32.mxu0 %v3870
        %5542 = vmatmul.mubr.f32.gmra.mrb[0].mxu0 %v3868
        %v5543 = vpop.f32.mrb[0].mxu0
        %v5544 = vadd.f32 0.0, %v5543
        %v5545 = vpop.f32.mrb[0].mxu0
        %5546 = vmatprep.mubr.f32.mxu0 %v3874
        %5547 = vmatmul.mubr.f32.gmra.mrb[0].mxu0 %v3872
        %v5548 = vpop.f32.mrb[0].mxu0
        %v5549 = vadd.f32 0.0, %v5548
        %v5550 = vpop.f32.mrb[0].mxu0
        %5551 = vmatprep.mubr.f32.mxu0 %v3878
        %5552 = vmatmul.mubr.f32.gmra.mrb[0].mxu0 %v3876
        %v5553 = vpop.f32.mrb[0].mxu0
        %v5554 = vadd.f32 0.0, %v5553
        %v5555 = vpop.f32.mrb[0].mxu0
        %5556 = vmatprep.mubr.f32.mxu0 %v3882
        %5557 = vmatmul.mubr.f32.gmra.mrb[0].mxu0 %v3880
        %v5558 = vpop.f32.mrb[0].mxu0
        %v5559 = vadd.f32 0.0, %v5558
        %v5560 = vpop.f32.mrb[0].mxu0
        %5561 = vmatprep.mubr.f32.mxu0 %v3886
        %5562 = vmatmul.mubr.f32.gmra.mrb[0].mxu0 %v3884
        %v5563 = vpop.f32.mrb[0].mxu0
        %v5564 = vadd.f32 0.0, %v5563
        %v5565 = vpop.f32.mrb[0].mxu0
        %5566 = vmatprep.mubr.f32.mxu0 %v3890
        %5567 = vmatmul.mubr.f32.gmra.mrb[0].mxu0 %v3888
        %v5568 = vpop.f32.mrb[0].mxu0
        %v5569 = vadd.f32 0.0, %v5568
        %v5570 = vpop.f32.mrb[0].mxu0
        %5571 = vmatprep.mubr.f32.mxu0 %v3894
        %5572 = vmatmul.mubr.f32.gmra.mrb[0].mxu0 %v3892
        %v5573 = vpop.f32.mrb[0].mxu0
        %v5574 = vadd.f32 0.0, %v5573
        %v5575 = vpop.f32.mrb[0].mxu0
        %5576 = vmatprep.mubr.f32.mxu0 %v3898
        %5577 = vmatmul.mubr.f32.gmra.mrb[0].mxu0 %v3896
        %v5578 = vpop.f32.mrb[0].mxu0
        %v5579 = vadd.f32 0.0, %v5578
        %v5580 = vpop.f32.mrb[0].mxu0
        %5581 = vmatprep.mubr.f32.mxu0 %v3902
        %5582 = vmatmul.mubr.f32.gmra.mrb[0].mxu0 %v3900
        %v5583 = vpop.f32.mrb[0].mxu0
        %v5584 = vadd.f32 0.0, %v5583
        %v5585 = vpop.f32.mrb[0].mxu0
        %5586 = vmatprep.mubr.f32.mxu0 %v3906
        %5587 = vmatmul.mubr.f32.gmra.mrb[0].mxu0 %v3904
        %v5588 = vpop.f32.mrb[0].mxu0
        %v5589 = vadd.f32 0.0, %v5588
        %v5590 = vpop.f32.mrb[0].mxu0
        %5591 = vmatprep.mubr.f32.mxu0 %v3910
        %5592 = vmatmul.mubr.f32.gmra.mrb[0].mxu0 %v3908
        %v5593 = vpop.f32.mrb[0].mxu0
        %v5594 = vadd.f32 0.0, %v5593
        %v5595 = vpop.f32.mrb[0].mxu0
        %5596 = vmatprep.mubr.f32.mxu0 %v3914
        %5597 = vmatmul.mubr.f32.gmra.mrb[0].mxu0 %v3912
        %v5598 = vpop.f32.mrb[0].mxu0
        %v5599 = vadd.f32 0.0, %v5598
        %v5600 = vpop.f32.mrb[0].mxu0
        %5601 = vmatprep.mubr.f32.mxu0 %v3918
        %5602 = vmatmul.mubr.f32.gmra.mrb[0].mxu0 %v3916
        %v5603 = vpop.f32.mrb[0].mxu0
        %v5604 = vadd.f32 0.0, %v5603
        %v5605 = vpop.f32.mrb[0].mxu0
        %5606 = vmatprep.mubr.f32.mxu0 %v3922
        %5607 = vmatmul.mubr.f32.gmra.mrb[0].mxu0 %v3920
        %v5608 = vpop.f32.mrb[0].mxu0
        %v5609 = vadd.f32 0.0, %v5608
        %v5610 = vpop.f32.mrb[0].mxu0
        %5611 = vmatprep.mubr.f32.mxu0 %v3926
        %5612 = vmatmul.mubr.f32.gmra.mrb[0].mxu0 %v3924
        %v5613 = vpop.f32.mrb[0].mxu0
        %v5614 = vadd.f32 0.0, %v5613
        %v5615 = vpop.f32.mrb[0].mxu0
        %5616 = vmatprep.mubr.f32.mxu0 %v3930
        %5617 = vmatmul.mubr.f32.gmra.mrb[0].mxu0 %v3928
        %v5618 = vpop.f32.mrb[0].mxu0
        %v5619 = vadd.f32 0.0, %v5618
        %v5620 = vpop.f32.mrb[0].mxu0
        %5621 = vmatprep.mubr.f32.mxu0 %v3934
        %5622 = vmatmul.mubr.f32.gmra.mrb[0].mxu0 %v3932
        %v5623 = vpop.f32.mrb[0].mxu0
        %v5624 = vadd.f32 0.0, %v5623
        %v5625 = vpop.f32.mrb[0].mxu0
        %5626 = vmatprep.mubr.f32.mxu0 %v3938
        %5627 = vmatmul.mubr.f32.gmra.mrb[0].mxu0 %v3936
        %v5628 = vpop.f32.mrb[0].mxu0
        %v5629 = vadd.f32 0.0, %v5628
        %v5630 = vpop.f32.mrb[0].mxu0
        %5631 = vmatprep.mubr.f32.mxu0 %v3942
        %5632 = vmatmul.mubr.f32.gmra.mrb[0].mxu0 %v3940
        %v5633 = vpop.f32.mrb[0].mxu0
        %v5634 = vadd.f32 0.0, %v5633
        %v5635 = vpop.f32.mrb[0].mxu0
        %5636 = vmatprep.mubr.f32.mxu0 %v3946
        %5637 = vmatmul.mubr.f32.gmra.mrb[0].mxu0 %v3944
        %v5638 = vpop.f32.mrb[0].mxu0
        %v5639 = vadd.f32 0.0, %v5638
        %v5640 = vpop.f32.mrb[0].mxu0
        %5641 = vmatprep.mubr.f32.mxu0 %v3950
        %5642 = vmatmul.mubr.f32.gmra.mrb[0].mxu0 %v3948
        %v5643 = vpop.f32.mrb[0].mxu0
        %v5644 = vadd.f32 0.0, %v5643
        %v5645 = vpop.f32.mrb[0].mxu0
        %5646 = vmatprep.mubr.f32.mxu0 %v3954
        %5647 = vmatmul.mubr.f32.gmra.mrb[0].mxu0 %v3952
        %v5648 = vpop.f32.mrb[0].mxu0
        %v5649 = vadd.f32 0.0, %v5648
        %v5650 = vpop.f32.mrb[0].mxu0
        %5651 = vmatprep.mubr.f32.mxu0 %v3958
        %5652 = vmatmul.mubr.f32.gmra.mrb[0].mxu0 %v3956
        %v5653 = vpop.f32.mrb[0].mxu0
        %v5654 = vadd.f32 0.0, %v5653
        %v5655 = vpop.f32.mrb[0].mxu0
        %5656 = vmatprep.mubr.f32.mxu0 %v3962
        %5657 = vmatmul.mubr.f32.gmra.mrb[0].mxu0 %v3960
        %v5658 = vpop.f32.mrb[0].mxu0
        %v5659 = vadd.f32 0.0, %v5658
        %v5660 = vpop.f32.mrb[0].mxu0
        %5661 = vdwg.mxu0
        %5662 = vmatprep.subr.mxu0 0.0
        %5663 = vmatpush1.msra.mxu0 %v592
        %5664 = vmatprep.subr.mxu0 0.0
        %5665 = vmatpush1.msra.mxu0 %v593
        %5666 = vmatprep.subr.mxu0 0.0
        %5667 = vmatpush1.msra.mxu0 %v594
        %5668 = vmatprep.subr.mxu0 0.0
        %5669 = vmatpush1.msra.mxu0 %v595
        %5670 = vmatprep.subr.mxu0 0.0
        %5671 = vmatpush1.msra.mxu0 %v596
        %5672 = vmatprep.subr.mxu0 0.0
        %5673 = vmatpush1.msra.mxu0 %v597
        %5674 = vmatprep.subr.mxu0 0.0
        %5675 = vmatpush1.msra.mxu0 %v598
        %5676 = vmatprep.subr.mxu0 0.0
        %5677 = vmatpush1.msra.mxu0 %v599
        %5678 = vmatprep.subr.mxu0 0.0
        %5679 = vmatpush1.msra.mxu0 %v600
        %5680 = vmatprep.subr.mxu0 0.0
        %5681 = vmatpush1.msra.mxu0 %v601
        %5682 = vmatprep.subr.mxu0 0.0
        %5683 = vmatpush1.msra.mxu0 %v602
        %5684 = vmatprep.subr.mxu0 0.0
        %5685 = vmatpush1.msra.mxu0 %v603
        %5686 = vmatprep.subr.mxu0 0.0
        %5687 = vmatpush1.msra.mxu0 %v604
        %5688 = vmatprep.subr.mxu0 0.0
        %5689 = vmatpush1.msra.mxu0 %v605
        %5690 = vmatprep.subr.mxu0 0.0
        %5691 = vmatpush1.msra.mxu0 %v606
        %5692 = vmatprep.subr.mxu0 0.0
        %5693 = vmatpush1.msra.mxu0 %v607
        %5694 = vmatprep.subr.mxu0 0.0
        %5695 = vmatpush1.msra.mxu0 %v608
        %5696 = vmatprep.subr.mxu0 0.0
        %5697 = vmatpush1.msra.mxu0 %v609
        %5698 = vmatprep.subr.mxu0 0.0
        %5699 = vmatpush1.msra.mxu0 %v610
        %5700 = vmatprep.subr.mxu0 0.0
        %5701 = vmatpush1.msra.mxu0 %v611
        %5702 = vmatprep.subr.mxu0 0.0
        %5703 = vmatpush1.msra.mxu0 %v612
        %5704 = vmatprep.subr.mxu0 0.0
        %5705 = vmatpush1.msra.mxu0 %v613
        %5706 = vmatprep.subr.mxu0 0.0
        %5707 = vmatpush1.msra.mxu0 %v614
        %5708 = vmatprep.subr.mxu0 0.0
        %5709 = vmatpush1.msra.mxu0 %v615
        %5710 = vmatprep.subr.mxu0 0.0
        %5711 = vmatpush1.msra.mxu0 %v616
        %5712 = vmatprep.subr.mxu0 0.0
        %5713 = vmatpush1.msra.mxu0 %v617
        %5714 = vmatprep.subr.mxu0 0.0
        %5715 = vmatpush1.msra.mxu0 %v618
        %5716 = vmatprep.subr.mxu0 0.0
        %5717 = vmatpush1.msra.mxu0 %v619
        %5718 = vmatprep.subr.mxu0 0.0
        %5719 = vmatpush1.msra.mxu0 %v620
        %5720 = vmatprep.subr.mxu0 0.0
        %5721 = vmatpush1.msra.mxu0 %v621
        %5722 = vmatprep.subr.mxu0 0.0
        %5723 = vmatpush1.msra.mxu0 %v622
        %5724 = vmatprep.subr.mxu0 0.0
        %5725 = vmatpush1.msra.mxu0 %v623
        %5726 = vmatprep.mubr.f32.mxu0 %v3966
        %5727 = vmatmul.mubr.f32.gmra.mrb[0].mxu0 %v3964
        %v5728 = vpop.f32.mrb[0].mxu0
        %v5729 = vadd.f32 0.0, %v5728
        %v5730 = vpop.f32.mrb[0].mxu0
        %5731 = vmatprep.mubr.f32.mxu0 %v3970
        %5732 = vmatmul.mubr.f32.gmra.mrb[0].mxu0 %v3968
        %v5733 = vpop.f32.mrb[0].mxu0
        %v5734 = vadd.f32 0.0, %v5733
        %v5735 = vpop.f32.mrb[0].mxu0
        %5736 = vmatprep.mubr.f32.mxu0 %v3974
        %5737 = vmatmul.mubr.f32.gmra.mrb[0].mxu0 %v3972
        %v5738 = vpop.f32.mrb[0].mxu0
        %v5739 = vadd.f32 0.0, %v5738
        %v5740 = vpop.f32.mrb[0].mxu0
        %5741 = vmatprep.mubr.f32.mxu0 %v3978
        %5742 = vmatmul.mubr.f32.gmra.mrb[0].mxu0 %v3976
        %v5743 = vpop.f32.mrb[0].mxu0
        %v5744 = vadd.f32 0.0, %v5743
        %v5745 = vpop.f32.mrb[0].mxu0
        %5746 = vmatprep.mubr.f32.mxu0 %v3982
        %5747 = vmatmul.mubr.f32.gmra.mrb[0].mxu0 %v3980
        %v5748 = vpop.f32.mrb[0].mxu0
        %v5749 = vadd.f32 0.0, %v5748
        %v5750 = vpop.f32.mrb[0].mxu0
        %5751 = vmatprep.mubr.f32.mxu0 %v3986
        %5752 = vmatmul.mubr.f32.gmra.mrb[0].mxu0 %v3984
        %v5753 = vpop.f32.mrb[0].mxu0
        %v5754 = vadd.f32 0.0, %v5753
        %v5755 = vpop.f32.mrb[0].mxu0
        %5756 = vmatprep.mubr.f32.mxu0 %v3990
        %5757 = vmatmul.mubr.f32.gmra.mrb[0].mxu0 %v3988
        %v5758 = vpop.f32.mrb[0].mxu0
        %v5759 = vadd.f32 0.0, %v5758
        %v5760 = vpop.f32.mrb[0].mxu0
        %5761 = vmatprep.mubr.f32.mxu0 %v3994
        %5762 = vmatmul.mubr.f32.gmra.mrb[0].mxu0 %v3992
        %v5763 = vpop.f32.mrb[0].mxu0
        %v5764 = vadd.f32 0.0, %v5763
        %v5765 = vpop.f32.mrb[0].mxu0
        %5766 = vmatprep.mubr.f32.mxu0 %v3998
        %5767 = vmatmul.mubr.f32.gmra.mrb[0].mxu0 %v3996
        %v5768 = vpop.f32.mrb[0].mxu0
        %v5769 = vadd.f32 0.0, %v5768
        %v5770 = vpop.f32.mrb[0].mxu0
        %5771 = vmatprep.mubr.f32.mxu0 %v4002
        %5772 = vmatmul.mubr.f32.gmra.mrb[0].mxu0 %v4000
        %v5773 = vpop.f32.mrb[0].mxu0
        %v5774 = vadd.f32 0.0, %v5773
        %v5775 = vpop.f32.mrb[0].mxu0
        %5776 = vmatprep.mubr.f32.mxu0 %v4006
        %5777 = vmatmul.mubr.f32.gmra.mrb[0].mxu0 %v4004
        %v5778 = vpop.f32.mrb[0].mxu0
        %v5779 = vadd.f32 0.0, %v5778
        %v5780 = vpop.f32.mrb[0].mxu0
        %5781 = vmatprep.mubr.f32.mxu0 %v4010
        %5782 = vmatmul.mubr.f32.gmra.mrb[0].mxu0 %v4008
        %v5783 = vpop.f32.mrb[0].mxu0
        %v5784 = vadd.f32 0.0, %v5783
        %v5785 = vpop.f32.mrb[0].mxu0
        %5786 = vmatprep.mubr.f32.mxu0 %v4014
        %5787 = vmatmul.mubr.f32.gmra.mrb[0].mxu0 %v4012
        %v5788 = vpop.f32.mrb[0].mxu0
        %v5789 = vadd.f32 0.0, %v5788
        %v5790 = vpop.f32.mrb[0].mxu0
        %5791 = vmatprep.mubr.f32.mxu0 %v4018
        %5792 = vmatmul.mubr.f32.gmra.mrb[0].mxu0 %v4016
        %v5793 = vpop.f32.mrb[0].mxu0
        %v5794 = vadd.f32 0.0, %v5793
        %v5795 = vpop.f32.mrb[0].mxu0
        %5796 = vmatprep.mubr.f32.mxu0 %v4022
        %5797 = vmatmul.mubr.f32.gmra.mrb[0].mxu0 %v4020
        %v5798 = vpop.f32.mrb[0].mxu0
        %v5799 = vadd.f32 0.0, %v5798
        %v5800 = vpop.f32.mrb[0].mxu0
        %5801 = vmatprep.mubr.f32.mxu0 %v4026
        %5802 = vmatmul.mubr.f32.gmra.mrb[0].mxu0 %v4024
        %v5803 = vpop.f32.mrb[0].mxu0
        %v5804 = vadd.f32 0.0, %v5803
        %v5805 = vpop.f32.mrb[0].mxu0
        %5806 = vmatprep.mubr.f32.mxu0 %v4030
        %5807 = vmatmul.mubr.f32.gmra.mrb[0].mxu0 %v4028
        %v5808 = vpop.f32.mrb[0].mxu0
        %v5809 = vadd.f32 0.0, %v5808
        %v5810 = vpop.f32.mrb[0].mxu0
        %5811 = vmatprep.mubr.f32.mxu0 %v4034
        %5812 = vmatmul.mubr.f32.gmra.mrb[0].mxu0 %v4032
        %v5813 = vpop.f32.mrb[0].mxu0
        %v5814 = vadd.f32 0.0, %v5813
        %v5815 = vpop.f32.mrb[0].mxu0
        %5816 = vmatprep.mubr.f32.mxu0 %v4038
        %5817 = vmatmul.mubr.f32.gmra.mrb[0].mxu0 %v4036
        %v5818 = vpop.f32.mrb[0].mxu0
        %v5819 = vadd.f32 0.0, %v5818
        %v5820 = vpop.f32.mrb[0].mxu0
        %5821 = vmatprep.mubr.f32.mxu0 %v4042
        %5822 = vmatmul.mubr.f32.gmra.mrb[0].mxu0 %v4040
        %v5823 = vpop.f32.mrb[0].mxu0
        %v5824 = vadd.f32 0.0, %v5823
        %v5825 = vpop.f32.mrb[0].mxu0
        %5826 = vmatprep.mubr.f32.mxu0 %v4046
        %5827 = vmatmul.mubr.f32.gmra.mrb[0].mxu0 %v4044
        %v5828 = vpop.f32.mrb[0].mxu0
        %v5829 = vadd.f32 0.0, %v5828
        %v5830 = vpop.f32.mrb[0].mxu0
        %5831 = vmatprep.mubr.f32.mxu0 %v4050
        %5832 = vmatmul.mubr.f32.gmra.mrb[0].mxu0 %v4048
        %v5833 = vpop.f32.mrb[0].mxu0
        %v5834 = vadd.f32 0.0, %v5833
        %v5835 = vpop.f32.mrb[0].mxu0
        %5836 = vmatprep.mubr.f32.mxu0 %v4054
        %5837 = vmatmul.mubr.f32.gmra.mrb[0].mxu0 %v4052
        %v5838 = vpop.f32.mrb[0].mxu0
        %v5839 = vadd.f32 0.0, %v5838
        %v5840 = vpop.f32.mrb[0].mxu0
        %5841 = vmatprep.mubr.f32.mxu0 %v4058
        %5842 = vmatmul.mubr.f32.gmra.mrb[0].mxu0 %v4056
        %v5843 = vpop.f32.mrb[0].mxu0
        %v5844 = vadd.f32 0.0, %v5843
        %v5845 = vpop.f32.mrb[0].mxu0
        %5846 = vmatprep.mubr.f32.mxu0 %v4062
        %5847 = vmatmul.mubr.f32.gmra.mrb[0].mxu0 %v4060
        %v5848 = vpop.f32.mrb[0].mxu0
        %v5849 = vadd.f32 0.0, %v5848
        %v5850 = vpop.f32.mrb[0].mxu0
        %5851 = vmatprep.mubr.f32.mxu0 %v4066
        %5852 = vmatmul.mubr.f32.gmra.mrb[0].mxu0 %v4064
        %v5853 = vpop.f32.mrb[0].mxu0
        %v5854 = vadd.f32 0.0, %v5853
        %v5855 = vpop.f32.mrb[0].mxu0
        %5856 = vmatprep.mubr.f32.mxu0 %v4070
        %5857 = vmatmul.mubr.f32.gmra.mrb[0].mxu0 %v4068
        %v5858 = vpop.f32.mrb[0].mxu0
        %v5859 = vadd.f32 0.0, %v5858
        %v5860 = vpop.f32.mrb[0].mxu0
        %5861 = vmatprep.mubr.f32.mxu0 %v4074
        %5862 = vmatmul.mubr.f32.gmra.mrb[0].mxu0 %v4072
        %v5863 = vpop.f32.mrb[0].mxu0
        %v5864 = vadd.f32 0.0, %v5863
        %v5865 = vpop.f32.mrb[0].mxu0
        %5866 = vmatprep.mubr.f32.mxu0 %v4078
        %5867 = vmatmul.mubr.f32.gmra.mrb[0].mxu0 %v4076
        %v5868 = vpop.f32.mrb[0].mxu0
        %v5869 = vadd.f32 0.0, %v5868
        %v5870 = vpop.f32.mrb[0].mxu0
        %5871 = vmatprep.mubr.f32.mxu0 %v4082
        %5872 = vmatmul.mubr.f32.gmra.mrb[0].mxu0 %v4080
        %v5873 = vpop.f32.mrb[0].mxu0
        %v5874 = vadd.f32 0.0, %v5873
        %v5875 = vpop.f32.mrb[0].mxu0
        %5876 = vmatprep.mubr.f32.mxu0 %v4086
        %5877 = vmatmul.mubr.f32.gmra.mrb[0].mxu0 %v4084
        %v5878 = vpop.f32.mrb[0].mxu0
        %v5879 = vadd.f32 0.0, %v5878
        %v5880 = vpop.f32.mrb[0].mxu0
        %5881 = vmatprep.mubr.f32.mxu0 %v4090
        %5882 = vmatmul.mubr.f32.gmra.mrb[0].mxu0 %v4088
        %v5883 = vpop.f32.mrb[0].mxu0
        %v5884 = vadd.f32 0.0, %v5883
        %v5885 = vpop.f32.mrb[0].mxu0
        %5886 = vdwg.mxu0
        %v5887 = vmul.f32 %v5054, %v4859
        %v5888 = vmul.f32 %v5059, %v4860
        %v5889 = vmul.f32 %v5064, %v4861
        %v5890 = vmul.f32 %v5069, %v4862
        %v5891 = vmul.f32 %v5074, %v4863
        %v5892 = vmul.f32 %v5079, %v4864
        %v5893 = vmul.f32 %v5084, %v4865
        %v5894 = vmul.f32 %v5089, %v4866
        %v5895 = vmul.f32 %v5094, %v4867
        %v5896 = vmul.f32 %v5099, %v4868
        %v5897 = vmul.f32 %v5104, %v4869
        %v5898 = vmul.f32 %v5109, %v4870
        %v5899 = vmul.f32 %v5114, %v4871
        %v5900 = vmul.f32 %v5119, %v4872
        %v5901 = vmul.f32 %v5124, %v4873
        %v5902 = vmul.f32 %v5129, %v4874
        %v5903 = vmul.f32 %v5134, %v4875
        %v5904 = vmul.f32 %v5139, %v4876
        %v5905 = vmul.f32 %v5144, %v4877
        %v5906 = vmul.f32 %v5149, %v4878
        %v5907 = vmul.f32 %v5154, %v4879
        %v5908 = vmul.f32 %v5159, %v4880
        %v5909 = vmul.f32 %v5164, %v4881
        %v5910 = vmul.f32 %v5169, %v4882
        %v5911 = vmul.f32 %v5174, %v4883
        %v5912 = vmul.f32 %v5179, %v4884
        %v5913 = vmul.f32 %v5184, %v4885
        %v5914 = vmul.f32 %v5189, %v4886
        %v5915 = vmul.f32 %v5194, %v4887
        %v5916 = vmul.f32 %v5199, %v4888
        %v5917 = vmul.f32 %v5204, %v4889
        %v5918 = vmul.f32 %v5209, %v4890
        %v5919 = vmul.f32 %v5279, %v4891
        %v5920 = vmul.f32 %v5284, %v4892
        %v5921 = vmul.f32 %v5289, %v4893
        %v5922 = vmul.f32 %v5294, %v4894
        %v5923 = vmul.f32 %v5299, %v4895
        %v5924 = vmul.f32 %v5304, %v4896
        %v5925 = vmul.f32 %v5309, %v4897
        %v5926 = vmul.f32 %v5314, %v4898
        %v5927 = vmul.f32 %v5319, %v4899
        %v5928 = vmul.f32 %v5324, %v4900
        %v5929 = vmul.f32 %v5329, %v4901
        %v5930 = vmul.f32 %v5334, %v4902
        %v5931 = vmul.f32 %v5339, %v4903
        %v5932 = vmul.f32 %v5344, %v4904
        %v5933 = vmul.f32 %v5349, %v4905
        %v5934 = vmul.f32 %v5354, %v4906
        %v5935 = vmul.f32 %v5359, %v4907
        %v5936 = vmul.f32 %v5364, %v4908
        %v5937 = vmul.f32 %v5369, %v4909
        %v5938 = vmul.f32 %v5374, %v4910
        %v5939 = vmul.f32 %v5379, %v4911
        %v5940 = vmul.f32 %v5384, %v4912
        %v5941 = vmul.f32 %v5389, %v4913
        %v5942 = vmul.f32 %v5394, %v4914
        %v5943 = vmul.f32 %v5399, %v4915
        %v5944 = vmul.f32 %v5404, %v4916
        %v5945 = vmul.f32 %v5409, %v4917
        %v5946 = vmul.f32 %v5414, %v4918
        %v5947 = vmul.f32 %v5419, %v4919
        %v5948 = vmul.f32 %v5424, %v4920
        %v5949 = vmul.f32 %v5429, %v4921
        %v5950 = vmul.f32 %v5434, %v4922
        %v5951 = vmul.f32 %v5504, %v4923
        %v5952 = vmul.f32 %v5509, %v4924
        %v5953 = vmul.f32 %v5514, %v4925
        %v5954 = vmul.f32 %v5519, %v4926
        %v5955 = vmul.f32 %v5524, %v4927
        %v5956 = vmul.f32 %v5529, %v4928
        %v5957 = vmul.f32 %v5534, %v4929
        %v5958 = vmul.f32 %v5539, %v4930
        %v5959 = vmul.f32 %v5544, %v4931
        %v5960 = vmul.f32 %v5549, %v4932
        %v5961 = vmul.f32 %v5554, %v4933
        %v5962 = vmul.f32 %v5559, %v4934
        %v5963 = vmul.f32 %v5564, %v4935
        %v5964 = vmul.f32 %v5569, %v4936
        %v5965 = vmul.f32 %v5574, %v4937
        %v5966 = vmul.f32 %v5579, %v4938
        %v5967 = vmul.f32 %v5584, %v4939
        %v5968 = vmul.f32 %v5589, %v4940
        %v5969 = vmul.f32 %v5594, %v4941
        %v5970 = vmul.f32 %v5599, %v4942
        %v5971 = vmul.f32 %v5604, %v4943
        %v5972 = vmul.f32 %v5609, %v4944
        %v5973 = vmul.f32 %v5614, %v4945
        %v5974 = vmul.f32 %v5619, %v4946
        %v5975 = vmul.f32 %v5624, %v4947
        %v5976 = vmul.f32 %v5629, %v4948
        %v5977 = vmul.f32 %v5634, %v4949
        %v5978 = vmul.f32 %v5639, %v4950
        %v5979 = vmul.f32 %v5644, %v4951
        %v5980 = vmul.f32 %v5649, %v4952
        %v5981 = vmul.f32 %v5654, %v4953
        %v5982 = vmul.f32 %v5659, %v4954
        %v5983 = vmul.f32 %v5729, %v4955
        %v5984 = vmul.f32 %v5734, %v4956
        %v5985 = vmul.f32 %v5739, %v4957
        %v5986 = vmul.f32 %v5744, %v4958
        %v5987 = vmul.f32 %v5749, %v4959
        %v5988 = vmul.f32 %v5754, %v4960
        %v5989 = vmul.f32 %v5759, %v4961
        %v5990 = vmul.f32 %v5764, %v4962
        %v5991 = vmul.f32 %v5769, %v4963
        %v5992 = vmul.f32 %v5774, %v4964
        %v5993 = vmul.f32 %v5779, %v4965
        %v5994 = vmul.f32 %v5784, %v4966
        %v5995 = vmul.f32 %v5789, %v4967
        %v5996 = vmul.f32 %v5794, %v4968
        %v5997 = vmul.f32 %v5799, %v4969
        %v5998 = vmul.f32 %v5804, %v4970
        %v5999 = vmul.f32 %v5809, %v4971
        %v6000 = vmul.f32 %v5814, %v4972
        %v6001 = vmul.f32 %v5819, %v4973
        %v6002 = vmul.f32 %v5824, %v4974
        %v6003 = vmul.f32 %v5829, %v4975
        %v6004 = vmul.f32 %v5834, %v4976
        %v6005 = vmul.f32 %v5839, %v4977
        %v6006 = vmul.f32 %v5844, %v4978
        %v6007 = vmul.f32 %v5849, %v4979
        %v6008 = vmul.f32 %v5854, %v4980
        %v6009 = vmul.f32 %v5859, %v4981
        %v6010 = vmul.f32 %v5864, %v4982
        %v6011 = vmul.f32 %v5869, %v4983
        %v6012 = vmul.f32 %v5874, %v4984
        %v6013 = vmul.f32 %v5879, %v4985
        %v6014 = vmul.f32 %v5884, %v4986
        %6015 = vst.msk [vmem:[%s218] sm:$0xff] %vm624, %v5887
        %6016 = vst.msk [vmem:[%s218 + $0x8] sm:$0xff] %vm624, %v5888
        %6017 = vst.msk [vmem:[%s218 + $0x10] sm:$0xff] %vm624, %v5889
        %6018 = vst.msk [vmem:[%s218 + $0x18] sm:$0xff] %vm624, %v5890
        %6019 = vst.msk [vmem:[%s218 + $0x20] sm:$0xff] %vm624, %v5891
        %6020 = vst.msk [vmem:[%s218 + $0x28] sm:$0xff] %vm624, %v5892
        %6021 = vst.msk [vmem:[%s218 + $0x30] sm:$0xff] %vm624, %v5893
        %6022 = vst.msk [vmem:[%s218 + $0x38] sm:$0xff] %vm624, %v5894
        %6023 = vst.msk [vmem:[%s218 + $0x40] sm:$0xff] %vm624, %v5895
        %6024 = vst.msk [vmem:[%s218 + $0x48] sm:$0xff] %vm624, %v5896
        %6025 = vst.msk [vmem:[%s218 + $0x50] sm:$0xff] %vm624, %v5897
        %6026 = vst.msk [vmem:[%s218 + $0x58] sm:$0xff] %vm624, %v5898
        %6027 = vst.msk [vmem:[%s218 + $0x60] sm:$0xff] %vm624, %v5899
        %6028 = vst.msk [vmem:[%s218 + $0x68] sm:$0xff] %vm624, %v5900
        %6029 = vst.msk [vmem:[%s218 + $0x70] sm:$0xff] %vm624, %v5901
        %6030 = vst.msk [vmem:[%s218 + $0x78] sm:$0xff] %vm624, %v5902
        %6031 = vst.msk [vmem:[%s218 + $0x80] sm:$0xff] %vm624, %v5903
        %6032 = vst.msk [vmem:[%s218 + $0x88] sm:$0xff] %vm624, %v5904
        %6033 = vst.msk [vmem:[%s218 + $0x90] sm:$0xff] %vm624, %v5905
        %6034 = vst.msk [vmem:[%s218 + $0x98] sm:$0xff] %vm624, %v5906
        %6035 = vst.msk [vmem:[%s218 + $0xa0] sm:$0xff] %vm624, %v5907
        %6036 = vst.msk [vmem:[%s218 + $0xa8] sm:$0xff] %vm624, %v5908
        %6037 = vst.msk [vmem:[%s218 + $0xb0] sm:$0xff] %vm624, %v5909
        %6038 = vst.msk [vmem:[%s218 + $0xb8] sm:$0xff] %vm624, %v5910
        %6039 = vst.msk [vmem:[%s218 + $0xc0] sm:$0xff] %vm624, %v5911
        %6040 = vst.msk [vmem:[%s218 + $0xc8] sm:$0xff] %vm624, %v5912
        %6041 = vst.msk [vmem:[%s218 + $0xd0] sm:$0xff] %vm624, %v5913
        %6042 = vst.msk [vmem:[%s218 + $0xd8] sm:$0xff] %vm624, %v5914
        %6043 = vst.msk [vmem:[%s218 + $0xe0] sm:$0xff] %vm624, %v5915
        %6044 = vst.msk [vmem:[%s218 + $0xe8] sm:$0xff] %vm624, %v5916
        %6045 = vst.msk [vmem:[%s218 + $0xf0] sm:$0xff] %vm624, %v5917
        %6046 = vst.msk [vmem:[%s218 + $0xf8] sm:$0xff] %vm624, %v5918
        %6079 = vrot.lane.b32.xlu0 %v5919, 32
        %v6080 = vpop.permute.xlu0 %6079
        %6081 = vrot.lane.b32.xlu0 %v5920, 32
        %v6082 = vpop.permute.xlu0 %6081
        %6083 = vrot.lane.b32.xlu0 %v5921, 32
        %v6084 = vpop.permute.xlu0 %6083
        %6085 = vrot.lane.b32.xlu0 %v5922, 32
        %v6086 = vpop.permute.xlu0 %6085
        %6087 = vrot.lane.b32.xlu0 %v5923, 32
        %v6088 = vpop.permute.xlu0 %6087
        %6089 = vrot.lane.b32.xlu0 %v5924, 32
        %v6090 = vpop.permute.xlu0 %6089
        %6091 = vrot.lane.b32.xlu0 %v5925, 32
        %v6092 = vpop.permute.xlu0 %6091
        %6093 = vrot.lane.b32.xlu0 %v5926, 32
        %v6094 = vpop.permute.xlu0 %6093
        %6095 = vrot.lane.b32.xlu0 %v5927, 32
        %v6096 = vpop.permute.xlu0 %6095
        %6097 = vrot.lane.b32.xlu0 %v5928, 32
        %v6098 = vpop.permute.xlu0 %6097
        %6099 = vrot.lane.b32.xlu0 %v5929, 32
        %v6100 = vpop.permute.xlu0 %6099
        %6101 = vrot.lane.b32.xlu0 %v5930, 32
        %v6102 = vpop.permute.xlu0 %6101
        %6103 = vrot.lane.b32.xlu0 %v5931, 32
        %v6104 = vpop.permute.xlu0 %6103
        %6105 = vrot.lane.b32.xlu0 %v5932, 32
        %v6106 = vpop.permute.xlu0 %6105
        %6107 = vrot.lane.b32.xlu0 %v5933, 32
        %v6108 = vpop.permute.xlu0 %6107
        %6109 = vrot.lane.b32.xlu0 %v5934, 32
        %v6110 = vpop.permute.xlu0 %6109
        %6111 = vrot.lane.b32.xlu0 %v5935, 32
        %v6112 = vpop.permute.xlu0 %6111
        %6113 = vrot.lane.b32.xlu0 %v5936, 32
        %v6114 = vpop.permute.xlu0 %6113
        %6115 = vrot.lane.b32.xlu0 %v5937, 32
        %v6116 = vpop.permute.xlu0 %6115
        %6117 = vrot.lane.b32.xlu0 %v5938, 32
        %v6118 = vpop.permute.xlu0 %6117
        %6119 = vrot.lane.b32.xlu0 %v5939, 32
        %v6120 = vpop.permute.xlu0 %6119
        %6121 = vrot.lane.b32.xlu0 %v5940, 32
        %v6122 = vpop.permute.xlu0 %6121
        %6123 = vrot.lane.b32.xlu0 %v5941, 32
        %v6124 = vpop.permute.xlu0 %6123
        %6125 = vrot.lane.b32.xlu0 %v5942, 32
        %v6126 = vpop.permute.xlu0 %6125
        %6127 = vrot.lane.b32.xlu0 %v5943, 32
        %v6128 = vpop.permute.xlu0 %6127
        %6129 = vrot.lane.b32.xlu0 %v5944, 32
        %v6130 = vpop.permute.xlu0 %6129
        %6131 = vrot.lane.b32.xlu0 %v5945, 32
        %v6132 = vpop.permute.xlu0 %6131
        %6133 = vrot.lane.b32.xlu0 %v5946, 32
        %v6134 = vpop.permute.xlu0 %6133
        %6135 = vrot.lane.b32.xlu0 %v5947, 32
        %v6136 = vpop.permute.xlu0 %6135
        %6137 = vrot.lane.b32.xlu0 %v5948, 32
        %v6138 = vpop.permute.xlu0 %6137
        %6139 = vrot.lane.b32.xlu0 %v5949, 32
        %v6140 = vpop.permute.xlu0 %6139
        %6141 = vrot.lane.b32.xlu0 %v5950, 32
        %v6142 = vpop.permute.xlu0 %6141
        %vm6175 = vcmask 523520
        %6176 = vst.msk [vmem:[%s218] sm:$0xff] %vm6175, %v6080
        %6177 = vst.msk [vmem:[%s218 + $0x8] sm:$0xff] %vm6175, %v6082
        %6178 = vst.msk [vmem:[%s218 + $0x10] sm:$0xff] %vm6175, %v6084
        %6179 = vst.msk [vmem:[%s218 + $0x18] sm:$0xff] %vm6175, %v6086
        %6180 = vst.msk [vmem:[%s218 + $0x20] sm:$0xff] %vm6175, %v6088
        %6181 = vst.msk [vmem:[%s218 + $0x28] sm:$0xff] %vm6175, %v6090
        %6182 = vst.msk [vmem:[%s218 + $0x30] sm:$0xff] %vm6175, %v6092
        %6183 = vst.msk [vmem:[%s218 + $0x38] sm:$0xff] %vm6175, %v6094
        %6184 = vst.msk [vmem:[%s218 + $0x40] sm:$0xff] %vm6175, %v6096
        %6185 = vst.msk [vmem:[%s218 + $0x48] sm:$0xff] %vm6175, %v6098
        %6186 = vst.msk [vmem:[%s218 + $0x50] sm:$0xff] %vm6175, %v6100
        %6187 = vst.msk [vmem:[%s218 + $0x58] sm:$0xff] %vm6175, %v6102
        %6188 = vst.msk [vmem:[%s218 + $0x60] sm:$0xff] %vm6175, %v6104
        %6189 = vst.msk [vmem:[%s218 + $0x68] sm:$0xff] %vm6175, %v6106
        %6190 = vst.msk [vmem:[%s218 + $0x70] sm:$0xff] %vm6175, %v6108
        %6191 = vst.msk [vmem:[%s218 + $0x78] sm:$0xff] %vm6175, %v6110
        %6192 = vst.msk [vmem:[%s218 + $0x80] sm:$0xff] %vm6175, %v6112
        %6193 = vst.msk [vmem:[%s218 + $0x88] sm:$0xff] %vm6175, %v6114
        %6194 = vst.msk [vmem:[%s218 + $0x90] sm:$0xff] %vm6175, %v6116
        %6195 = vst.msk [vmem:[%s218 + $0x98] sm:$0xff] %vm6175, %v6118
        %6196 = vst.msk [vmem:[%s218 + $0xa0] sm:$0xff] %vm6175, %v6120
        %6197 = vst.msk [vmem:[%s218 + $0xa8] sm:$0xff] %vm6175, %v6122
        %6198 = vst.msk [vmem:[%s218 + $0xb0] sm:$0xff] %vm6175, %v6124
        %6199 = vst.msk [vmem:[%s218 + $0xb8] sm:$0xff] %vm6175, %v6126
        %6200 = vst.msk [vmem:[%s218 + $0xc0] sm:$0xff] %vm6175, %v6128
        %6201 = vst.msk [vmem:[%s218 + $0xc8] sm:$0xff] %vm6175, %v6130
        %6202 = vst.msk [vmem:[%s218 + $0xd0] sm:$0xff] %vm6175, %v6132
        %6203 = vst.msk [vmem:[%s218 + $0xd8] sm:$0xff] %vm6175, %v6134
        %6204 = vst.msk [vmem:[%s218 + $0xe0] sm:$0xff] %vm6175, %v6136
        %6205 = vst.msk [vmem:[%s218 + $0xe8] sm:$0xff] %vm6175, %v6138
        %6206 = vst.msk [vmem:[%s218 + $0xf0] sm:$0xff] %vm6175, %v6140
        %6207 = vst.msk [vmem:[%s218 + $0xf8] sm:$0xff] %vm6175, %v6142
        %6240 = vrot.lane.b32.xlu0 %v5951, 64
        %v6241 = vpop.permute.xlu0 %6240
        %6242 = vrot.lane.b32.xlu0 %v5952, 64
        %v6243 = vpop.permute.xlu0 %6242
        %6244 = vrot.lane.b32.xlu0 %v5953, 64
        %v6245 = vpop.permute.xlu0 %6244
        %6246 = vrot.lane.b32.xlu0 %v5954, 64
        %v6247 = vpop.permute.xlu0 %6246
        %6248 = vrot.lane.b32.xlu0 %v5955, 64
        %v6249 = vpop.permute.xlu0 %6248
        %6250 = vrot.lane.b32.xlu0 %v5956, 64
        %v6251 = vpop.permute.xlu0 %6250
        %6252 = vrot.lane.b32.xlu0 %v5957, 64
        %v6253 = vpop.permute.xlu0 %6252
        %6254 = vrot.lane.b32.xlu0 %v5958, 64
        %v6255 = vpop.permute.xlu0 %6254
        %6256 = vrot.lane.b32.xlu0 %v5959, 64
        %v6257 = vpop.permute.xlu0 %6256
        %6258 = vrot.lane.b32.xlu0 %v5960, 64
        %v6259 = vpop.permute.xlu0 %6258
        %6260 = vrot.lane.b32.xlu0 %v5961, 64
        %v6261 = vpop.permute.xlu0 %6260
        %6262 = vrot.lane.b32.xlu0 %v5962, 64
        %v6263 = vpop.permute.xlu0 %6262
        %6264 = vrot.lane.b32.xlu0 %v5963, 64
        %v6265 = vpop.permute.xlu0 %6264
        %6266 = vrot.lane.b32.xlu0 %v5964, 64
        %v6267 = vpop.permute.xlu0 %6266
        %6268 = vrot.lane.b32.xlu0 %v5965, 64
        %v6269 = vpop.permute.xlu0 %6268
        %6270 = vrot.lane.b32.xlu0 %v5966, 64
        %v6271 = vpop.permute.xlu0 %6270
        %6272 = vrot.lane.b32.xlu0 %v5967, 64
        %v6273 = vpop.permute.xlu0 %6272
        %6274 = vrot.lane.b32.xlu0 %v5968, 64
        %v6275 = vpop.permute.xlu0 %6274
        %6276 = vrot.lane.b32.xlu0 %v5969, 64
        %v6277 = vpop.permute.xlu0 %6276
        %6278 = vrot.lane.b32.xlu0 %v5970, 64
        %v6279 = vpop.permute.xlu0 %6278
        %6280 = vrot.lane.b32.xlu0 %v5971, 64
        %v6281 = vpop.permute.xlu0 %6280
        %6282 = vrot.lane.b32.xlu0 %v5972, 64
        %v6283 = vpop.permute.xlu0 %6282
        %6284 = vrot.lane.b32.xlu0 %v5973, 64
        %v6285 = vpop.permute.xlu0 %6284
        %6286 = vrot.lane.b32.xlu0 %v5974, 64
        %v6287 = vpop.permute.xlu0 %6286
        %6288 = vrot.lane.b32.xlu0 %v5975, 64
        %v6289 = vpop.permute.xlu0 %6288
        %6290 = vrot.lane.b32.xlu0 %v5976, 64
        %v6291 = vpop.permute.xlu0 %6290
        %6292 = vrot.lane.b32.xlu0 %v5977, 64
        %v6293 = vpop.permute.xlu0 %6292
        %6294 = vrot.lane.b32.xlu0 %v5978, 64
        %v6295 = vpop.permute.xlu0 %6294
        %6296 = vrot.lane.b32.xlu0 %v5979, 64
        %v6297 = vpop.permute.xlu0 %6296
        %6298 = vrot.lane.b32.xlu0 %v5980, 64
        %v6299 = vpop.permute.xlu0 %6298
        %6300 = vrot.lane.b32.xlu0 %v5981, 64
        %v6301 = vpop.permute.xlu0 %6300
        %6302 = vrot.lane.b32.xlu0 %v5982, 64
        %v6303 = vpop.permute.xlu0 %6302
        %vm6336 = vcmask 785920
        %6337 = vst.msk [vmem:[%s218] sm:$0xff] %vm6336, %v6241
        %6338 = vst.msk [vmem:[%s218 + $0x8] sm:$0xff] %vm6336, %v6243
        %6339 = vst.msk [vmem:[%s218 + $0x10] sm:$0xff] %vm6336, %v6245
        %6340 = vst.msk [vmem:[%s218 + $0x18] sm:$0xff] %vm6336, %v6247
        %6341 = vst.msk [vmem:[%s218 + $0x20] sm:$0xff] %vm6336, %v6249
        %6342 = vst.msk [vmem:[%s218 + $0x28] sm:$0xff] %vm6336, %v6251
        %6343 = vst.msk [vmem:[%s218 + $0x30] sm:$0xff] %vm6336, %v6253
        %6344 = vst.msk [vmem:[%s218 + $0x38] sm:$0xff] %vm6336, %v6255
        %6345 = vst.msk [vmem:[%s218 + $0x40] sm:$0xff] %vm6336, %v6257
        %6346 = vst.msk [vmem:[%s218 + $0x48] sm:$0xff] %vm6336, %v6259
        %6347 = vst.msk [vmem:[%s218 + $0x50] sm:$0xff] %vm6336, %v6261
        %6348 = vst.msk [vmem:[%s218 + $0x58] sm:$0xff] %vm6336, %v6263
        %6349 = vst.msk [vmem:[%s218 + $0x60] sm:$0xff] %vm6336, %v6265
        %6350 = vst.msk [vmem:[%s218 + $0x68] sm:$0xff] %vm6336, %v6267
        %6351 = vst.msk [vmem:[%s218 + $0x70] sm:$0xff] %vm6336, %v6269
        %6352 = vst.msk [vmem:[%s218 + $0x78] sm:$0xff] %vm6336, %v6271
        %6353 = vst.msk [vmem:[%s218 + $0x80] sm:$0xff] %vm6336, %v6273
        %6354 = vst.msk [vmem:[%s218 + $0x88] sm:$0xff] %vm6336, %v6275
        %6355 = vst.msk [vmem:[%s218 + $0x90] sm:$0xff] %vm6336, %v6277
        %6356 = vst.msk [vmem:[%s218 + $0x98] sm:$0xff] %vm6336, %v6279
        %6357 = vst.msk [vmem:[%s218 + $0xa0] sm:$0xff] %vm6336, %v6281
        %6358 = vst.msk [vmem:[%s218 + $0xa8] sm:$0xff] %vm6336, %v6283
        %6359 = vst.msk [vmem:[%s218 + $0xb0] sm:$0xff] %vm6336, %v6285
        %6360 = vst.msk [vmem:[%s218 + $0xb8] sm:$0xff] %vm6336, %v6287
        %6361 = vst.msk [vmem:[%s218 + $0xc0] sm:$0xff] %vm6336, %v6289
        %6362 = vst.msk [vmem:[%s218 + $0xc8] sm:$0xff] %vm6336, %v6291
        %6363 = vst.msk [vmem:[%s218 + $0xd0] sm:$0xff] %vm6336, %v6293
        %6364 = vst.msk [vmem:[%s218 + $0xd8] sm:$0xff] %vm6336, %v6295
        %6365 = vst.msk [vmem:[%s218 + $0xe0] sm:$0xff] %vm6336, %v6297
        %6366 = vst.msk [vmem:[%s218 + $0xe8] sm:$0xff] %vm6336, %v6299
        %6367 = vst.msk [vmem:[%s218 + $0xf0] sm:$0xff] %vm6336, %v6301
        %6368 = vst.msk [vmem:[%s218 + $0xf8] sm:$0xff] %vm6336, %v6303
        %6401 = vrot.lane.b32.xlu0 %v5983, 96
        %v6402 = vpop.permute.xlu0 %6401
        %6403 = vrot.lane.b32.xlu0 %v5984, 96
        %v6404 = vpop.permute.xlu0 %6403
        %6405 = vrot.lane.b32.xlu0 %v5985, 96
        %v6406 = vpop.permute.xlu0 %6405
        %6407 = vrot.lane.b32.xlu0 %v5986, 96
        %v6408 = vpop.permute.xlu0 %6407
        %6409 = vrot.lane.b32.xlu0 %v5987, 96
        %v6410 = vpop.permute.xlu0 %6409
        %6411 = vrot.lane.b32.xlu0 %v5988, 96
        %v6412 = vpop.permute.xlu0 %6411
        %6413 = vrot.lane.b32.xlu0 %v5989, 96
        %v6414 = vpop.permute.xlu0 %6413
        %6415 = vrot.lane.b32.xlu0 %v5990, 96
        %v6416 = vpop.permute.xlu0 %6415
        %6417 = vrot.lane.b32.xlu0 %v5991, 96
        %v6418 = vpop.permute.xlu0 %6417
        %6419 = vrot.lane.b32.xlu0 %v5992, 96
        %v6420 = vpop.permute.xlu0 %6419
        %6421 = vrot.lane.b32.xlu0 %v5993, 96
        %v6422 = vpop.permute.xlu0 %6421
        %6423 = vrot.lane.b32.xlu0 %v5994, 96
        %v6424 = vpop.permute.xlu0 %6423
        %6425 = vrot.lane.b32.xlu0 %v5995, 96
        %v6426 = vpop.permute.xlu0 %6425
        %6427 = vrot.lane.b32.xlu0 %v5996, 96
        %v6428 = vpop.permute.xlu0 %6427
        %6429 = vrot.lane.b32.xlu0 %v5997, 96
        %v6430 = vpop.permute.xlu0 %6429
        %6431 = vrot.lane.b32.xlu0 %v5998, 96
        %v6432 = vpop.permute.xlu0 %6431
        %6433 = vrot.lane.b32.xlu0 %v5999, 96
        %v6434 = vpop.permute.xlu0 %6433
        %6435 = vrot.lane.b32.xlu0 %v6000, 96
        %v6436 = vpop.permute.xlu0 %6435
        %6437 = vrot.lane.b32.xlu0 %v6001, 96
        %v6438 = vpop.permute.xlu0 %6437
        %6439 = vrot.lane.b32.xlu0 %v6002, 96
        %v6440 = vpop.permute.xlu0 %6439
        %6441 = vrot.lane.b32.xlu0 %v6003, 96
        %v6442 = vpop.permute.xlu0 %6441
        %6443 = vrot.lane.b32.xlu0 %v6004, 96
        %v6444 = vpop.permute.xlu0 %6443
        %6445 = vrot.lane.b32.xlu0 %v6005, 96
        %v6446 = vpop.permute.xlu0 %6445
        %6447 = vrot.lane.b32.xlu0 %v6006, 96
        %v6448 = vpop.permute.xlu0 %6447
        %6449 = vrot.lane.b32.xlu0 %v6007, 96
        %v6450 = vpop.permute.xlu0 %6449
        %6451 = vrot.lane.b32.xlu0 %v6008, 96
        %v6452 = vpop.permute.xlu0 %6451
        %6453 = vrot.lane.b32.xlu0 %v6009, 96
        %v6454 = vpop.permute.xlu0 %6453
        %6455 = vrot.lane.b32.xlu0 %v6010, 96
        %v6456 = vpop.permute.xlu0 %6455
        %6457 = vrot.lane.b32.xlu0 %v6011, 96
        %v6458 = vpop.permute.xlu0 %6457
        %6459 = vrot.lane.b32.xlu0 %v6012, 96
        %v6460 = vpop.permute.xlu0 %6459
        %6461 = vrot.lane.b32.xlu0 %v6013, 96
        %v6462 = vpop.permute.xlu0 %6461
        %6463 = vrot.lane.b32.xlu0 %v6014, 96
        %v6464 = vpop.permute.xlu0 %6463
        %vm6497 = vcmask 1048320
        %6498 = vst.msk [vmem:[%s218] sm:$0xff] %vm6497, %v6402
        %6499 = vst.msk [vmem:[%s218 + $0x8] sm:$0xff] %vm6497, %v6404
        %6500 = vst.msk [vmem:[%s218 + $0x10] sm:$0xff] %vm6497, %v6406
        %6501 = vst.msk [vmem:[%s218 + $0x18] sm:$0xff] %vm6497, %v6408
        %6502 = vst.msk [vmem:[%s218 + $0x20] sm:$0xff] %vm6497, %v6410
        %6503 = vst.msk [vmem:[%s218 + $0x28] sm:$0xff] %vm6497, %v6412
        %6504 = vst.msk [vmem:[%s218 + $0x30] sm:$0xff] %vm6497, %v6414
        %6505 = vst.msk [vmem:[%s218 + $0x38] sm:$0xff] %vm6497, %v6416
        %6506 = vst.msk [vmem:[%s218 + $0x40] sm:$0xff] %vm6497, %v6418
        %6507 = vst.msk [vmem:[%s218 + $0x48] sm:$0xff] %vm6497, %v6420
        %6508 = vst.msk [vmem:[%s218 + $0x50] sm:$0xff] %vm6497, %v6422
        %6509 = vst.msk [vmem:[%s218 + $0x58] sm:$0xff] %vm6497, %v6424
        %6510 = vst.msk [vmem:[%s218 + $0x60] sm:$0xff] %vm6497, %v6426
        %6511 = vst.msk [vmem:[%s218 + $0x68] sm:$0xff] %vm6497, %v6428
        %6512 = vst.msk [vmem:[%s218 + $0x70] sm:$0xff] %vm6497, %v6430
        %6513 = vst.msk [vmem:[%s218 + $0x78] sm:$0xff] %vm6497, %v6432
        %6514 = vst.msk [vmem:[%s218 + $0x80] sm:$0xff] %vm6497, %v6434
        %6515 = vst.msk [vmem:[%s218 + $0x88] sm:$0xff] %vm6497, %v6436
        %6516 = vst.msk [vmem:[%s218 + $0x90] sm:$0xff] %vm6497, %v6438
        %6517 = vst.msk [vmem:[%s218 + $0x98] sm:$0xff] %vm6497, %v6440
        %6518 = vst.msk [vmem:[%s218 + $0xa0] sm:$0xff] %vm6497, %v6442
        %6519 = vst.msk [vmem:[%s218 + $0xa8] sm:$0xff] %vm6497, %v6444
        %6520 = vst.msk [vmem:[%s218 + $0xb0] sm:$0xff] %vm6497, %v6446
        %6521 = vst.msk [vmem:[%s218 + $0xb8] sm:$0xff] %vm6497, %v6448
        %6522 = vst.msk [vmem:[%s218 + $0xc0] sm:$0xff] %vm6497, %v6450
        %6523 = vst.msk [vmem:[%s218 + $0xc8] sm:$0xff] %vm6497, %v6452
        %6524 = vst.msk [vmem:[%s218 + $0xd0] sm:$0xff] %vm6497, %v6454
        %6525 = vst.msk [vmem:[%s218 + $0xd8] sm:$0xff] %vm6497, %v6456
        %6526 = vst.msk [vmem:[%s218 + $0xe0] sm:$0xff] %vm6497, %v6458
        %6527 = vst.msk [vmem:[%s218 + $0xe8] sm:$0xff] %vm6497, %v6460
        %6528 = vst.msk [vmem:[%s218 + $0xf0] sm:$0xff] %vm6497, %v6462
        %6529 = vst.msk [vmem:[%s218 + $0xf8] sm:$0xff] %vm6497, %v6464
        %s6530 = sand.u32 %s119, 1
        %s6531 = scalar_lea.sflag [#allocation3], %s6530
        %s6532 = sand.u32 %s119, 1
        %s6533 = smul.addr %s6532, 256
        %s6534 = scalar_lea.vmem [#allocation2], %s6533
        // Predicated region
        $region33: #{tpu_custom_call.1} parent=31 // pred_check
          %p6535 = pneg %p129
        $region34: #{tpu_custom_call.1} parent=31 // pred_check_branch
          %6537 = sbr.rel (%p6535) target = $region36
        $region35: #{tpu_custom_call.1} parent=31 // pred_region
          %s6538 = smul.u32 32, %s22
          %s6540 = ssub.s32 4096, 4096
          %6541 = vsyncadd %s6531, %s6540
          %s6542 = smul.addr %s21, 32
          %s6543 = sadd.s32 %s6538, %s6542
          %s6544 = smul.addr %s6543, 128
          %s6545 = scalar_lea.hbm %s3, %s6544
          %s6546 = sshll.u32 %s6534, 4
          %s6547 = int_to_ptr.vmem [resolvable:$true] %s6546
          %6552 = dma.vmem_to_hbm [thread:$0]  %s6547, 4096, %s6545, %s6531, 128, 128, 8
        $region36: #{tpu_custom_call.1} parent=31 // pred_fallthru
          _
      $region32: #{tpu_custom_call.1} parent=5 // pred_fallthru
        _
      %p6553 = scmp.le.s32.totalorder 2, %s12
      // Predicated region
      $region37: #{tpu_custom_call.1} parent=5 // pred_check
        %p6554 = pneg %p6553
      $region38: #{tpu_custom_call.1} parent=5 // pred_check_branch
        %6556 = sbr.rel (%p6554) target = $region40
      $region39: #{tpu_custom_call.1} parent=5 // pred_region
        %s6557 = ssub.s32 %s12, 2
        // Predicated region
        $region41: #{tpu_custom_call.1} parent=39 // pred_check
          %p6558 = pneg %p135
        $region42: #{tpu_custom_call.1} parent=39 // pred_check_branch
          %6560 = sbr.rel (%p6558) target = $region44
        $region43: #{tpu_custom_call.1} parent=39 // pred_region
          %s6561 = sand.u32 %s120, 1
          %s6562 = scalar_lea.sflag [#allocation3], %s6561
          %s6563 = sand.u32 %s120, 1
          %s6564 = smul.addr %s6563, 256
          %s6565 = scalar_lea.vmem [#allocation2], %s6564
          %6566 = dma.done %s6562, 4096
        $region44: #{tpu_custom_call.1} parent=39 // pred_fallthru
          _
      $region40: #{tpu_custom_call.1} parent=5 // pred_fallthru
        _
    $region6: #{tpu_custom_call.1} parent=1 // loop_footer
      %s16 = sadd.s32 1, %s12
    $region7: #{tpu_custom_call.1} parent=1 // loop_footer_branch
      %11 = sbr.rel target = $region3
    $region8: #{tpu_custom_call.1} parent=1 // loop_exit
      _
    %6567 = vsyncpa [#allocation3], 1
    %s6568 = scalar_lea.sflag [#allocation3], 1
    %6569 = vsyncpa %s6568, 1

</llo_original>
